<compile_context>
chip_gen: v5e
topology: v5e:2x2
jax: 0.10.0
libtpu: 0.0.40
codegen_flags: <defaults>
</compile_context>

<pallas_src>
import jax
import jax.numpy as jnp
from jax.experimental import pallas as pl
from jax.experimental.pallas import tpu as pltpu

IN_FLAT = 1000        # nn.Flatten() -> Linear(1000, 512)
HIDDEN = 512
NUM_CLASSES = 30
CLS_PAD = 128         # class dim padded to a lane-dense multiple of 128
H_CHUNK = 128         # hidden-dim chunk between the two matmuls


def egopack_kernel(x_ref, w1_ref, b1_ref, w2_ref, b2_ref, out_ref):
    # x_ref:  (tile_n, 1000) f32  -> cast to bf16 in-kernel (no wrapper pad/cast pass)
    # w1_ref: (1000, 512) bf16, b1_ref: (1, 512) f32
    # w2_ref: (512, 128)  bf16, b2_ref: (1, 128) f32
    # out_ref: (tile_n, 128) f32
    x = x_ref[...].astype(w1_ref.dtype)
    # Seed the output tile with the (padded) classifier bias, then accumulate into it.
    out_ref[...] = jnp.broadcast_to(b2_ref[...], out_ref.shape).astype(out_ref.dtype)
    # Chunk HIDDEN so the live f32 intermediate is only (tile_n, 128) per step,
    # avoiding a (tile_n, 512) f32 slab that spills out of the vreg file.
    for h in range(0, HIDDEN, H_CHUNK):
        emb = jnp.dot(x, w1_ref[:, h:h + H_CHUNK],
                      preferred_element_type=jnp.float32)
        emb = jnp.maximum(emb + b1_ref[:, h:h + H_CHUNK], 0.0)        # bias + ReLU in f32
        out_ref[...] += jnp.dot(emb.astype(w2_ref.dtype), w2_ref[h:h + H_CHUNK, :],
                                preferred_element_type=jnp.float32)


def _round_up(x, m):
    return ((x + m - 1) // m) * m


def _num_tensorcores():
    """Best-effort TensorCore count for the local chip (v7x: 2, v5e/v6e: 1)."""
    try:
        info = pltpu.get_tpu_info()
        for attr in ("num_cores", "tensorcore_count", "core_count"):
            v = getattr(info, attr, None)
            if v:
                return int(v)
        vmem = getattr(info, "vmem_capacity_bytes", None)
        if vmem is not None and vmem <= (64 << 20):   # v7x: 64 MiB / TC
            return 2
    except Exception:
        pass
    return 1


def _choose_tiling(n, tile_n, n_cores):
    """Balanced node tiles: a single tile on 1-TC chips when it fits, otherwise
    >= n_cores equal tiles, each a multiple of 8 sublanes."""
    n8 = _round_up(max(n, 1), 8)
    num_tiles = pl.cdiv(n8, tile_n)
    if n_cores > 1 and n8 >= 16 * n_cores:            # keep both v7x TCs busy
        num_tiles = max(num_tiles, n_cores)
    tile_eff = _round_up(pl.cdiv(n8, num_tiles), 8)   # balance (e.g. 260 -> 2 x 136)
    num_tiles = pl.cdiv(n8, tile_eff)
    return tile_eff, num_tiles, num_tiles * tile_eff


def prepare_params(w1, b1, w2, b2, compute_dtype=jnp.bfloat16):
    """One-time weight prep (hoisted out of the per-call path): bf16 cast + class pad."""
    w1p = jnp.asarray(w1, compute_dtype)                                   # (1000, 512)
    b1p = jnp.asarray(b1, jnp.float32).reshape(1, HIDDEN)                  # (1, 512)
    w2p = jnp.pad(jnp.asarray(w2, compute_dtype),
                  ((0, 0), (0, CLS_PAD - NUM_CLASSES)))                    # (512, 128)
    b2p = jnp.pad(jnp.asarray(b2, jnp.float32).reshape(1, NUM_CLASSES),
                  ((0, 0), (0, CLS_PAD - NUM_CLASSES)))                    # (1, 128)
    return w1p, b1p, w2p, b2p


def egopack_gnn_forward(graph, params, *, tile_n=512):
    """graph: (N, ...) with prod(...)==1000 -> logits (N, 30)."""
    w1p, b1p, w2p, b2p = params
    x = graph.reshape(graph.shape[0], -1)
    if x.dtype != jnp.float32:
        x = x.astype(jnp.float32)
    n, k = x.shape
    assert k == IN_FLAT, f"expected flattened feature dim {IN_FLAT}, got {k}"

    tile_eff, num_tiles, n_pad = _choose_tiling(n, tile_n, _num_tensorcores())
    if n_pad != n:
        x = jnp.pad(x, ((0, n_pad - n), (0, 0)))      # tiny row pad only

    cost = pl.CostEstimate(
        flops=2 * n_pad * (IN_FLAT * HIDDEN + HIDDEN * CLS_PAD),
        transcendentals=0,
        bytes_accessed=(n_pad * IN_FLAT * 4            # x read (f32, unpadded K)
                        + IN_FLAT * HIDDEN * 2         # W1 bf16
                        + HIDDEN * CLS_PAD * 2         # W2 bf16
                        + (HIDDEN + CLS_PAD) * 4       # biases
                        + n_pad * CLS_PAD * 4),        # output write
    )

    out_padded = pl.pallas_call(
        egopack_kernel,
        out_shape=jax.ShapeDtypeStruct((n_pad, CLS_PAD), jnp.float32),
        grid=(num_tiles,),
        in_specs=[
            pl.BlockSpec((tile_eff, IN_FLAT), lambda i: (i, 0)),    # x node tile (full K)
            pl.BlockSpec((IN_FLAT, HIDDEN), lambda i: (0, 0)),      # W1 (grid-invariant)
            pl.BlockSpec((1, HIDDEN), lambda i: (0, 0)),            # b1
            pl.BlockSpec((HIDDEN, CLS_PAD), lambda i: (0, 0)),      # W2 (class-padded)
            pl.BlockSpec((1, CLS_PAD), lambda i: (0, 0)),           # b2
        ],
        out_specs=pl.BlockSpec((tile_eff, CLS_PAD), lambda i: (i, 0)),
        compiler_params=pltpu.CompilerParams(
            dimension_semantics=("parallel",),        # node-tile axis is independent
            vmem_limit_bytes=24 << 20,                # ~8 MiB actual use + headroom
        ),
        cost_estimate=cost,
    )(x, w1p, b1p, w2p, b2p)

    # strip node padding and the padded class lanes
    return out_padded[:n, :NUM_CLASSES]


def init_params(key):
    k1, k2, k3, k4 = jax.random.split(key, 4)
    # torch nn.Linear default init: U(-1/sqrt(fan_in), 1/sqrt(fan_in)); weights stored (in, out).
    bound1 = 1.0 / (IN_FLAT ** 0.5)
    bound2 = 1.0 / (HIDDEN ** 0.5)
    w1 = jax.random.uniform(k1, (IN_FLAT, HIDDEN), jnp.float32, -bound1, bound1)
    b1 = jax.random.uniform(k2, (1, HIDDEN), jnp.float32, -bound1, bound1)
    w2 = jax.random.uniform(k3, (HIDDEN, NUM_CLASSES), jnp.float32, -bound2, bound2)
    b2 = jax.random.uniform(k4, (1, NUM_CLASSES), jnp.float32, -bound2, bound2)
    return w1, b1, w2, b2


def reference_forward(graph, w1, b1, w2, b2, compute_dtype=jnp.bfloat16):
    # Pure-JAX reference using the same bf16 input rounding + f32 accumulation.
    x = graph.reshape(graph.shape[0], -1)
    h = jnp.dot(x.astype(compute_dtype), w1.astype(compute_dtype),
                preferred_element_type=jnp.float32) + b1
    h = jnp.maximum(h, 0.0)
    out = jnp.dot(h.astype(compute_dtype), w2.astype(compute_dtype),
                  preferred_element_type=jnp.float32) + b2
    return out


if __name__ == "__main__":
    key = jax.random.PRNGKey(0)
    kp, kx = jax.random.split(key)
    w1, b1, w2, b2 = init_params(kp)
    params = prepare_params(w1, b1, w2, b2)   # one-time weight cast/pad (hoisted)

    # 260 graph nodes (not a multiple of the tile -> exercises balanced tiling),
    # each node has 10x100 features that Flatten collapses to 1000.
    n_nodes = 260
    graph = jax.random.normal(kx, (n_nodes, 10, 100), jnp.float32)

    fwd = jax.jit(egopack_gnn_forward)
    out = jax.block_until_ready(fwd(graph, params))

    ref = reference_forward(graph, w1, b1, w2, b2)
    assert out.shape == (n_nodes, NUM_CLASSES)
    max_err = float(jnp.max(jnp.abs(out - ref)))
    assert jnp.allclose(out, ref, atol=1e-2, rtol=1e-2), max_err

    print("KERNEL_OK")
</pallas_src>

<mosaic_0001>
module attributes {stable_mosaic.version = 11 : i64} {
  func.func @egopack_kernel(%arg0: i32, %arg1: memref<264x1000xf32, #tpu.memory_space<vmem>>, %arg2: memref<1000x512xbf16, #tpu.memory_space<vmem>>, %arg3: memref<1x512xf32, #tpu.memory_space<vmem>>, %arg4: memref<512x128xbf16, #tpu.memory_space<vmem>>, %arg5: memref<1x128xf32, #tpu.memory_space<vmem>>, %arg6: memref<264x128xf32, #tpu.memory_space<vmem>>) attributes {dimension_semantics = [#tpu.dimension_semantics<parallel>], iteration_bounds = array<i64: 1>, scalar_prefetch = 0 : i64, scratch_operands = 0 : i64, tpu.core_type = #tpu.core_type<tc>, window_params = [{transform_indices = @transform_0, window_bounds = array<i64: 264, 1000>}, {pipeline_mode = #tpu.pipeline_mode<synchronous>, transform_indices = @transform_1, window_bounds = array<i64: 1000, 512>}, {pipeline_mode = #tpu.pipeline_mode<synchronous>, transform_indices = @transform_2, window_bounds = array<i64: 1, 512>}, {pipeline_mode = #tpu.pipeline_mode<synchronous>, transform_indices = @transform_3, window_bounds = array<i64: 512, 128>}, {pipeline_mode = #tpu.pipeline_mode<synchronous>, transform_indices = @transform_4, window_bounds = array<i64: 1, 128>}, {transform_indices = @transform_5, window_bounds = array<i64: 264, 128>}]} {
    %c0 = arith.constant 0 : index
    %c0_0 = arith.constant 0 : index
    %0 = vector.load %arg1[%c0, %c0_0] : memref<264x1000xf32, #tpu.memory_space<vmem>>, vector<264x1000xf32>
    %1 = arith.truncf %0 : vector<264x1000xf32> to vector<264x1000xbf16>
    %c0_1 = arith.constant 0 : index
    %c0_2 = arith.constant 0 : index
    %2 = vector.load %arg5[%c0_1, %c0_2] : memref<1x128xf32, #tpu.memory_space<vmem>>, vector<1x128xf32>
    %3 = vector.shape_cast %2 : vector<1x128xf32> to vector<1x128xf32>
    %4 = vector.broadcast %3 : vector<1x128xf32> to vector<264x128xf32>
    %c0_3 = arith.constant 0 : index
    %c0_4 = arith.constant 0 : index
    %5 = vector.load %arg6[%c0_3, %c0_4] : memref<264x128xf32, #tpu.memory_space<vmem>>, vector<264x128xf32>
    tpu.vector_store %arg6[%c0_3, %c0_4], %4 {strides = array<i32>} : memref<264x128xf32, #tpu.memory_space<vmem>>, vector<264x128xf32>,
    %c0_5 = arith.constant 0 : index
    %c0_6 = arith.constant 0 : index
    %6 = vector.load %arg2[%c0_5, %c0_6] : memref<1000x512xbf16, #tpu.memory_space<vmem>>, vector<1000x128xbf16>
    %cst = arith.constant dense<0.000000e+00> : vector<264x128xf32>
    %7 = tpu.matmul %1, %6, %cst {dimension_numbers = #tpu.dot_dimension_numbers<[1], [0], [0], [1], [0, 0, 1, 1], [], []>} : vector<264x1000xbf16>, vector<1000x128xbf16>, vector<264x128xf32> -> vector<264x128xf32>
    %c0_7 = arith.constant 0 : index
    %c0_8 = arith.constant 0 : index
    %8 = vector.load %arg3[%c0_7, %c0_8] : memref<1x512xf32, #tpu.memory_space<vmem>>, vector<1x128xf32>
    %9 = vector.broadcast %8 : vector<1x128xf32> to vector<264x128xf32>
    %10 = arith.addf %7, %9 : vector<264x128xf32>
    %cst_9 = arith.constant 0.000000e+00 : f32
    %11 = vector.broadcast %cst_9 : f32 to vector<264x128xf32>
    %12 = arith.maximumf %10, %11 : vector<264x128xf32>
    %c0_10 = arith.constant 0 : index
    %c0_11 = arith.constant 0 : index
    %13 = vector.load %arg6[%c0_10, %c0_11] : memref<264x128xf32, #tpu.memory_space<vmem>>, vector<264x128xf32>
    %14 = arith.truncf %12 : vector<264x128xf32> to vector<264x128xbf16>
    %c0_12 = arith.constant 0 : index
    %c0_13 = arith.constant 0 : index
    %15 = vector.load %arg4[%c0_12, %c0_13] : memref<512x128xbf16, #tpu.memory_space<vmem>>, vector<128x128xbf16>
    %cst_14 = arith.constant dense<0.000000e+00> : vector<264x128xf32>
    %16 = tpu.matmul %14, %15, %cst_14 {dimension_numbers = #tpu.dot_dimension_numbers<[1], [0], [0], [1], [0, 0, 1, 1], [], []>} : vector<264x128xbf16>, vector<128x128xbf16>, vector<264x128xf32> -> vector<264x128xf32>
    %17 = arith.addf %13, %16 : vector<264x128xf32>
    %c0_15 = arith.constant 0 : index
    %c0_16 = arith.constant 0 : index
    %18 = vector.load %arg6[%c0_15, %c0_16] : memref<264x128xf32, #tpu.memory_space<vmem>>, vector<264x128xf32>
    tpu.vector_store %arg6[%c0_15, %c0_16], %17 {strides = array<i32>} : memref<264x128xf32, #tpu.memory_space<vmem>>, vector<264x128xf32>,
    %c0_17 = arith.constant 0 : index
    %c128 = arith.constant 128 : index
    %19 = vector.load %arg2[%c0_17, %c128] : memref<1000x512xbf16, #tpu.memory_space<vmem>>, vector<1000x128xbf16>
    %cst_18 = arith.constant dense<0.000000e+00> : vector<264x128xf32>
    %20 = tpu.matmul %1, %19, %cst_18 {dimension_numbers = #tpu.dot_dimension_numbers<[1], [0], [0], [1], [0, 0, 1, 1], [], []>} : vector<264x1000xbf16>, vector<1000x128xbf16>, vector<264x128xf32> -> vector<264x128xf32>
    %c0_19 = arith.constant 0 : index
    %c128_20 = arith.constant 128 : index
    %21 = vector.load %arg3[%c0_19, %c128_20] : memref<1x512xf32, #tpu.memory_space<vmem>>, vector<1x128xf32>
    %22 = vector.broadcast %21 : vector<1x128xf32> to vector<264x128xf32>
    %23 = arith.addf %20, %22 : vector<264x128xf32>
    %cst_21 = arith.constant 0.000000e+00 : f32
    %24 = vector.broadcast %cst_21 : f32 to vector<264x128xf32>
    %25 = arith.maximumf %23, %24 : vector<264x128xf32>
    %c0_22 = arith.constant 0 : index
    %c0_23 = arith.constant 0 : index
    %26 = vector.load %arg6[%c0_22, %c0_23] : memref<264x128xf32, #tpu.memory_space<vmem>>, vector<264x128xf32>
    %27 = arith.truncf %25 : vector<264x128xf32> to vector<264x128xbf16>
    %c128_24 = arith.constant 128 : index
    %c0_25 = arith.constant 0 : index
    %28 = vector.load %arg4[%c128_24, %c0_25] : memref<512x128xbf16, #tpu.memory_space<vmem>>, vector<128x128xbf16>
    %cst_26 = arith.constant dense<0.000000e+00> : vector<264x128xf32>
    %29 = tpu.matmul %27, %28, %cst_26 {dimension_numbers = #tpu.dot_dimension_numbers<[1], [0], [0], [1], [0, 0, 1, 1], [], []>} : vector<264x128xbf16>, vector<128x128xbf16>, vector<264x128xf32> -> vector<264x128xf32>
    %30 = arith.addf %26, %29 : vector<264x128xf32>
    %c0_27 = arith.constant 0 : index
    %c0_28 = arith.constant 0 : index
    %31 = vector.load %arg6[%c0_27, %c0_28] : memref<264x128xf32, #tpu.memory_space<vmem>>, vector<264x128xf32>
    tpu.vector_store %arg6[%c0_27, %c0_28], %30 {strides = array<i32>} : memref<264x128xf32, #tpu.memory_space<vmem>>, vector<264x128xf32>,
    %c0_29 = arith.constant 0 : index
    %c256 = arith.constant 256 : index
    %32 = vector.load %arg2[%c0_29, %c256] : memref<1000x512xbf16, #tpu.memory_space<vmem>>, vector<1000x128xbf16>
    %cst_30 = arith.constant dense<0.000000e+00> : vector<264x128xf32>
    %33 = tpu.matmul %1, %32, %cst_30 {dimension_numbers = #tpu.dot_dimension_numbers<[1], [0], [0], [1], [0, 0, 1, 1], [], []>} : vector<264x1000xbf16>, vector<1000x128xbf16>, vector<264x128xf32> -> vector<264x128xf32>
    %c0_31 = arith.constant 0 : index
    %c256_32 = arith.constant 256 : index
    %34 = vector.load %arg3[%c0_31, %c256_32] : memref<1x512xf32, #tpu.memory_space<vmem>>, vector<1x128xf32>
    %35 = vector.broadcast %34 : vector<1x128xf32> to vector<264x128xf32>
    %36 = arith.addf %33, %35 : vector<264x128xf32>
    %cst_33 = arith.constant 0.000000e+00 : f32
    %37 = vector.broadcast %cst_33 : f32 to vector<264x128xf32>
    %38 = arith.maximumf %36, %37 : vector<264x128xf32>
    %c0_34 = arith.constant 0 : index
    %c0_35 = arith.constant 0 : index
    %39 = vector.load %arg6[%c0_34, %c0_35] : memref<264x128xf32, #tpu.memory_space<vmem>>, vector<264x128xf32>
    %40 = arith.truncf %38 : vector<264x128xf32> to vector<264x128xbf16>
    %c256_36 = arith.constant 256 : index
    %c0_37 = arith.constant 0 : index
    %41 = vector.load %arg4[%c256_36, %c0_37] : memref<512x128xbf16, #tpu.memory_space<vmem>>, vector<128x128xbf16>
    %cst_38 = arith.constant dense<0.000000e+00> : vector<264x128xf32>
    %42 = tpu.matmul %40, %41, %cst_38 {dimension_numbers = #tpu.dot_dimension_numbers<[1], [0], [0], [1], [0, 0, 1, 1], [], []>} : vector<264x128xbf16>, vector<128x128xbf16>, vector<264x128xf32> -> vector<264x128xf32>
    %43 = arith.addf %39, %42 : vector<264x128xf32>
    %c0_39 = arith.constant 0 : index
    %c0_40 = arith.constant 0 : index
    %44 = vector.load %arg6[%c0_39, %c0_40] : memref<264x128xf32, #tpu.memory_space<vmem>>, vector<264x128xf32>
    tpu.vector_store %arg6[%c0_39, %c0_40], %43 {strides = array<i32>} : memref<264x128xf32, #tpu.memory_space<vmem>>, vector<264x128xf32>,
    %c0_41 = arith.constant 0 : index
    %c384 = arith.constant 384 : index
    %45 = vector.load %arg2[%c0_41, %c384] : memref<1000x512xbf16, #tpu.memory_space<vmem>>, vector<1000x128xbf16>
    %cst_42 = arith.constant dense<0.000000e+00> : vector<264x128xf32>
    %46 = tpu.matmul %1, %45, %cst_42 {dimension_numbers = #tpu.dot_dimension_numbers<[1], [0], [0], [1], [0, 0, 1, 1], [], []>} : vector<264x1000xbf16>, vector<1000x128xbf16>, vector<264x128xf32> -> vector<264x128xf32>
    %c0_43 = arith.constant 0 : index
    %c384_44 = arith.constant 384 : index
    %47 = vector.load %arg3[%c0_43, %c384_44] : memref<1x512xf32, #tpu.memory_space<vmem>>, vector<1x128xf32>
    %48 = vector.broadcast %47 : vector<1x128xf32> to vector<264x128xf32>
    %49 = arith.addf %46, %48 : vector<264x128xf32>
    %cst_45 = arith.constant 0.000000e+00 : f32
    %50 = vector.broadcast %cst_45 : f32 to vector<264x128xf32>
    %51 = arith.maximumf %49, %50 : vector<264x128xf32>
    %c0_46 = arith.constant 0 : index
    %c0_47 = arith.constant 0 : index
    %52 = vector.load %arg6[%c0_46, %c0_47] : memref<264x128xf32, #tpu.memory_space<vmem>>, vector<264x128xf32>
    %53 = arith.truncf %51 : vector<264x128xf32> to vector<264x128xbf16>
    %c384_48 = arith.constant 384 : index
    %c0_49 = arith.constant 0 : index
    %54 = vector.load %arg4[%c384_48, %c0_49] : memref<512x128xbf16, #tpu.memory_space<vmem>>, vector<128x128xbf16>
    %cst_50 = arith.constant dense<0.000000e+00> : vector<264x128xf32>
    %55 = tpu.matmul %53, %54, %cst_50 {dimension_numbers = #tpu.dot_dimension_numbers<[1], [0], [0], [1], [0, 0, 1, 1], [], []>} : vector<264x128xbf16>, vector<128x128xbf16>, vector<264x128xf32> -> vector<264x128xf32>
    %56 = arith.addf %52, %55 : vector<264x128xf32>
    %c0_51 = arith.constant 0 : index
    %c0_52 = arith.constant 0 : index
    %57 = vector.load %arg6[%c0_51, %c0_52] : memref<264x128xf32, #tpu.memory_space<vmem>>, vector<264x128xf32>
    tpu.vector_store %arg6[%c0_51, %c0_52], %56 {strides = array<i32>} : memref<264x128xf32, #tpu.memory_space<vmem>>, vector<264x128xf32>,
    return
  }
  func.func @transform_0(%arg0: i32) -> (i32, i32) {
    %c0_i32 = arith.constant 0 : i32
    %c0_i32_0 = arith.constant 0 : i32
    return %arg0, %c0_i32 : i32, i32
  }
  func.func @transform_1(%arg0: i32) -> (i32, i32) {
    %c0_i32 = arith.constant 0 : i32
    %c0_i32_0 = arith.constant 0 : i32
    %c0_i32_1 = arith.constant 0 : i32
    return %c0_i32, %c0_i32_0 : i32, i32
  }
  func.func @transform_2(%arg0: i32) -> (i32, i32) {
    %c0_i32 = arith.constant 0 : i32
    %c0_i32_0 = arith.constant 0 : i32
    %c0_i32_1 = arith.constant 0 : i32
    return %c0_i32, %c0_i32_0 : i32, i32
  }
  func.func @transform_3(%arg0: i32) -> (i32, i32) {
    %c0_i32 = arith.constant 0 : i32
    %c0_i32_0 = arith.constant 0 : i32
    %c0_i32_1 = arith.constant 0 : i32
    return %c0_i32, %c0_i32_0 : i32, i32
  }
  func.func @transform_4(%arg0: i32) -> (i32, i32) {
    %c0_i32 = arith.constant 0 : i32
    %c0_i32_0 = arith.constant 0 : i32
    %c0_i32_1 = arith.constant 0 : i32
    return %c0_i32, %c0_i32_0 : i32, i32
  }
  func.func @transform_5(%arg0: i32) -> (i32, i32) {
    %c0_i32 = arith.constant 0 : i32
    %c0_i32_0 = arith.constant 0 : i32
    return %arg0, %c0_i32 : i32, i32
  }
}

</mosaic_0001>

<llo_original>
// kernel: egopack_gnn_forward.1
$region0: #{egopack_gnn_forward.1}
  #allocation0 [shape = 'u32[]', space=smem, size = 0x4, offset = 0x4, fixed_abs, tag = 'smem constant byte address 0x4 - core index']
  #allocation1 [shape = 'u32[72,128]{1,0:T(1,128)}', space=vmem, size = 0x9000, scoped, tag = 'internal scratch']
  %s0 = inlined_call_operand.vmem [shape: f32[264,1000], index: 0, kind: input, shape index: {}]
  %s1 = inlined_call_operand.vmem [shape: bf16[1000,512], index: 1, kind: input, shape index: {}]
  %s2 = inlined_call_operand.vmem [shape: f32[1,512], index: 2, kind: input, shape index: {}]
  %s3 = inlined_call_operand.vmem [shape: bf16[512,128], index: 3, kind: input, shape index: {}]
  %s4 = inlined_call_operand.vmem [shape: f32[1,128], index: 4, kind: input, shape index: {}]
  %s5 = inlined_call_operand.vmem [shape: f32[264,128], index: 5, kind: output, shape index: {}]
  %s6 = sld [smem:[#allocation0]]
  $region30: #{egopack_gnn_forward.1} parent=0
    _
  %s8 = ssub.s32 1, %s6
  %s9 = scalar_select 0, %s8, %s6
  // Predicated region
  $region2: #{egopack_gnn_forward.1} parent=0 // pred_check
    _
  $region3: #{egopack_gnn_forward.1} parent=0 // pred_check_branch
    %11 = sbr.rel (0) target = $region5
  $region4: #{egopack_gnn_forward.1} parent=0 // pred_region
    _
  $region5: #{egopack_gnn_forward.1} parent=0 // pred_fallthru
    _
  // Predicated region
  $region6: #{egopack_gnn_forward.1} parent=0 // pred_check
    _
  $region7: #{egopack_gnn_forward.1} parent=0 // pred_check_branch
    %13 = sbr.rel (0) target = $region9
  $region8: #{egopack_gnn_forward.1} parent=0 // pred_region
    _
  $region9: #{egopack_gnn_forward.1} parent=0 // pred_fallthru
    _
  // Predicated region
  $region10: #{egopack_gnn_forward.1} parent=0 // pred_check
    _
  $region11: #{egopack_gnn_forward.1} parent=0 // pred_check_branch
    %15 = sbr.rel (0) target = $region13
  $region12: #{egopack_gnn_forward.1} parent=0 // pred_region
    _
  $region13: #{egopack_gnn_forward.1} parent=0 // pred_fallthru
    _
  // Predicated region
  $region14: #{egopack_gnn_forward.1} parent=0 // pred_check
    _
  $region15: #{egopack_gnn_forward.1} parent=0 // pred_check_branch
    %17 = sbr.rel (0) target = $region17
  $region16: #{egopack_gnn_forward.1} parent=0 // pred_region
    _
  $region17: #{egopack_gnn_forward.1} parent=0 // pred_fallthru
    _
  // Predicated region
  $region18: #{egopack_gnn_forward.1} parent=0 // pred_check
    _
  $region19: #{egopack_gnn_forward.1} parent=0 // pred_check_branch
    %19 = sbr.rel (0) target = $region21
  $region20: #{egopack_gnn_forward.1} parent=0 // pred_region
    _
  $region21: #{egopack_gnn_forward.1} parent=0 // pred_fallthru
    _
  %v21 = vld [vmem:[%s0] sm:$0xff]
  %v22 = vld [vmem:[%s0 + $0x8] sm:$0xff]
  %v23 = vld [vmem:[%s0 + $0x10] sm:$0xff]
  %v24 = vld [vmem:[%s0 + $0x18] sm:$0xff]
  %v25 = vld [vmem:[%s0 + $0x20] sm:$0xff]
  %v26 = vld [vmem:[%s0 + $0x28] sm:$0xff]
  %v27 = vld [vmem:[%s0 + $0x30] sm:$0xff]
  %v28 = vld [vmem:[%s0 + $0x38] sm:$0xff]
  %v29 = vld [vmem:[%s0 + $0x40] sm:$0xff]
  %v30 = vld [vmem:[%s0 + $0x48] sm:$0xff]
  %v31 = vld [vmem:[%s0 + $0x50] sm:$0xff]
  %v32 = vld [vmem:[%s0 + $0x58] sm:$0xff]
  %v33 = vld [vmem:[%s0 + $0x60] sm:$0xff]
  %v34 = vld [vmem:[%s0 + $0x68] sm:$0xff]
  %v35 = vld [vmem:[%s0 + $0x70] sm:$0xff]
  %v36 = vld [vmem:[%s0 + $0x78] sm:$0xff]
  %v37 = vld [vmem:[%s0 + $0x80] sm:$0xff]
  %v38 = vld [vmem:[%s0 + $0x88] sm:$0xff]
  %v39 = vld [vmem:[%s0 + $0x90] sm:$0xff]
  %v40 = vld [vmem:[%s0 + $0x98] sm:$0xff]
  %v41 = vld [vmem:[%s0 + $0xa0] sm:$0xff]
  %v42 = vld [vmem:[%s0 + $0xa8] sm:$0xff]
  %v43 = vld [vmem:[%s0 + $0xb0] sm:$0xff]
  %v44 = vld [vmem:[%s0 + $0xb8] sm:$0xff]
  %v45 = vld [vmem:[%s0 + $0xc0] sm:$0xff]
  %v46 = vld [vmem:[%s0 + $0xc8] sm:$0xff]
  %v47 = vld [vmem:[%s0 + $0xd0] sm:$0xff]
  %v48 = vld [vmem:[%s0 + $0xd8] sm:$0xff]
  %v49 = vld [vmem:[%s0 + $0xe0] sm:$0xff]
  %v50 = vld [vmem:[%s0 + $0xe8] sm:$0xff]
  %v51 = vld [vmem:[%s0 + $0xf0] sm:$0xff]
  %v52 = vld [vmem:[%s0 + $0xf8] sm:$0xff]
  %v53 = vld [vmem:[%s0 + $0x100] sm:$0xff]
  %v54 = vld [vmem:[%s0 + $0x108] sm:$0xff]
  %v55 = vld [vmem:[%s0 + $0x110] sm:$0xff]
  %v56 = vld [vmem:[%s0 + $0x118] sm:$0xff]
  %v57 = vld [vmem:[%s0 + $0x120] sm:$0xff]
  %v58 = vld [vmem:[%s0 + $0x128] sm:$0xff]
  %v59 = vld [vmem:[%s0 + $0x130] sm:$0xff]
  %v60 = vld [vmem:[%s0 + $0x138] sm:$0xff]
  %v61 = vld [vmem:[%s0 + $0x140] sm:$0xff]
  %v62 = vld [vmem:[%s0 + $0x148] sm:$0xff]
  %v63 = vld [vmem:[%s0 + $0x150] sm:$0xff]
  %v64 = vld [vmem:[%s0 + $0x158] sm:$0xff]
  %v65 = vld [vmem:[%s0 + $0x160] sm:$0xff]
  %v66 = vld [vmem:[%s0 + $0x168] sm:$0xff]
  %v67 = vld [vmem:[%s0 + $0x170] sm:$0xff]
  %v68 = vld [vmem:[%s0 + $0x178] sm:$0xff]
  %v69 = vld [vmem:[%s0 + $0x180] sm:$0xff]
  %v70 = vld [vmem:[%s0 + $0x188] sm:$0xff]
  %v71 = vld [vmem:[%s0 + $0x190] sm:$0xff]
  %v72 = vld [vmem:[%s0 + $0x198] sm:$0xff]
  %v73 = vld [vmem:[%s0 + $0x1a0] sm:$0xff]
  %v74 = vld [vmem:[%s0 + $0x1a8] sm:$0xff]
  %v75 = vld [vmem:[%s0 + $0x1b0] sm:$0xff]
  %v76 = vld [vmem:[%s0 + $0x1b8] sm:$0xff]
  %v77 = vld [vmem:[%s0 + $0x1c0] sm:$0xff]
  %v78 = vld [vmem:[%s0 + $0x1c8] sm:$0xff]
  %v79 = vld [vmem:[%s0 + $0x1d0] sm:$0xff]
  %v80 = vld [vmem:[%s0 + $0x1d8] sm:$0xff]
  %v81 = vld [vmem:[%s0 + $0x1e0] sm:$0xff]
  %v82 = vld [vmem:[%s0 + $0x1e8] sm:$0xff]
  %v83 = vld [vmem:[%s0 + $0x1f0] sm:$0xff]
  %v84 = vld [vmem:[%s0 + $0x1f8] sm:$0xff]
  %v85 = vld [vmem:[%s0 + $0x200] sm:$0xff]
  %v86 = vld [vmem:[%s0 + $0x208] sm:$0xff]
  %v87 = vld [vmem:[%s0 + $0x210] sm:$0xff]
  %v88 = vld [vmem:[%s0 + $0x218] sm:$0xff]
  %v89 = vld [vmem:[%s0 + $0x220] sm:$0xff]
  %v90 = vld [vmem:[%s0 + $0x228] sm:$0xff]
  %v91 = vld [vmem:[%s0 + $0x230] sm:$0xff]
  %v92 = vld [vmem:[%s0 + $0x238] sm:$0xff]
  %v93 = vld [vmem:[%s0 + $0x240] sm:$0xff]
  %v94 = vld [vmem:[%s0 + $0x248] sm:$0xff]
  %v95 = vld [vmem:[%s0 + $0x250] sm:$0xff]
  %v96 = vld [vmem:[%s0 + $0x258] sm:$0xff]
  %v97 = vld [vmem:[%s0 + $0x260] sm:$0xff]
  %v98 = vld [vmem:[%s0 + $0x268] sm:$0xff]
  %v99 = vld [vmem:[%s0 + $0x270] sm:$0xff]
  %v100 = vld [vmem:[%s0 + $0x278] sm:$0xff]
  %v101 = vld [vmem:[%s0 + $0x280] sm:$0xff]
  %v102 = vld [vmem:[%s0 + $0x288] sm:$0xff]
  %v103 = vld [vmem:[%s0 + $0x290] sm:$0xff]
  %v104 = vld [vmem:[%s0 + $0x298] sm:$0xff]
  %v105 = vld [vmem:[%s0 + $0x2a0] sm:$0xff]
  %v106 = vld [vmem:[%s0 + $0x2a8] sm:$0xff]
  %v107 = vld [vmem:[%s0 + $0x2b0] sm:$0xff]
  %v108 = vld [vmem:[%s0 + $0x2b8] sm:$0xff]
  %v109 = vld [vmem:[%s0 + $0x2c0] sm:$0xff]
  %v110 = vld [vmem:[%s0 + $0x2c8] sm:$0xff]
  %v111 = vld [vmem:[%s0 + $0x2d0] sm:$0xff]
  %v112 = vld [vmem:[%s0 + $0x2d8] sm:$0xff]
  %v113 = vld [vmem:[%s0 + $0x2e0] sm:$0xff]
  %v114 = vld [vmem:[%s0 + $0x2e8] sm:$0xff]
  %v115 = vld [vmem:[%s0 + $0x2f0] sm:$0xff]
  %v116 = vld [vmem:[%s0 + $0x2f8] sm:$0xff]
  %v117 = vld [vmem:[%s0 + $0x300] sm:$0xff]
  %v118 = vld [vmem:[%s0 + $0x308] sm:$0xff]
  %v119 = vld [vmem:[%s0 + $0x310] sm:$0xff]
  %v120 = vld [vmem:[%s0 + $0x318] sm:$0xff]
  %v121 = vld [vmem:[%s0 + $0x320] sm:$0xff]
  %v122 = vld [vmem:[%s0 + $0x328] sm:$0xff]
  %v123 = vld [vmem:[%s0 + $0x330] sm:$0xff]
  %v124 = vld [vmem:[%s0 + $0x338] sm:$0xff]
  %v125 = vld [vmem:[%s0 + $0x340] sm:$0xff]
  %v126 = vld [vmem:[%s0 + $0x348] sm:$0xff]
  %v127 = vld [vmem:[%s0 + $0x350] sm:$0xff]
  %v128 = vld [vmem:[%s0 + $0x358] sm:$0xff]
  %v129 = vld [vmem:[%s0 + $0x360] sm:$0xff]
  %v130 = vld [vmem:[%s0 + $0x368] sm:$0xff]
  %v131 = vld [vmem:[%s0 + $0x370] sm:$0xff]
  %v132 = vld [vmem:[%s0 + $0x378] sm:$0xff]
  %v133 = vld [vmem:[%s0 + $0x380] sm:$0xff]
  %v134 = vld [vmem:[%s0 + $0x388] sm:$0xff]
  %v135 = vld [vmem:[%s0 + $0x390] sm:$0xff]
  %v136 = vld [vmem:[%s0 + $0x398] sm:$0xff]
  %v137 = vld [vmem:[%s0 + $0x3a0] sm:$0xff]
  %v138 = vld [vmem:[%s0 + $0x3a8] sm:$0xff]
  %v139 = vld [vmem:[%s0 + $0x3b0] sm:$0xff]
  %v140 = vld [vmem:[%s0 + $0x3b8] sm:$0xff]
  %v141 = vld [vmem:[%s0 + $0x3c0] sm:$0xff]
  %v142 = vld [vmem:[%s0 + $0x3c8] sm:$0xff]
  %v143 = vld [vmem:[%s0 + $0x3d0] sm:$0xff]
  %v144 = vld [vmem:[%s0 + $0x3d8] sm:$0xff]
  %v145 = vld [vmem:[%s0 + $0x3e0] sm:$0xff]
  %v146 = vld [vmem:[%s0 + $0x3e8] sm:$0xff]
  %v147 = vld [vmem:[%s0 + $0x3f0] sm:$0xff]
  %v148 = vld [vmem:[%s0 + $0x3f8] sm:$0xff]
  %v149 = vld [vmem:[%s0 + $0x400] sm:$0xff]
  %v150 = vld [vmem:[%s0 + $0x408] sm:$0xff]
  %v151 = vld [vmem:[%s0 + $0x410] sm:$0xff]
  %v152 = vld [vmem:[%s0 + $0x418] sm:$0xff]
  %v153 = vld [vmem:[%s0 + $0x420] sm:$0xff]
  %v154 = vld [vmem:[%s0 + $0x428] sm:$0xff]
  %v155 = vld [vmem:[%s0 + $0x430] sm:$0xff]
  %v156 = vld [vmem:[%s0 + $0x438] sm:$0xff]
  %v157 = vld [vmem:[%s0 + $0x440] sm:$0xff]
  %v158 = vld [vmem:[%s0 + $0x448] sm:$0xff]
  %v159 = vld [vmem:[%s0 + $0x450] sm:$0xff]
  %v160 = vld [vmem:[%s0 + $0x458] sm:$0xff]
  %v161 = vld [vmem:[%s0 + $0x460] sm:$0xff]
  %v162 = vld [vmem:[%s0 + $0x468] sm:$0xff]
  %v163 = vld [vmem:[%s0 + $0x470] sm:$0xff]
  %v164 = vld [vmem:[%s0 + $0x478] sm:$0xff]
  %v165 = vld [vmem:[%s0 + $0x480] sm:$0xff]
  %v166 = vld [vmem:[%s0 + $0x488] sm:$0xff]
  %v167 = vld [vmem:[%s0 + $0x490] sm:$0xff]
  %v168 = vld [vmem:[%s0 + $0x498] sm:$0xff]
  %v169 = vld [vmem:[%s0 + $0x4a0] sm:$0xff]
  %v170 = vld [vmem:[%s0 + $0x4a8] sm:$0xff]
  %v171 = vld [vmem:[%s0 + $0x4b0] sm:$0xff]
  %v172 = vld [vmem:[%s0 + $0x4b8] sm:$0xff]
  %v173 = vld [vmem:[%s0 + $0x4c0] sm:$0xff]
  %v174 = vld [vmem:[%s0 + $0x4c8] sm:$0xff]
  %v175 = vld [vmem:[%s0 + $0x4d0] sm:$0xff]
  %v176 = vld [vmem:[%s0 + $0x4d8] sm:$0xff]
  %v177 = vld [vmem:[%s0 + $0x4e0] sm:$0xff]
  %v178 = vld [vmem:[%s0 + $0x4e8] sm:$0xff]
  %v179 = vld [vmem:[%s0 + $0x4f0] sm:$0xff]
  %v180 = vld [vmem:[%s0 + $0x4f8] sm:$0xff]
  %v181 = vld [vmem:[%s0 + $0x500] sm:$0xff]
  %v182 = vld [vmem:[%s0 + $0x508] sm:$0xff]
  %v183 = vld [vmem:[%s0 + $0x510] sm:$0xff]
  %v184 = vld [vmem:[%s0 + $0x518] sm:$0xff]
  %v185 = vld [vmem:[%s0 + $0x520] sm:$0xff]
  %v186 = vld [vmem:[%s0 + $0x528] sm:$0xff]
  %v187 = vld [vmem:[%s0 + $0x530] sm:$0xff]
  %v188 = vld [vmem:[%s0 + $0x538] sm:$0xff]
  %v189 = vld [vmem:[%s0 + $0x540] sm:$0xff]
  %v190 = vld [vmem:[%s0 + $0x548] sm:$0xff]
  %v191 = vld [vmem:[%s0 + $0x550] sm:$0xff]
  %v192 = vld [vmem:[%s0 + $0x558] sm:$0xff]
  %v193 = vld [vmem:[%s0 + $0x560] sm:$0xff]
  %v194 = vld [vmem:[%s0 + $0x568] sm:$0xff]
  %v195 = vld [vmem:[%s0 + $0x570] sm:$0xff]
  %v196 = vld [vmem:[%s0 + $0x578] sm:$0xff]
  %v197 = vld [vmem:[%s0 + $0x580] sm:$0xff]
  %v198 = vld [vmem:[%s0 + $0x588] sm:$0xff]
  %v199 = vld [vmem:[%s0 + $0x590] sm:$0xff]
  %v200 = vld [vmem:[%s0 + $0x598] sm:$0xff]
  %v201 = vld [vmem:[%s0 + $0x5a0] sm:$0xff]
  %v202 = vld [vmem:[%s0 + $0x5a8] sm:$0xff]
  %v203 = vld [vmem:[%s0 + $0x5b0] sm:$0xff]
  %v204 = vld [vmem:[%s0 + $0x5b8] sm:$0xff]
  %v205 = vld [vmem:[%s0 + $0x5c0] sm:$0xff]
  %v206 = vld [vmem:[%s0 + $0x5c8] sm:$0xff]
  %v207 = vld [vmem:[%s0 + $0x5d0] sm:$0xff]
  %v208 = vld [vmem:[%s0 + $0x5d8] sm:$0xff]
  %v209 = vld [vmem:[%s0 + $0x5e0] sm:$0xff]
  %v210 = vld [vmem:[%s0 + $0x5e8] sm:$0xff]
  %v211 = vld [vmem:[%s0 + $0x5f0] sm:$0xff]
  %v212 = vld [vmem:[%s0 + $0x5f8] sm:$0xff]
  %v213 = vld [vmem:[%s0 + $0x600] sm:$0xff]
  %v214 = vld [vmem:[%s0 + $0x608] sm:$0xff]
  %v215 = vld [vmem:[%s0 + $0x610] sm:$0xff]
  %v216 = vld [vmem:[%s0 + $0x618] sm:$0xff]
  %v217 = vld [vmem:[%s0 + $0x620] sm:$0xff]
  %v218 = vld [vmem:[%s0 + $0x628] sm:$0xff]
  %v219 = vld [vmem:[%s0 + $0x630] sm:$0xff]
  %v220 = vld [vmem:[%s0 + $0x638] sm:$0xff]
  %v221 = vld [vmem:[%s0 + $0x640] sm:$0xff]
  %v222 = vld [vmem:[%s0 + $0x648] sm:$0xff]
  %v223 = vld [vmem:[%s0 + $0x650] sm:$0xff]
  %v224 = vld [vmem:[%s0 + $0x658] sm:$0xff]
  %v225 = vld [vmem:[%s0 + $0x660] sm:$0xff]
  %v226 = vld [vmem:[%s0 + $0x668] sm:$0xff]
  %v227 = vld [vmem:[%s0 + $0x670] sm:$0xff]
  %v228 = vld [vmem:[%s0 + $0x678] sm:$0xff]
  %v229 = vld [vmem:[%s0 + $0x680] sm:$0xff]
  %v230 = vld [vmem:[%s0 + $0x688] sm:$0xff]
  %v231 = vld [vmem:[%s0 + $0x690] sm:$0xff]
  %v232 = vld [vmem:[%s0 + $0x698] sm:$0xff]
  %v233 = vld [vmem:[%s0 + $0x6a0] sm:$0xff]
  %v234 = vld [vmem:[%s0 + $0x6a8] sm:$0xff]
  %v235 = vld [vmem:[%s0 + $0x6b0] sm:$0xff]
  %v236 = vld [vmem:[%s0 + $0x6b8] sm:$0xff]
  %v237 = vld [vmem:[%s0 + $0x6c0] sm:$0xff]
  %v238 = vld [vmem:[%s0 + $0x6c8] sm:$0xff]
  %v239 = vld [vmem:[%s0 + $0x6d0] sm:$0xff]
  %v240 = vld [vmem:[%s0 + $0x6d8] sm:$0xff]
  %v241 = vld [vmem:[%s0 + $0x6e0] sm:$0xff]
  %v242 = vld [vmem:[%s0 + $0x6e8] sm:$0xff]
  %v243 = vld [vmem:[%s0 + $0x6f0] sm:$0xff]
  %v244 = vld [vmem:[%s0 + $0x6f8] sm:$0xff]
  %v245 = vld [vmem:[%s0 + $0x700] sm:$0xff]
  %v246 = vld [vmem:[%s0 + $0x708] sm:$0xff]
  %v247 = vld [vmem:[%s0 + $0x710] sm:$0xff]
  %v248 = vld [vmem:[%s0 + $0x718] sm:$0xff]
  %v249 = vld [vmem:[%s0 + $0x720] sm:$0xff]
  %v250 = vld [vmem:[%s0 + $0x728] sm:$0xff]
  %v251 = vld [vmem:[%s0 + $0x730] sm:$0xff]
  %v252 = vld [vmem:[%s0 + $0x738] sm:$0xff]
  %v253 = vld [vmem:[%s0 + $0x740] sm:$0xff]
  %v254 = vld [vmem:[%s0 + $0x748] sm:$0xff]
  %v255 = vld [vmem:[%s0 + $0x750] sm:$0xff]
  %v256 = vld [vmem:[%s0 + $0x758] sm:$0xff]
  %v257 = vld [vmem:[%s0 + $0x760] sm:$0xff]
  %v258 = vld [vmem:[%s0 + $0x768] sm:$0xff]
  %v259 = vld [vmem:[%s0 + $0x770] sm:$0xff]
  %v260 = vld [vmem:[%s0 + $0x778] sm:$0xff]
  %v261 = vld [vmem:[%s0 + $0x780] sm:$0xff]
  %v262 = vld [vmem:[%s0 + $0x788] sm:$0xff]
  %v263 = vld [vmem:[%s0 + $0x790] sm:$0xff]
  %v264 = vld [vmem:[%s0 + $0x798] sm:$0xff]
  %v265 = vld [vmem:[%s0 + $0x7a0] sm:$0xff]
  %v266 = vld [vmem:[%s0 + $0x7a8] sm:$0xff]
  %v267 = vld [vmem:[%s0 + $0x7b0] sm:$0xff]
  %v268 = vld [vmem:[%s0 + $0x7b8] sm:$0xff]
  %v269 = vld [vmem:[%s0 + $0x7c0] sm:$0xff]
  %v270 = vld [vmem:[%s0 + $0x7c8] sm:$0xff]
  %v271 = vld [vmem:[%s0 + $0x7d0] sm:$0xff]
  %v272 = vld [vmem:[%s0 + $0x7d8] sm:$0xff]
  %v273 = vld [vmem:[%s0 + $0x7e0] sm:$0xff]
  %v274 = vld [vmem:[%s0 + $0x7e8] sm:$0xff]
  %v275 = vld [vmem:[%s0 + $0x7f0] sm:$0xff]
  %v276 = vld [vmem:[%s0 + $0x7f8] sm:$0xff]
  %v277 = vld [vmem:[%s0 + $0x800] sm:$0xff]
  %v278 = vld [vmem:[%s0 + $0x808] sm:$0xff]
  %v279 = vld [vmem:[%s0 + $0x810] sm:$0xff]
  %v280 = vld [vmem:[%s0 + $0x818] sm:$0xff]
  %v281 = vld [vmem:[%s0 + $0x820] sm:$0xff]
  %v282 = vld [vmem:[%s0 + $0x828] sm:$0xff]
  %v283 = vld [vmem:[%s0 + $0x830] sm:$0xff]
  %v284 = vld [vmem:[%s0 + $0x838] sm:$0xff]
  %v285 = vpack.c.bf16 %v29, %v21
  %v286 = vpack.c.bf16 %v30, %v22
  %v287 = vpack.c.bf16 %v31, %v23
  %v288 = vpack.c.bf16 %v32, %v24
  %v289 = vpack.c.bf16 %v33, %v25
  %v290 = vpack.c.bf16 %v34, %v26
  %v291 = vpack.c.bf16 %v35, %v27
  %v292 = vpack.c.bf16 %v36, %v28
  %v293 = vpack.c.bf16 %v45, %v37
  %v294 = vpack.c.bf16 %v46, %v38
  %v295 = vpack.c.bf16 %v47, %v39
  %v296 = vpack.c.bf16 %v48, %v40
  %v297 = vpack.c.bf16 %v49, %v41
  %v298 = vpack.c.bf16 %v50, %v42
  %v299 = vpack.c.bf16 %v51, %v43
  %v300 = vpack.c.bf16 %v52, %v44
  %v301 = vpack.c.bf16 %v61, %v53
  %v302 = vpack.c.bf16 %v62, %v54
  %v303 = vpack.c.bf16 %v63, %v55
  %v304 = vpack.c.bf16 %v64, %v56
  %v305 = vpack.c.bf16 %v65, %v57
  %v306 = vpack.c.bf16 %v66, %v58
  %v307 = vpack.c.bf16 %v67, %v59
  %v308 = vpack.c.bf16 %v68, %v60
  %v309 = vpack.c.bf16 %v77, %v69
  %v310 = vpack.c.bf16 %v78, %v70
  %v311 = vpack.c.bf16 %v79, %v71
  %v312 = vpack.c.bf16 %v80, %v72
  %v313 = vpack.c.bf16 %v81, %v73
  %v314 = vpack.c.bf16 %v82, %v74
  %v315 = vpack.c.bf16 %v83, %v75
  %v316 = vpack.c.bf16 %v84, %v76
  %v317 = vpack.c.bf16 %v93, %v85
  %v318 = vpack.c.bf16 %v94, %v86
  %v319 = vpack.c.bf16 %v95, %v87
  %v320 = vpack.c.bf16 %v96, %v88
  %v321 = vpack.c.bf16 %v97, %v89
  %v322 = vpack.c.bf16 %v98, %v90
  %v323 = vpack.c.bf16 %v99, %v91
  %v324 = vpack.c.bf16 %v100, %v92
  %v325 = vpack.c.bf16 %v109, %v101
  %v326 = vpack.c.bf16 %v110, %v102
  %v327 = vpack.c.bf16 %v111, %v103
  %v328 = vpack.c.bf16 %v112, %v104
  %v329 = vpack.c.bf16 %v113, %v105
  %v330 = vpack.c.bf16 %v114, %v106
  %v331 = vpack.c.bf16 %v115, %v107
  %v332 = vpack.c.bf16 %v116, %v108
  %v333 = vpack.c.bf16 %v125, %v117
  %v334 = vpack.c.bf16 %v126, %v118
  %v335 = vpack.c.bf16 %v127, %v119
  %v336 = vpack.c.bf16 %v128, %v120
  %v337 = vpack.c.bf16 %v129, %v121
  %v338 = vpack.c.bf16 %v130, %v122
  %v339 = vpack.c.bf16 %v131, %v123
  %v340 = vpack.c.bf16 %v132, %v124
  %v341 = vpack.c.bf16 %v141, %v133
  %v342 = vpack.c.bf16 %v142, %v134
  %v343 = vpack.c.bf16 %v143, %v135
  %v344 = vpack.c.bf16 %v144, %v136
  %v345 = vpack.c.bf16 %v145, %v137
  %v346 = vpack.c.bf16 %v146, %v138
  %v347 = vpack.c.bf16 %v147, %v139
  %v348 = vpack.c.bf16 %v148, %v140
  %v349 = vpack.c.bf16 %v157, %v149
  %v350 = vpack.c.bf16 %v158, %v150
  %v351 = vpack.c.bf16 %v159, %v151
  %v352 = vpack.c.bf16 %v160, %v152
  %v353 = vpack.c.bf16 %v161, %v153
  %v354 = vpack.c.bf16 %v162, %v154
  %v355 = vpack.c.bf16 %v163, %v155
  %v356 = vpack.c.bf16 %v164, %v156
  %v357 = vpack.c.bf16 %v173, %v165
  %v358 = vpack.c.bf16 %v174, %v166
  %v359 = vpack.c.bf16 %v175, %v167
  %v360 = vpack.c.bf16 %v176, %v168
  %v361 = vpack.c.bf16 %v177, %v169
  %v362 = vpack.c.bf16 %v178, %v170
  %v363 = vpack.c.bf16 %v179, %v171
  %v364 = vpack.c.bf16 %v180, %v172
  %v365 = vpack.c.bf16 %v189, %v181
  %v366 = vpack.c.bf16 %v190, %v182
  %v367 = vpack.c.bf16 %v191, %v183
  %v368 = vpack.c.bf16 %v192, %v184
  %v369 = vpack.c.bf16 %v193, %v185
  %v370 = vpack.c.bf16 %v194, %v186
  %v371 = vpack.c.bf16 %v195, %v187
  %v372 = vpack.c.bf16 %v196, %v188
  %v373 = vpack.c.bf16 %v205, %v197
  %v374 = vpack.c.bf16 %v206, %v198
  %v375 = vpack.c.bf16 %v207, %v199
  %v376 = vpack.c.bf16 %v208, %v200
  %v377 = vpack.c.bf16 %v209, %v201
  %v378 = vpack.c.bf16 %v210, %v202
  %v379 = vpack.c.bf16 %v211, %v203
  %v380 = vpack.c.bf16 %v212, %v204
  %v381 = vpack.c.bf16 %v221, %v213
  %v382 = vpack.c.bf16 %v222, %v214
  %v383 = vpack.c.bf16 %v223, %v215
  %v384 = vpack.c.bf16 %v224, %v216
  %v385 = vpack.c.bf16 %v225, %v217
  %v386 = vpack.c.bf16 %v226, %v218
  %v387 = vpack.c.bf16 %v227, %v219
  %v388 = vpack.c.bf16 %v228, %v220
  %v389 = vpack.c.bf16 %v237, %v229
  %v390 = vpack.c.bf16 %v238, %v230
  %v391 = vpack.c.bf16 %v239, %v231
  %v392 = vpack.c.bf16 %v240, %v232
  %v393 = vpack.c.bf16 %v241, %v233
  %v394 = vpack.c.bf16 %v242, %v234
  %v395 = vpack.c.bf16 %v243, %v235
  %v396 = vpack.c.bf16 %v244, %v236
  %v397 = vpack.c.bf16 %v253, %v245
  %v398 = vpack.c.bf16 %v254, %v246
  %v399 = vpack.c.bf16 %v255, %v247
  %v400 = vpack.c.bf16 %v256, %v248
  %v401 = vpack.c.bf16 %v257, %v249
  %v402 = vpack.c.bf16 %v258, %v250
  %v403 = vpack.c.bf16 %v259, %v251
  %v404 = vpack.c.bf16 %v260, %v252
  %v405 = vpack.c.bf16 %v269, %v261
  %v406 = vpack.c.bf16 %v270, %v262
  %v407 = vpack.c.bf16 %v271, %v263
  %v408 = vpack.c.bf16 %v272, %v264
  %v409 = vpack.c.bf16 %v273, %v265
  %v410 = vpack.c.bf16 %v274, %v266
  %v411 = vpack.c.bf16 %v275, %v267
  %v412 = vpack.c.bf16 %v276, %v268
  %v413 = vpack.c.bf16 %v277, %v277
  %v414 = vpack.c.bf16 %v278, %v278
  %v415 = vpack.c.bf16 %v279, %v279
  %v416 = vpack.c.bf16 %v280, %v280
  %v417 = vpack.c.bf16 %v281, %v281
  %v418 = vpack.c.bf16 %v282, %v282
  %v419 = vpack.c.bf16 %v283, %v283
  %v420 = vpack.c.bf16 %v284, %v284
  %v421 = vld [vmem:[%s4] sm:$0x1]
  %v423 = vperm.slane %v421, 0
  %425 = vst [vmem:[%s5] sm:$0xff] %v423
  %426 = vst [vmem:[%s5 + $0x8] sm:$0xff] %v423
  %427 = vst [vmem:[%s5 + $0x10] sm:$0xff] %v423
  %428 = vst [vmem:[%s5 + $0x18] sm:$0xff] %v423
  %429 = vst [vmem:[%s5 + $0x20] sm:$0xff] %v423
  %430 = vst [vmem:[%s5 + $0x28] sm:$0xff] %v423
  %431 = vst [vmem:[%s5 + $0x30] sm:$0xff] %v423
  %432 = vst [vmem:[%s5 + $0x38] sm:$0xff] %v423
  %433 = vst [vmem:[%s5 + $0x40] sm:$0xff] %v423
  %434 = vst [vmem:[%s5 + $0x48] sm:$0xff] %v423
  %435 = vst [vmem:[%s5 + $0x50] sm:$0xff] %v423
  %436 = vst [vmem:[%s5 + $0x58] sm:$0xff] %v423
  %437 = vst [vmem:[%s5 + $0x60] sm:$0xff] %v423
  %438 = vst [vmem:[%s5 + $0x68] sm:$0xff] %v423
  %439 = vst [vmem:[%s5 + $0x70] sm:$0xff] %v423
  %440 = vst [vmem:[%s5 + $0x78] sm:$0xff] %v423
  %441 = vst [vmem:[%s5 + $0x80] sm:$0xff] %v423
  %442 = vst [vmem:[%s5 + $0x88] sm:$0xff] %v423
  %443 = vst [vmem:[%s5 + $0x90] sm:$0xff] %v423
  %444 = vst [vmem:[%s5 + $0x98] sm:$0xff] %v423
  %445 = vst [vmem:[%s5 + $0xa0] sm:$0xff] %v423
  %446 = vst [vmem:[%s5 + $0xa8] sm:$0xff] %v423
  %447 = vst [vmem:[%s5 + $0xb0] sm:$0xff] %v423
  %448 = vst [vmem:[%s5 + $0xb8] sm:$0xff] %v423
  %449 = vst [vmem:[%s5 + $0xc0] sm:$0xff] %v423
  %450 = vst [vmem:[%s5 + $0xc8] sm:$0xff] %v423
  %451 = vst [vmem:[%s5 + $0xd0] sm:$0xff] %v423
  %452 = vst [vmem:[%s5 + $0xd8] sm:$0xff] %v423
  %453 = vst [vmem:[%s5 + $0xe0] sm:$0xff] %v423
  %454 = vst [vmem:[%s5 + $0xe8] sm:$0xff] %v423
  %455 = vst [vmem:[%s5 + $0xf0] sm:$0xff] %v423
  %456 = vst [vmem:[%s5 + $0xf8] sm:$0xff] %v423
  %457 = vst [vmem:[%s5 + $0x100] sm:$0xff] %v423
  %v458 = vld [vmem:[%s1] sm:$0xf]
  %v459 = vld [vmem:[%s1 + $0x10] sm:$0xf]
  %v460 = vld [vmem:[%s1 + $0x20] sm:$0xf]
  %v461 = vld [vmem:[%s1 + $0x30] sm:$0xf]
  %v462 = vld [vmem:[%s1 + $0x40] sm:$0xf]
  %v463 = vld [vmem:[%s1 + $0x50] sm:$0xf]
  %v464 = vld [vmem:[%s1 + $0x60] sm:$0xf]
  %v465 = vld [vmem:[%s1 + $0x70] sm:$0xf]
  %v466 = vld [vmem:[%s1 + $0x80] sm:$0xf]
  %v467 = vld [vmem:[%s1 + $0x90] sm:$0xf]
  %v468 = vld [vmem:[%s1 + $0xa0] sm:$0xf]
  %v469 = vld [vmem:[%s1 + $0xb0] sm:$0xf]
  %v470 = vld [vmem:[%s1 + $0xc0] sm:$0xf]
  %v471 = vld [vmem:[%s1 + $0xd0] sm:$0xf]
  %v472 = vld [vmem:[%s1 + $0xe0] sm:$0xf]
  %v473 = vld [vmem:[%s1 + $0xf0] sm:$0xf]
  %v474 = vld [vmem:[%s1 + $0x100] sm:$0xf]
  %v475 = vld [vmem:[%s1 + $0x110] sm:$0xf]
  %v476 = vld [vmem:[%s1 + $0x120] sm:$0xf]
  %v477 = vld [vmem:[%s1 + $0x130] sm:$0xf]
  %v478 = vld [vmem:[%s1 + $0x140] sm:$0xf]
  %v479 = vld [vmem:[%s1 + $0x150] sm:$0xf]
  %v480 = vld [vmem:[%s1 + $0x160] sm:$0xf]
  %v481 = vld [vmem:[%s1 + $0x170] sm:$0xf]
  %v482 = vld [vmem:[%s1 + $0x180] sm:$0xf]
  %v483 = vld [vmem:[%s1 + $0x190] sm:$0xf]
  %v484 = vld [vmem:[%s1 + $0x1a0] sm:$0xf]
  %v485 = vld [vmem:[%s1 + $0x1b0] sm:$0xf]
  %v486 = vld [vmem:[%s1 + $0x1c0] sm:$0xf]
  %v487 = vld [vmem:[%s1 + $0x1d0] sm:$0xf]
  %v488 = vld [vmem:[%s1 + $0x1e0] sm:$0xf]
  %v489 = vld [vmem:[%s1 + $0x1f0] sm:$0xf]
  %v490 = vld [vmem:[%s1 + $0x200] sm:$0xf]
  %v491 = vld [vmem:[%s1 + $0x210] sm:$0xf]
  %v492 = vld [vmem:[%s1 + $0x220] sm:$0xf]
  %v493 = vld [vmem:[%s1 + $0x230] sm:$0xf]
  %v494 = vld [vmem:[%s1 + $0x240] sm:$0xf]
  %v495 = vld [vmem:[%s1 + $0x250] sm:$0xf]
  %v496 = vld [vmem:[%s1 + $0x260] sm:$0xf]
  %v497 = vld [vmem:[%s1 + $0x270] sm:$0xf]
  %v498 = vld [vmem:[%s1 + $0x280] sm:$0xf]
  %v499 = vld [vmem:[%s1 + $0x290] sm:$0xf]
  %v500 = vld [vmem:[%s1 + $0x2a0] sm:$0xf]
  %v501 = vld [vmem:[%s1 + $0x2b0] sm:$0xf]
  %v502 = vld [vmem:[%s1 + $0x2c0] sm:$0xf]
  %v503 = vld [vmem:[%s1 + $0x2d0] sm:$0xf]
  %v504 = vld [vmem:[%s1 + $0x2e0] sm:$0xf]
  %v505 = vld [vmem:[%s1 + $0x2f0] sm:$0xf]
  %v506 = vld [vmem:[%s1 + $0x300] sm:$0xf]
  %v507 = vld [vmem:[%s1 + $0x310] sm:$0xf]
  %v508 = vld [vmem:[%s1 + $0x320] sm:$0xf]
  %v509 = vld [vmem:[%s1 + $0x330] sm:$0xf]
  %v510 = vld [vmem:[%s1 + $0x340] sm:$0xf]
  %v511 = vld [vmem:[%s1 + $0x350] sm:$0xf]
  %v512 = vld [vmem:[%s1 + $0x360] sm:$0xf]
  %v513 = vld [vmem:[%s1 + $0x370] sm:$0xf]
  %v514 = vld [vmem:[%s1 + $0x380] sm:$0xf]
  %v515 = vld [vmem:[%s1 + $0x390] sm:$0xf]
  %v516 = vld [vmem:[%s1 + $0x3a0] sm:$0xf]
  %v517 = vld [vmem:[%s1 + $0x3b0] sm:$0xf]
  %v518 = vld [vmem:[%s1 + $0x3c0] sm:$0xf]
  %v519 = vld [vmem:[%s1 + $0x3d0] sm:$0xf]
  %v520 = vld [vmem:[%s1 + $0x3e0] sm:$0xf]
  %v521 = vld [vmem:[%s1 + $0x3f0] sm:$0xf]
  %v522 = vld [vmem:[%s1 + $0x400] sm:$0xf]
  %v523 = vld [vmem:[%s1 + $0x410] sm:$0xf]
  %v524 = vld [vmem:[%s1 + $0x420] sm:$0xf]
  %v525 = vld [vmem:[%s1 + $0x430] sm:$0xf]
  %v526 = vld [vmem:[%s1 + $0x440] sm:$0xf]
  %v527 = vld [vmem:[%s1 + $0x450] sm:$0xf]
  %v528 = vld [vmem:[%s1 + $0x460] sm:$0xf]
  %v529 = vld [vmem:[%s1 + $0x470] sm:$0xf]
  %v530 = vld [vmem:[%s1 + $0x480] sm:$0xf]
  %v531 = vld [vmem:[%s1 + $0x490] sm:$0xf]
  %v532 = vld [vmem:[%s1 + $0x4a0] sm:$0xf]
  %v533 = vld [vmem:[%s1 + $0x4b0] sm:$0xf]
  %v534 = vld [vmem:[%s1 + $0x4c0] sm:$0xf]
  %v535 = vld [vmem:[%s1 + $0x4d0] sm:$0xf]
  %v536 = vld [vmem:[%s1 + $0x4e0] sm:$0xf]
  %v537 = vld [vmem:[%s1 + $0x4f0] sm:$0xf]
  %v538 = vld [vmem:[%s1 + $0x500] sm:$0xf]
  %v539 = vld [vmem:[%s1 + $0x510] sm:$0xf]
  %v540 = vld [vmem:[%s1 + $0x520] sm:$0xf]
  %v541 = vld [vmem:[%s1 + $0x530] sm:$0xf]
  %v542 = vld [vmem:[%s1 + $0x540] sm:$0xf]
  %v543 = vld [vmem:[%s1 + $0x550] sm:$0xf]
  %v544 = vld [vmem:[%s1 + $0x560] sm:$0xf]
  %v545 = vld [vmem:[%s1 + $0x570] sm:$0xf]
  %v546 = vld [vmem:[%s1 + $0x580] sm:$0xf]
  %v547 = vld [vmem:[%s1 + $0x590] sm:$0xf]
  %v548 = vld [vmem:[%s1 + $0x5a0] sm:$0xf]
  %v549 = vld [vmem:[%s1 + $0x5b0] sm:$0xf]
  %v550 = vld [vmem:[%s1 + $0x5c0] sm:$0xf]
  %v551 = vld [vmem:[%s1 + $0x5d0] sm:$0xf]
  %v552 = vld [vmem:[%s1 + $0x5e0] sm:$0xf]
  %v553 = vld [vmem:[%s1 + $0x5f0] sm:$0xf]
  %v554 = vld [vmem:[%s1 + $0x600] sm:$0xf]
  %v555 = vld [vmem:[%s1 + $0x610] sm:$0xf]
  %v556 = vld [vmem:[%s1 + $0x620] sm:$0xf]
  %v557 = vld [vmem:[%s1 + $0x630] sm:$0xf]
  %v558 = vld [vmem:[%s1 + $0x640] sm:$0xf]
  %v559 = vld [vmem:[%s1 + $0x650] sm:$0xf]
  %v560 = vld [vmem:[%s1 + $0x660] sm:$0xf]
  %v561 = vld [vmem:[%s1 + $0x670] sm:$0xf]
  %v562 = vld [vmem:[%s1 + $0x680] sm:$0xf]
  %v563 = vld [vmem:[%s1 + $0x690] sm:$0xf]
  %v564 = vld [vmem:[%s1 + $0x6a0] sm:$0xf]
  %v565 = vld [vmem:[%s1 + $0x6b0] sm:$0xf]
  %v566 = vld [vmem:[%s1 + $0x6c0] sm:$0xf]
  %v567 = vld [vmem:[%s1 + $0x6d0] sm:$0xf]
  %v568 = vld [vmem:[%s1 + $0x6e0] sm:$0xf]
  %v569 = vld [vmem:[%s1 + $0x6f0] sm:$0xf]
  %v570 = vld [vmem:[%s1 + $0x700] sm:$0xf]
  %v571 = vld [vmem:[%s1 + $0x710] sm:$0xf]
  %v572 = vld [vmem:[%s1 + $0x720] sm:$0xf]
  %v573 = vld [vmem:[%s1 + $0x730] sm:$0xf]
  %v574 = vld [vmem:[%s1 + $0x740] sm:$0xf]
  %v575 = vld [vmem:[%s1 + $0x750] sm:$0xf]
  %v576 = vld [vmem:[%s1 + $0x760] sm:$0xf]
  %v577 = vld [vmem:[%s1 + $0x770] sm:$0xf]
  %v578 = vld [vmem:[%s1 + $0x780] sm:$0xf]
  %v579 = vld [vmem:[%s1 + $0x790] sm:$0xf]
  %v580 = vld [vmem:[%s1 + $0x7a0] sm:$0xf]
  %v581 = vld [vmem:[%s1 + $0x7b0] sm:$0xf]
  %v582 = vld [vmem:[%s1 + $0x7c0] sm:$0xf]
  %v583 = vld [vmem:[%s2] sm:$0x1]
  %v585 = vperm.slane %v583, 0
  %v712 = vunpack.c.l.b16 %v458
  %v713 = vunpack.c.l.b16 %v459
  %v714 = vunpack.c.l.b16 %v460
  %v715 = vunpack.c.l.b16 %v461
  %v716 = vunpack.c.l.b16 %v462
  %v717 = vunpack.c.l.b16 %v463
  %v718 = vunpack.c.l.b16 %v464
  %v719 = vunpack.c.l.b16 %v465
  %v720 = vunpack.c.l.b16 %v466
  %v721 = vunpack.c.l.b16 %v467
  %v722 = vunpack.c.l.b16 %v468
  %v723 = vunpack.c.l.b16 %v469
  %v724 = vunpack.c.l.b16 %v470
  %v725 = vunpack.c.l.b16 %v471
  %v726 = vunpack.c.l.b16 %v472
  %v727 = vunpack.c.l.b16 %v473
  %v728 = vunpack.c.l.b16 %v474
  %v729 = vunpack.c.l.b16 %v475
  %v730 = vunpack.c.l.b16 %v476
  %v731 = vunpack.c.l.b16 %v477
  %v732 = vunpack.c.l.b16 %v478
  %v733 = vunpack.c.l.b16 %v479
  %v734 = vunpack.c.l.b16 %v480
  %v735 = vunpack.c.l.b16 %v481
  %v736 = vunpack.c.l.b16 %v482
  %v737 = vunpack.c.l.b16 %v483
  %v738 = vunpack.c.l.b16 %v484
  %v739 = vunpack.c.l.b16 %v485
  %v740 = vunpack.c.l.b16 %v486
  %v741 = vunpack.c.l.b16 %v487
  %v742 = vunpack.c.l.b16 %v488
  %v743 = vunpack.c.l.b16 %v489
  %v744 = vunpack.c.l.b16 %v490
  %v745 = vunpack.c.l.b16 %v491
  %v746 = vunpack.c.l.b16 %v492
  %v747 = vunpack.c.l.b16 %v493
  %v748 = vunpack.c.l.b16 %v494
  %v749 = vunpack.c.l.b16 %v495
  %v750 = vunpack.c.l.b16 %v496
  %v751 = vunpack.c.l.b16 %v497
  %v752 = vunpack.c.l.b16 %v498
  %v753 = vunpack.c.l.b16 %v499
  %v754 = vunpack.c.l.b16 %v500
  %v755 = vunpack.c.l.b16 %v501
  %v756 = vunpack.c.l.b16 %v502
  %v757 = vunpack.c.l.b16 %v503
  %v758 = vunpack.c.l.b16 %v504
  %v759 = vunpack.c.l.b16 %v505
  %v760 = vunpack.c.l.b16 %v506
  %v761 = vunpack.c.l.b16 %v507
  %v762 = vunpack.c.l.b16 %v508
  %v763 = vunpack.c.l.b16 %v509
  %v764 = vunpack.c.l.b16 %v510
  %v765 = vunpack.c.l.b16 %v511
  %v766 = vunpack.c.l.b16 %v512
  %v767 = vunpack.c.l.b16 %v513
  %v768 = vunpack.c.l.b16 %v514
  %v769 = vunpack.c.l.b16 %v515
  %v770 = vunpack.c.l.b16 %v516
  %v771 = vunpack.c.l.b16 %v517
  %v772 = vunpack.c.l.b16 %v518
  %v773 = vunpack.c.l.b16 %v519
  %v774 = vunpack.c.l.b16 %v520
  %v775 = vunpack.c.l.b16 %v521
  %v776 = vunpack.c.l.b16 %v522
  %v777 = vunpack.c.l.b16 %v523
  %v778 = vunpack.c.l.b16 %v524
  %v779 = vunpack.c.l.b16 %v525
  %v780 = vunpack.c.l.b16 %v526
  %v781 = vunpack.c.l.b16 %v527
  %v782 = vunpack.c.l.b16 %v528
  %v783 = vunpack.c.l.b16 %v529
  %v784 = vunpack.c.l.b16 %v530
  %v785 = vunpack.c.l.b16 %v531
  %v786 = vunpack.c.l.b16 %v532
  %v787 = vunpack.c.l.b16 %v533
  %v788 = vunpack.c.l.b16 %v534
  %v789 = vunpack.c.l.b16 %v535
  %v790 = vunpack.c.l.b16 %v536
  %v791 = vunpack.c.l.b16 %v537
  %v792 = vunpack.c.l.b16 %v538
  %v793 = vunpack.c.l.b16 %v539
  %v794 = vunpack.c.l.b16 %v540
  %v795 = vunpack.c.l.b16 %v541
  %v796 = vunpack.c.l.b16 %v542
  %v797 = vunpack.c.l.b16 %v543
  %v798 = vunpack.c.l.b16 %v544
  %v799 = vunpack.c.l.b16 %v545
  %v800 = vunpack.c.l.b16 %v546
  %v801 = vunpack.c.l.b16 %v547
  %v802 = vunpack.c.l.b16 %v548
  %v803 = vunpack.c.l.b16 %v549
  %v804 = vunpack.c.l.b16 %v550
  %v805 = vunpack.c.l.b16 %v551
  %v806 = vunpack.c.l.b16 %v552
  %v807 = vunpack.c.l.b16 %v553
  %v808 = vunpack.c.l.b16 %v554
  %v809 = vunpack.c.l.b16 %v555
  %v810 = vunpack.c.l.b16 %v556
  %v811 = vunpack.c.l.b16 %v557
  %v812 = vunpack.c.l.b16 %v558
  %v813 = vunpack.c.l.b16 %v559
  %v814 = vunpack.c.l.b16 %v560
  %v815 = vunpack.c.l.b16 %v561
  %v816 = vunpack.c.l.b16 %v562
  %v817 = vunpack.c.l.b16 %v563
  %v818 = vunpack.c.l.b16 %v564
  %v819 = vunpack.c.l.b16 %v565
  %v820 = vunpack.c.l.b16 %v566
  %v821 = vunpack.c.l.b16 %v567
  %v822 = vunpack.c.l.b16 %v568
  %v823 = vunpack.c.l.b16 %v569
  %v824 = vunpack.c.l.b16 %v570
  %v825 = vunpack.c.l.b16 %v571
  %v826 = vunpack.c.l.b16 %v572
  %v827 = vunpack.c.l.b16 %v573
  %v828 = vunpack.c.l.b16 %v574
  %v829 = vunpack.c.l.b16 %v575
  %v830 = vunpack.c.l.b16 %v576
  %v831 = vunpack.c.l.b16 %v577
  %v832 = vunpack.c.l.b16 %v578
  %v833 = vunpack.c.l.b16 %v579
  %v834 = vunpack.c.l.b16 %v580
  %v835 = vunpack.c.l.b16 %v581
  %v836 = vunpack.c.l.b16 %v582
  %v837 = vpack.c.b16 %v713, %v712
  %v838 = vpack.c.b16 %v715, %v714
  %v839 = vpack.c.b16 %v717, %v716
  %v840 = vpack.c.b16 %v719, %v718
  %v841 = vpack.c.b16 %v721, %v720
  %v842 = vpack.c.b16 %v723, %v722
  %v843 = vpack.c.b16 %v725, %v724
  %v844 = vpack.c.b16 %v727, %v726
  %v845 = vpack.c.b16 %v729, %v728
  %v846 = vpack.c.b16 %v731, %v730
  %v847 = vpack.c.b16 %v733, %v732
  %v848 = vpack.c.b16 %v735, %v734
  %v849 = vpack.c.b16 %v737, %v736
  %v850 = vpack.c.b16 %v739, %v738
  %v851 = vpack.c.b16 %v741, %v740
  %v852 = vpack.c.b16 %v743, %v742
  %v853 = vpack.c.b16 %v745, %v744
  %v854 = vpack.c.b16 %v747, %v746
  %v855 = vpack.c.b16 %v749, %v748
  %v856 = vpack.c.b16 %v751, %v750
  %v857 = vpack.c.b16 %v753, %v752
  %v858 = vpack.c.b16 %v755, %v754
  %v859 = vpack.c.b16 %v757, %v756
  %v860 = vpack.c.b16 %v759, %v758
  %v861 = vpack.c.b16 %v761, %v760
  %v862 = vpack.c.b16 %v763, %v762
  %v863 = vpack.c.b16 %v765, %v764
  %v864 = vpack.c.b16 %v767, %v766
  %v865 = vpack.c.b16 %v769, %v768
  %v866 = vpack.c.b16 %v771, %v770
  %v867 = vpack.c.b16 %v773, %v772
  %v868 = vpack.c.b16 %v775, %v774
  %v869 = vpack.c.b16 %v777, %v776
  %v870 = vpack.c.b16 %v779, %v778
  %v871 = vpack.c.b16 %v781, %v780
  %v872 = vpack.c.b16 %v783, %v782
  %v873 = vpack.c.b16 %v785, %v784
  %v874 = vpack.c.b16 %v787, %v786
  %v875 = vpack.c.b16 %v789, %v788
  %v876 = vpack.c.b16 %v791, %v790
  %v877 = vpack.c.b16 %v793, %v792
  %v878 = vpack.c.b16 %v795, %v794
  %v879 = vpack.c.b16 %v797, %v796
  %v880 = vpack.c.b16 %v799, %v798
  %v881 = vpack.c.b16 %v801, %v800
  %v882 = vpack.c.b16 %v803, %v802
  %v883 = vpack.c.b16 %v805, %v804
  %v884 = vpack.c.b16 %v807, %v806
  %v885 = vpack.c.b16 %v809, %v808
  %v886 = vpack.c.b16 %v811, %v810
  %v887 = vpack.c.b16 %v813, %v812
  %v888 = vpack.c.b16 %v815, %v814
  %v889 = vpack.c.b16 %v817, %v816
  %v890 = vpack.c.b16 %v819, %v818
  %v891 = vpack.c.b16 %v821, %v820
  %v892 = vpack.c.b16 %v823, %v822
  %v893 = vpack.c.b16 %v825, %v824
  %v894 = vpack.c.b16 %v827, %v826
  %v895 = vpack.c.b16 %v829, %v828
  %v896 = vpack.c.b16 %v831, %v830
  %v897 = vpack.c.b16 %v833, %v832
  %v898 = vpack.c.b16 %v835, %v834
  %v899 = vpack.c.b16 %v836, %v836
  %vm962 = vcmask 850944
  %v964 = vsel %vm962, %v292, 0
  %v967 = vsel %vm962, %v300, 0
  %v970 = vsel %vm962, %v308, 0
  %v973 = vsel %vm962, %v316, 0
  %v976 = vsel %vm962, %v324, 0
  %v979 = vsel %vm962, %v332, 0
  %v982 = vsel %vm962, %v340, 0
  %v985 = vsel %vm962, %v348, 0
  %v988 = vsel %vm962, %v356, 0
  %v991 = vsel %vm962, %v364, 0
  %v994 = vsel %vm962, %v372, 0
  %v997 = vsel %vm962, %v380, 0
  %v1000 = vsel %vm962, %v388, 0
  %v1003 = vsel %vm962, %v396, 0
  %v1006 = vsel %vm962, %v404, 0
  %v1009 = vsel %vm962, %v412, 0
  %v1012 = vsel %vm962, %v420, 0
  %vm1014 = vcmask 1043456
  %v1016 = vsel %vm1014, %v899, 0
  %1018 = vmatpush.bf16.msra.mxu0 %v844
  %1019 = vmatpush.bf16.msra.mxu0 %v843
  %1020 = vmatpush.bf16.msra.mxu0 %v842
  %1021 = vmatpush.bf16.msra.mxu0 %v841
  %1022 = vmatpush.bf16.msra.mxu0 %v840
  %1023 = vmatpush.bf16.msra.mxu0 %v839
  %1024 = vmatpush.bf16.msra.mxu0 %v838
  %1025 = vmatpush.bf16.msra.mxu0 %v837
  %1026 = vmatmul.bf16.gmra.mxu0 %v285
  %v1027 = vpop.f32.mrf.mxu0
  %v1028 = vadd.f32 %v585, %v1027
  %v1029 = vpop.f32.mrf.mxu0
  %v1030 = vadd.f32 %v585, %v1029
  %1031 = vmatmul.bf16.gmra.mxu0 %v293
  %v1032 = vpop.f32.mrf.mxu0
  %v1033 = vadd.f32 %v585, %v1032
  %v1034 = vpop.f32.mrf.mxu0
  %v1035 = vadd.f32 %v585, %v1034
  %1036 = vmatmul.bf16.gmra.mxu0 %v301
  %v1037 = vpop.f32.mrf.mxu0
  %v1038 = vadd.f32 %v585, %v1037
  %v1039 = vpop.f32.mrf.mxu0
  %v1040 = vadd.f32 %v585, %v1039
  %1041 = vmatmul.bf16.gmra.mxu0 %v309
  %v1042 = vpop.f32.mrf.mxu0
  %v1043 = vadd.f32 %v585, %v1042
  %v1044 = vpop.f32.mrf.mxu0
  %v1045 = vadd.f32 %v585, %v1044
  %1046 = vmatmul.bf16.gmra.mxu0 %v317
  %v1047 = vpop.f32.mrf.mxu0
  %v1048 = vadd.f32 %v585, %v1047
  %v1049 = vpop.f32.mrf.mxu0
  %v1050 = vadd.f32 %v585, %v1049
  %1051 = vmatmul.bf16.gmra.mxu0 %v325
  %v1052 = vpop.f32.mrf.mxu0
  %v1053 = vadd.f32 %v585, %v1052
  %v1054 = vpop.f32.mrf.mxu0
  %v1055 = vadd.f32 %v585, %v1054
  %1056 = vmatmul.bf16.gmra.mxu0 %v333
  %v1057 = vpop.f32.mrf.mxu0
  %v1058 = vadd.f32 %v585, %v1057
  %v1059 = vpop.f32.mrf.mxu0
  %v1060 = vadd.f32 %v585, %v1059
  %1061 = vmatmul.bf16.gmra.mxu0 %v341
  %v1062 = vpop.f32.mrf.mxu0
  %v1063 = vadd.f32 %v585, %v1062
  %v1064 = vpop.f32.mrf.mxu0
  %v1065 = vadd.f32 %v585, %v1064
  %1066 = vmatmul.bf16.gmra.mxu0 %v349
  %v1067 = vpop.f32.mrf.mxu0
  %v1068 = vadd.f32 %v585, %v1067
  %v1069 = vpop.f32.mrf.mxu0
  %v1070 = vadd.f32 %v585, %v1069
  %1071 = vmatmul.bf16.gmra.mxu0 %v357
  %v1072 = vpop.f32.mrf.mxu0
  %v1073 = vadd.f32 %v585, %v1072
  %v1074 = vpop.f32.mrf.mxu0
  %v1075 = vadd.f32 %v585, %v1074
  %1076 = vmatmul.bf16.gmra.mxu0 %v365
  %v1077 = vpop.f32.mrf.mxu0
  %v1078 = vadd.f32 %v585, %v1077
  %v1079 = vpop.f32.mrf.mxu0
  %v1080 = vadd.f32 %v585, %v1079
  %1081 = vmatmul.bf16.gmra.mxu0 %v373
  %v1082 = vpop.f32.mrf.mxu0
  %v1083 = vadd.f32 %v585, %v1082
  %v1084 = vpop.f32.mrf.mxu0
  %v1085 = vadd.f32 %v585, %v1084
  %1086 = vmatmul.bf16.gmra.mxu0 %v381
  %v1087 = vpop.f32.mrf.mxu0
  %v1088 = vadd.f32 %v585, %v1087
  %v1089 = vpop.f32.mrf.mxu0
  %v1090 = vadd.f32 %v585, %v1089
  %1091 = vmatmul.bf16.gmra.mxu0 %v389
  %v1092 = vpop.f32.mrf.mxu0
  %v1093 = vadd.f32 %v585, %v1092
  %v1094 = vpop.f32.mrf.mxu0
  %v1095 = vadd.f32 %v585, %v1094
  %1096 = vmatmul.bf16.gmra.mxu0 %v397
  %v1097 = vpop.f32.mrf.mxu0
  %v1098 = vadd.f32 %v585, %v1097
  %v1099 = vpop.f32.mrf.mxu0
  %v1100 = vadd.f32 %v585, %v1099
  %1101 = vmatmul.bf16.gmra.mxu0 %v405
  %v1102 = vpop.f32.mrf.mxu0
  %v1103 = vadd.f32 %v585, %v1102
  %v1104 = vpop.f32.mrf.mxu0
  %v1105 = vadd.f32 %v585, %v1104
  %1106 = vmatmul.bf16.gmra.mxu0 %v413
  %v1107 = vpop.f32.mrf.mxu0
  %v1108 = vadd.f32 %v585, %v1107
  %v1109 = vpop.f32.mrf.mxu0
  %1110 = vdwg.mxu0
  %1111 = vmatpush.bf16.msra.mxu0 %v852
  %1112 = vmatpush.bf16.msra.mxu0 %v851
  %1113 = vmatpush.bf16.msra.mxu0 %v850
  %1114 = vmatpush.bf16.msra.mxu0 %v849
  %1115 = vmatpush.bf16.msra.mxu0 %v848
  %1116 = vmatpush.bf16.msra.mxu0 %v847
  %1117 = vmatpush.bf16.msra.mxu0 %v846
  %1118 = vmatpush.bf16.msra.mxu0 %v845
  %1119 = vmatmul.bf16.gmra.mxu0 %v286
  %v1120 = vpop.f32.mrf.mxu0
  %v1121 = vadd.f32 %v1028, %v1120
  %v1122 = vpop.f32.mrf.mxu0
  %v1123 = vadd.f32 %v1030, %v1122
  %1124 = vmatmul.bf16.gmra.mxu0 %v294
  %v1125 = vpop.f32.mrf.mxu0
  %v1126 = vadd.f32 %v1033, %v1125
  %v1127 = vpop.f32.mrf.mxu0
  %v1128 = vadd.f32 %v1035, %v1127
  %1129 = vmatmul.bf16.gmra.mxu0 %v302
  %v1130 = vpop.f32.mrf.mxu0
  %v1131 = vadd.f32 %v1038, %v1130
  %v1132 = vpop.f32.mrf.mxu0
  %v1133 = vadd.f32 %v1040, %v1132
  %1134 = vmatmul.bf16.gmra.mxu0 %v310
  %v1135 = vpop.f32.mrf.mxu0
  %v1136 = vadd.f32 %v1043, %v1135
  %v1137 = vpop.f32.mrf.mxu0
  %v1138 = vadd.f32 %v1045, %v1137
  %1139 = vmatmul.bf16.gmra.mxu0 %v318
  %v1140 = vpop.f32.mrf.mxu0
  %v1141 = vadd.f32 %v1048, %v1140
  %v1142 = vpop.f32.mrf.mxu0
  %v1143 = vadd.f32 %v1050, %v1142
  %1144 = vmatmul.bf16.gmra.mxu0 %v326
  %v1145 = vpop.f32.mrf.mxu0
  %v1146 = vadd.f32 %v1053, %v1145
  %v1147 = vpop.f32.mrf.mxu0
  %v1148 = vadd.f32 %v1055, %v1147
  %1149 = vmatmul.bf16.gmra.mxu0 %v334
  %v1150 = vpop.f32.mrf.mxu0
  %v1151 = vadd.f32 %v1058, %v1150
  %v1152 = vpop.f32.mrf.mxu0
  %v1153 = vadd.f32 %v1060, %v1152
  %1154 = vmatmul.bf16.gmra.mxu0 %v342
  %v1155 = vpop.f32.mrf.mxu0
  %v1156 = vadd.f32 %v1063, %v1155
  %v1157 = vpop.f32.mrf.mxu0
  %v1158 = vadd.f32 %v1065, %v1157
  %1159 = vmatmul.bf16.gmra.mxu0 %v350
  %v1160 = vpop.f32.mrf.mxu0
  %v1161 = vadd.f32 %v1068, %v1160
  %v1162 = vpop.f32.mrf.mxu0
  %v1163 = vadd.f32 %v1070, %v1162
  %1164 = vmatmul.bf16.gmra.mxu0 %v358
  %v1165 = vpop.f32.mrf.mxu0
  %v1166 = vadd.f32 %v1073, %v1165
  %v1167 = vpop.f32.mrf.mxu0
  %v1168 = vadd.f32 %v1075, %v1167
  %1169 = vmatmul.bf16.gmra.mxu0 %v366
  %v1170 = vpop.f32.mrf.mxu0
  %v1171 = vadd.f32 %v1078, %v1170
  %v1172 = vpop.f32.mrf.mxu0
  %v1173 = vadd.f32 %v1080, %v1172
  %1174 = vmatmul.bf16.gmra.mxu0 %v374
  %v1175 = vpop.f32.mrf.mxu0
  %v1176 = vadd.f32 %v1083, %v1175
  %v1177 = vpop.f32.mrf.mxu0
  %v1178 = vadd.f32 %v1085, %v1177
  %1179 = vmatmul.bf16.gmra.mxu0 %v382
  %v1180 = vpop.f32.mrf.mxu0
  %v1181 = vadd.f32 %v1088, %v1180
  %v1182 = vpop.f32.mrf.mxu0
  %v1183 = vadd.f32 %v1090, %v1182
  %1184 = vmatmul.bf16.gmra.mxu0 %v390
  %v1185 = vpop.f32.mrf.mxu0
  %v1186 = vadd.f32 %v1093, %v1185
  %v1187 = vpop.f32.mrf.mxu0
  %v1188 = vadd.f32 %v1095, %v1187
  %1189 = vmatmul.bf16.gmra.mxu0 %v398
  %v1190 = vpop.f32.mrf.mxu0
  %v1191 = vadd.f32 %v1098, %v1190
  %v1192 = vpop.f32.mrf.mxu0
  %v1193 = vadd.f32 %v1100, %v1192
  %1194 = vmatmul.bf16.gmra.mxu0 %v406
  %v1195 = vpop.f32.mrf.mxu0
  %v1196 = vadd.f32 %v1103, %v1195
  %v1197 = vpop.f32.mrf.mxu0
  %v1198 = vadd.f32 %v1105, %v1197
  %1199 = vmatmul.bf16.gmra.mxu0 %v414
  %v1200 = vpop.f32.mrf.mxu0
  %v1201 = vadd.f32 %v1108, %v1200
  %v1202 = vpop.f32.mrf.mxu0
  %1203 = vdwg.mxu0
  %1204 = vmatpush.bf16.msra.mxu0 %v860
  %1205 = vmatpush.bf16.msra.mxu0 %v859
  %1206 = vmatpush.bf16.msra.mxu0 %v858
  %1207 = vmatpush.bf16.msra.mxu0 %v857
  %1208 = vmatpush.bf16.msra.mxu0 %v856
  %1209 = vmatpush.bf16.msra.mxu0 %v855
  %1210 = vmatpush.bf16.msra.mxu0 %v854
  %1211 = vmatpush.bf16.msra.mxu0 %v853
  %1212 = vmatmul.bf16.gmra.mxu0 %v287
  %v1213 = vpop.f32.mrf.mxu0
  %v1214 = vadd.f32 %v1121, %v1213
  %v1215 = vpop.f32.mrf.mxu0
  %v1216 = vadd.f32 %v1123, %v1215
  %1217 = vmatmul.bf16.gmra.mxu0 %v295
  %v1218 = vpop.f32.mrf.mxu0
  %v1219 = vadd.f32 %v1126, %v1218
  %v1220 = vpop.f32.mrf.mxu0
  %v1221 = vadd.f32 %v1128, %v1220
  %1222 = vmatmul.bf16.gmra.mxu0 %v303
  %v1223 = vpop.f32.mrf.mxu0
  %v1224 = vadd.f32 %v1131, %v1223
  %v1225 = vpop.f32.mrf.mxu0
  %v1226 = vadd.f32 %v1133, %v1225
  %1227 = vmatmul.bf16.gmra.mxu0 %v311
  %v1228 = vpop.f32.mrf.mxu0
  %v1229 = vadd.f32 %v1136, %v1228
  %v1230 = vpop.f32.mrf.mxu0
  %v1231 = vadd.f32 %v1138, %v1230
  %1232 = vmatmul.bf16.gmra.mxu0 %v319
  %v1233 = vpop.f32.mrf.mxu0
  %v1234 = vadd.f32 %v1141, %v1233
  %v1235 = vpop.f32.mrf.mxu0
  %v1236 = vadd.f32 %v1143, %v1235
  %1237 = vmatmul.bf16.gmra.mxu0 %v327
  %v1238 = vpop.f32.mrf.mxu0
  %v1239 = vadd.f32 %v1146, %v1238
  %v1240 = vpop.f32.mrf.mxu0
  %v1241 = vadd.f32 %v1148, %v1240
  %1242 = vmatmul.bf16.gmra.mxu0 %v335
  %v1243 = vpop.f32.mrf.mxu0
  %v1244 = vadd.f32 %v1151, %v1243
  %v1245 = vpop.f32.mrf.mxu0
  %v1246 = vadd.f32 %v1153, %v1245
  %1247 = vmatmul.bf16.gmra.mxu0 %v343
  %v1248 = vpop.f32.mrf.mxu0
  %v1249 = vadd.f32 %v1156, %v1248
  %v1250 = vpop.f32.mrf.mxu0
  %v1251 = vadd.f32 %v1158, %v1250
  %1252 = vmatmul.bf16.gmra.mxu0 %v351
  %v1253 = vpop.f32.mrf.mxu0
  %v1254 = vadd.f32 %v1161, %v1253
  %v1255 = vpop.f32.mrf.mxu0
  %v1256 = vadd.f32 %v1163, %v1255
  %1257 = vmatmul.bf16.gmra.mxu0 %v359
  %v1258 = vpop.f32.mrf.mxu0
  %v1259 = vadd.f32 %v1166, %v1258
  %v1260 = vpop.f32.mrf.mxu0
  %v1261 = vadd.f32 %v1168, %v1260
  %1262 = vmatmul.bf16.gmra.mxu0 %v367
  %v1263 = vpop.f32.mrf.mxu0
  %v1264 = vadd.f32 %v1171, %v1263
  %v1265 = vpop.f32.mrf.mxu0
  %v1266 = vadd.f32 %v1173, %v1265
  %1267 = vmatmul.bf16.gmra.mxu0 %v375
  %v1268 = vpop.f32.mrf.mxu0
  %v1269 = vadd.f32 %v1176, %v1268
  %v1270 = vpop.f32.mrf.mxu0
  %v1271 = vadd.f32 %v1178, %v1270
  %1272 = vmatmul.bf16.gmra.mxu0 %v383
  %v1273 = vpop.f32.mrf.mxu0
  %v1274 = vadd.f32 %v1181, %v1273
  %v1275 = vpop.f32.mrf.mxu0
  %v1276 = vadd.f32 %v1183, %v1275
  %1277 = vmatmul.bf16.gmra.mxu0 %v391
  %v1278 = vpop.f32.mrf.mxu0
  %v1279 = vadd.f32 %v1186, %v1278
  %v1280 = vpop.f32.mrf.mxu0
  %v1281 = vadd.f32 %v1188, %v1280
  %1282 = vmatmul.bf16.gmra.mxu0 %v399
  %v1283 = vpop.f32.mrf.mxu0
  %v1284 = vadd.f32 %v1191, %v1283
  %v1285 = vpop.f32.mrf.mxu0
  %v1286 = vadd.f32 %v1193, %v1285
  %1287 = vmatmul.bf16.gmra.mxu0 %v407
  %v1288 = vpop.f32.mrf.mxu0
  %v1289 = vadd.f32 %v1196, %v1288
  %v1290 = vpop.f32.mrf.mxu0
  %v1291 = vadd.f32 %v1198, %v1290
  %1292 = vmatmul.bf16.gmra.mxu0 %v415
  %v1293 = vpop.f32.mrf.mxu0
  %v1294 = vadd.f32 %v1201, %v1293
  %v1295 = vpop.f32.mrf.mxu0
  %1296 = vdwg.mxu0
  %1297 = vmatpush.bf16.msra.mxu0 %v868
  %1298 = vmatpush.bf16.msra.mxu0 %v867
  %1299 = vmatpush.bf16.msra.mxu0 %v866
  %1300 = vmatpush.bf16.msra.mxu0 %v865
  %1301 = vmatpush.bf16.msra.mxu0 %v864
  %1302 = vmatpush.bf16.msra.mxu0 %v863
  %1303 = vmatpush.bf16.msra.mxu0 %v862
  %1304 = vmatpush.bf16.msra.mxu0 %v861
  %1305 = vmatmul.bf16.gmra.mxu0 %v288
  %v1306 = vpop.f32.mrf.mxu0
  %v1307 = vadd.f32 %v1214, %v1306
  %v1308 = vpop.f32.mrf.mxu0
  %v1309 = vadd.f32 %v1216, %v1308
  %1310 = vmatmul.bf16.gmra.mxu0 %v296
  %v1311 = vpop.f32.mrf.mxu0
  %v1312 = vadd.f32 %v1219, %v1311
  %v1313 = vpop.f32.mrf.mxu0
  %v1314 = vadd.f32 %v1221, %v1313
  %1315 = vmatmul.bf16.gmra.mxu0 %v304
  %v1316 = vpop.f32.mrf.mxu0
  %v1317 = vadd.f32 %v1224, %v1316
  %v1318 = vpop.f32.mrf.mxu0
  %v1319 = vadd.f32 %v1226, %v1318
  %1320 = vmatmul.bf16.gmra.mxu0 %v312
  %v1321 = vpop.f32.mrf.mxu0
  %v1322 = vadd.f32 %v1229, %v1321
  %v1323 = vpop.f32.mrf.mxu0
  %v1324 = vadd.f32 %v1231, %v1323
  %1325 = vmatmul.bf16.gmra.mxu0 %v320
  %v1326 = vpop.f32.mrf.mxu0
  %v1327 = vadd.f32 %v1234, %v1326
  %v1328 = vpop.f32.mrf.mxu0
  %v1329 = vadd.f32 %v1236, %v1328
  %1330 = vmatmul.bf16.gmra.mxu0 %v328
  %v1331 = vpop.f32.mrf.mxu0
  %v1332 = vadd.f32 %v1239, %v1331
  %v1333 = vpop.f32.mrf.mxu0
  %v1334 = vadd.f32 %v1241, %v1333
  %1335 = vmatmul.bf16.gmra.mxu0 %v336
  %v1336 = vpop.f32.mrf.mxu0
  %v1337 = vadd.f32 %v1244, %v1336
  %v1338 = vpop.f32.mrf.mxu0
  %v1339 = vadd.f32 %v1246, %v1338
  %1340 = vmatmul.bf16.gmra.mxu0 %v344
  %v1341 = vpop.f32.mrf.mxu0
  %v1342 = vadd.f32 %v1249, %v1341
  %v1343 = vpop.f32.mrf.mxu0
  %v1344 = vadd.f32 %v1251, %v1343
  %1345 = vmatmul.bf16.gmra.mxu0 %v352
  %v1346 = vpop.f32.mrf.mxu0
  %v1347 = vadd.f32 %v1254, %v1346
  %v1348 = vpop.f32.mrf.mxu0
  %v1349 = vadd.f32 %v1256, %v1348
  %1350 = vmatmul.bf16.gmra.mxu0 %v360
  %v1351 = vpop.f32.mrf.mxu0
  %v1352 = vadd.f32 %v1259, %v1351
  %v1353 = vpop.f32.mrf.mxu0
  %v1354 = vadd.f32 %v1261, %v1353
  %1355 = vmatmul.bf16.gmra.mxu0 %v368
  %v1356 = vpop.f32.mrf.mxu0
  %v1357 = vadd.f32 %v1264, %v1356
  %v1358 = vpop.f32.mrf.mxu0
  %v1359 = vadd.f32 %v1266, %v1358
  %1360 = vmatmul.bf16.gmra.mxu0 %v376
  %v1361 = vpop.f32.mrf.mxu0
  %v1362 = vadd.f32 %v1269, %v1361
  %v1363 = vpop.f32.mrf.mxu0
  %v1364 = vadd.f32 %v1271, %v1363
  %1365 = vmatmul.bf16.gmra.mxu0 %v384
  %v1366 = vpop.f32.mrf.mxu0
  %v1367 = vadd.f32 %v1274, %v1366
  %v1368 = vpop.f32.mrf.mxu0
  %v1369 = vadd.f32 %v1276, %v1368
  %1370 = vmatmul.bf16.gmra.mxu0 %v392
  %v1371 = vpop.f32.mrf.mxu0
  %v1372 = vadd.f32 %v1279, %v1371
  %v1373 = vpop.f32.mrf.mxu0
  %v1374 = vadd.f32 %v1281, %v1373
  %1375 = vmatmul.bf16.gmra.mxu0 %v400
  %v1376 = vpop.f32.mrf.mxu0
  %v1377 = vadd.f32 %v1284, %v1376
  %v1378 = vpop.f32.mrf.mxu0
  %v1379 = vadd.f32 %v1286, %v1378
  %1380 = vmatmul.bf16.gmra.mxu0 %v408
  %v1381 = vpop.f32.mrf.mxu0
  %v1382 = vadd.f32 %v1289, %v1381
  %v1383 = vpop.f32.mrf.mxu0
  %v1384 = vadd.f32 %v1291, %v1383
  %1385 = vmatmul.bf16.gmra.mxu0 %v416
  %v1386 = vpop.f32.mrf.mxu0
  %v1387 = vadd.f32 %v1294, %v1386
  %v1388 = vpop.f32.mrf.mxu0
  %1389 = vdwg.mxu0
  %1390 = vmatpush.bf16.msra.mxu0 %v876
  %1391 = vmatpush.bf16.msra.mxu0 %v875
  %1392 = vmatpush.bf16.msra.mxu0 %v874
  %1393 = vmatpush.bf16.msra.mxu0 %v873
  %1394 = vmatpush.bf16.msra.mxu0 %v872
  %1395 = vmatpush.bf16.msra.mxu0 %v871
  %1396 = vmatpush.bf16.msra.mxu0 %v870
  %1397 = vmatpush.bf16.msra.mxu0 %v869
  %1398 = vmatmul.bf16.gmra.mxu0 %v289
  %v1399 = vpop.f32.mrf.mxu0
  %v1400 = vadd.f32 %v1307, %v1399
  %v1401 = vpop.f32.mrf.mxu0
  %v1402 = vadd.f32 %v1309, %v1401
  %1403 = vmatmul.bf16.gmra.mxu0 %v297
  %v1404 = vpop.f32.mrf.mxu0
  %v1405 = vadd.f32 %v1312, %v1404
  %v1406 = vpop.f32.mrf.mxu0
  %v1407 = vadd.f32 %v1314, %v1406
  %1408 = vmatmul.bf16.gmra.mxu0 %v305
  %v1409 = vpop.f32.mrf.mxu0
  %v1410 = vadd.f32 %v1317, %v1409
  %v1411 = vpop.f32.mrf.mxu0
  %v1412 = vadd.f32 %v1319, %v1411
  %1413 = vmatmul.bf16.gmra.mxu0 %v313
  %v1414 = vpop.f32.mrf.mxu0
  %v1415 = vadd.f32 %v1322, %v1414
  %v1416 = vpop.f32.mrf.mxu0
  %v1417 = vadd.f32 %v1324, %v1416
  %1418 = vmatmul.bf16.gmra.mxu0 %v321
  %v1419 = vpop.f32.mrf.mxu0
  %v1420 = vadd.f32 %v1327, %v1419
  %v1421 = vpop.f32.mrf.mxu0
  %v1422 = vadd.f32 %v1329, %v1421
  %1423 = vmatmul.bf16.gmra.mxu0 %v329
  %v1424 = vpop.f32.mrf.mxu0
  %v1425 = vadd.f32 %v1332, %v1424
  %v1426 = vpop.f32.mrf.mxu0
  %v1427 = vadd.f32 %v1334, %v1426
  %1428 = vmatmul.bf16.gmra.mxu0 %v337
  %v1429 = vpop.f32.mrf.mxu0
  %v1430 = vadd.f32 %v1337, %v1429
  %v1431 = vpop.f32.mrf.mxu0
  %v1432 = vadd.f32 %v1339, %v1431
  %1433 = vmatmul.bf16.gmra.mxu0 %v345
  %v1434 = vpop.f32.mrf.mxu0
  %v1435 = vadd.f32 %v1342, %v1434
  %v1436 = vpop.f32.mrf.mxu0
  %v1437 = vadd.f32 %v1344, %v1436
  %1438 = vmatmul.bf16.gmra.mxu0 %v353
  %v1439 = vpop.f32.mrf.mxu0
  %v1440 = vadd.f32 %v1347, %v1439
  %v1441 = vpop.f32.mrf.mxu0
  %v1442 = vadd.f32 %v1349, %v1441
  %1443 = vmatmul.bf16.gmra.mxu0 %v361
  %v1444 = vpop.f32.mrf.mxu0
  %v1445 = vadd.f32 %v1352, %v1444
  %v1446 = vpop.f32.mrf.mxu0
  %v1447 = vadd.f32 %v1354, %v1446
  %1448 = vmatmul.bf16.gmra.mxu0 %v369
  %v1449 = vpop.f32.mrf.mxu0
  %v1450 = vadd.f32 %v1357, %v1449
  %v1451 = vpop.f32.mrf.mxu0
  %v1452 = vadd.f32 %v1359, %v1451
  %1453 = vmatmul.bf16.gmra.mxu0 %v377
  %v1454 = vpop.f32.mrf.mxu0
  %v1455 = vadd.f32 %v1362, %v1454
  %v1456 = vpop.f32.mrf.mxu0
  %v1457 = vadd.f32 %v1364, %v1456
  %1458 = vmatmul.bf16.gmra.mxu0 %v385
  %v1459 = vpop.f32.mrf.mxu0
  %v1460 = vadd.f32 %v1367, %v1459
  %v1461 = vpop.f32.mrf.mxu0
  %v1462 = vadd.f32 %v1369, %v1461
  %1463 = vmatmul.bf16.gmra.mxu0 %v393
  %v1464 = vpop.f32.mrf.mxu0
  %v1465 = vadd.f32 %v1372, %v1464
  %v1466 = vpop.f32.mrf.mxu0
  %v1467 = vadd.f32 %v1374, %v1466
  %1468 = vmatmul.bf16.gmra.mxu0 %v401
  %v1469 = vpop.f32.mrf.mxu0
  %v1470 = vadd.f32 %v1377, %v1469
  %v1471 = vpop.f32.mrf.mxu0
  %v1472 = vadd.f32 %v1379, %v1471
  %1473 = vmatmul.bf16.gmra.mxu0 %v409
  %v1474 = vpop.f32.mrf.mxu0
  %v1475 = vadd.f32 %v1382, %v1474
  %v1476 = vpop.f32.mrf.mxu0
  %v1477 = vadd.f32 %v1384, %v1476
  %1478 = vmatmul.bf16.gmra.mxu0 %v417
  %v1479 = vpop.f32.mrf.mxu0
  %v1480 = vadd.f32 %v1387, %v1479
  %v1481 = vpop.f32.mrf.mxu0
  %1482 = vdwg.mxu0
  %1483 = vmatpush.bf16.msra.mxu0 %v884
  %1484 = vmatpush.bf16.msra.mxu0 %v883
  %1485 = vmatpush.bf16.msra.mxu0 %v882
  %1486 = vmatpush.bf16.msra.mxu0 %v881
  %1487 = vmatpush.bf16.msra.mxu0 %v880
  %1488 = vmatpush.bf16.msra.mxu0 %v879
  %1489 = vmatpush.bf16.msra.mxu0 %v878
  %1490 = vmatpush.bf16.msra.mxu0 %v877
  %1491 = vmatmul.bf16.gmra.mxu0 %v290
  %v1492 = vpop.f32.mrf.mxu0
  %v1493 = vadd.f32 %v1400, %v1492
  %v1494 = vpop.f32.mrf.mxu0
  %v1495 = vadd.f32 %v1402, %v1494
  %1496 = vmatmul.bf16.gmra.mxu0 %v298
  %v1497 = vpop.f32.mrf.mxu0
  %v1498 = vadd.f32 %v1405, %v1497
  %v1499 = vpop.f32.mrf.mxu0
  %v1500 = vadd.f32 %v1407, %v1499
  %1501 = vmatmul.bf16.gmra.mxu0 %v306
  %v1502 = vpop.f32.mrf.mxu0
  %v1503 = vadd.f32 %v1410, %v1502
  %v1504 = vpop.f32.mrf.mxu0
  %v1505 = vadd.f32 %v1412, %v1504
  %1506 = vmatmul.bf16.gmra.mxu0 %v314
  %v1507 = vpop.f32.mrf.mxu0
  %v1508 = vadd.f32 %v1415, %v1507
  %v1509 = vpop.f32.mrf.mxu0
  %v1510 = vadd.f32 %v1417, %v1509
  %1511 = vmatmul.bf16.gmra.mxu0 %v322
  %v1512 = vpop.f32.mrf.mxu0
  %v1513 = vadd.f32 %v1420, %v1512
  %v1514 = vpop.f32.mrf.mxu0
  %v1515 = vadd.f32 %v1422, %v1514
  %1516 = vmatmul.bf16.gmra.mxu0 %v330
  %v1517 = vpop.f32.mrf.mxu0
  %v1518 = vadd.f32 %v1425, %v1517
  %v1519 = vpop.f32.mrf.mxu0
  %v1520 = vadd.f32 %v1427, %v1519
  %1521 = vmatmul.bf16.gmra.mxu0 %v338
  %v1522 = vpop.f32.mrf.mxu0
  %v1523 = vadd.f32 %v1430, %v1522
  %v1524 = vpop.f32.mrf.mxu0
  %v1525 = vadd.f32 %v1432, %v1524
  %1526 = vmatmul.bf16.gmra.mxu0 %v346
  %v1527 = vpop.f32.mrf.mxu0
  %v1528 = vadd.f32 %v1435, %v1527
  %v1529 = vpop.f32.mrf.mxu0
  %v1530 = vadd.f32 %v1437, %v1529
  %1531 = vmatmul.bf16.gmra.mxu0 %v354
  %v1532 = vpop.f32.mrf.mxu0
  %v1533 = vadd.f32 %v1440, %v1532
  %v1534 = vpop.f32.mrf.mxu0
  %v1535 = vadd.f32 %v1442, %v1534
  %1536 = vmatmul.bf16.gmra.mxu0 %v362
  %v1537 = vpop.f32.mrf.mxu0
  %v1538 = vadd.f32 %v1445, %v1537
  %v1539 = vpop.f32.mrf.mxu0
  %v1540 = vadd.f32 %v1447, %v1539
  %1541 = vmatmul.bf16.gmra.mxu0 %v370
  %v1542 = vpop.f32.mrf.mxu0
  %v1543 = vadd.f32 %v1450, %v1542
  %v1544 = vpop.f32.mrf.mxu0
  %v1545 = vadd.f32 %v1452, %v1544
  %1546 = vmatmul.bf16.gmra.mxu0 %v378
  %v1547 = vpop.f32.mrf.mxu0
  %v1548 = vadd.f32 %v1455, %v1547
  %v1549 = vpop.f32.mrf.mxu0
  %v1550 = vadd.f32 %v1457, %v1549
  %1551 = vmatmul.bf16.gmra.mxu0 %v386
  %v1552 = vpop.f32.mrf.mxu0
  %v1553 = vadd.f32 %v1460, %v1552
  %v1554 = vpop.f32.mrf.mxu0
  %v1555 = vadd.f32 %v1462, %v1554
  %1556 = vmatmul.bf16.gmra.mxu0 %v394
  %v1557 = vpop.f32.mrf.mxu0
  %v1558 = vadd.f32 %v1465, %v1557
  %v1559 = vpop.f32.mrf.mxu0
  %v1560 = vadd.f32 %v1467, %v1559
  %1561 = vmatmul.bf16.gmra.mxu0 %v402
  %v1562 = vpop.f32.mrf.mxu0
  %v1563 = vadd.f32 %v1470, %v1562
  %v1564 = vpop.f32.mrf.mxu0
  %v1565 = vadd.f32 %v1472, %v1564
  %1566 = vmatmul.bf16.gmra.mxu0 %v410
  %v1567 = vpop.f32.mrf.mxu0
  %v1568 = vadd.f32 %v1475, %v1567
  %v1569 = vpop.f32.mrf.mxu0
  %v1570 = vadd.f32 %v1477, %v1569
  %1571 = vmatmul.bf16.gmra.mxu0 %v418
  %v1572 = vpop.f32.mrf.mxu0
  %v1573 = vadd.f32 %v1480, %v1572
  %v1574 = vpop.f32.mrf.mxu0
  %1575 = vdwg.mxu0
  %1576 = vmatpush.bf16.msra.mxu0 %v892
  %1577 = vmatpush.bf16.msra.mxu0 %v891
  %1578 = vmatpush.bf16.msra.mxu0 %v890
  %1579 = vmatpush.bf16.msra.mxu0 %v889
  %1580 = vmatpush.bf16.msra.mxu0 %v888
  %1581 = vmatpush.bf16.msra.mxu0 %v887
  %1582 = vmatpush.bf16.msra.mxu0 %v886
  %1583 = vmatpush.bf16.msra.mxu0 %v885
  %1584 = vmatmul.bf16.gmra.mxu0 %v291
  %v1585 = vpop.f32.mrf.mxu0
  %v1586 = vadd.f32 %v1493, %v1585
  %v1587 = vpop.f32.mrf.mxu0
  %v1588 = vadd.f32 %v1495, %v1587
  %1589 = vmatmul.bf16.gmra.mxu0 %v299
  %v1590 = vpop.f32.mrf.mxu0
  %v1591 = vadd.f32 %v1498, %v1590
  %v1592 = vpop.f32.mrf.mxu0
  %v1593 = vadd.f32 %v1500, %v1592
  %1594 = vmatmul.bf16.gmra.mxu0 %v307
  %v1595 = vpop.f32.mrf.mxu0
  %v1596 = vadd.f32 %v1503, %v1595
  %v1597 = vpop.f32.mrf.mxu0
  %v1598 = vadd.f32 %v1505, %v1597
  %1599 = vmatmul.bf16.gmra.mxu0 %v315
  %v1600 = vpop.f32.mrf.mxu0
  %v1601 = vadd.f32 %v1508, %v1600
  %v1602 = vpop.f32.mrf.mxu0
  %v1603 = vadd.f32 %v1510, %v1602
  %1604 = vmatmul.bf16.gmra.mxu0 %v323
  %v1605 = vpop.f32.mrf.mxu0
  %v1606 = vadd.f32 %v1513, %v1605
  %v1607 = vpop.f32.mrf.mxu0
  %v1608 = vadd.f32 %v1515, %v1607
  %1609 = vmatmul.bf16.gmra.mxu0 %v331
  %v1610 = vpop.f32.mrf.mxu0
  %v1611 = vadd.f32 %v1518, %v1610
  %v1612 = vpop.f32.mrf.mxu0
  %v1613 = vadd.f32 %v1520, %v1612
  %1614 = vmatmul.bf16.gmra.mxu0 %v339
  %v1615 = vpop.f32.mrf.mxu0
  %v1616 = vadd.f32 %v1523, %v1615
  %v1617 = vpop.f32.mrf.mxu0
  %v1618 = vadd.f32 %v1525, %v1617
  %1619 = vmatmul.bf16.gmra.mxu0 %v347
  %v1620 = vpop.f32.mrf.mxu0
  %v1621 = vadd.f32 %v1528, %v1620
  %v1622 = vpop.f32.mrf.mxu0
  %v1623 = vadd.f32 %v1530, %v1622
  %1624 = vmatmul.bf16.gmra.mxu0 %v355
  %v1625 = vpop.f32.mrf.mxu0
  %v1626 = vadd.f32 %v1533, %v1625
  %v1627 = vpop.f32.mrf.mxu0
  %v1628 = vadd.f32 %v1535, %v1627
  %1629 = vmatmul.bf16.gmra.mxu0 %v363
  %v1630 = vpop.f32.mrf.mxu0
  %v1631 = vadd.f32 %v1538, %v1630
  %v1632 = vpop.f32.mrf.mxu0
  %v1633 = vadd.f32 %v1540, %v1632
  %1634 = vmatmul.bf16.gmra.mxu0 %v371
  %v1635 = vpop.f32.mrf.mxu0
  %v1636 = vadd.f32 %v1543, %v1635
  %v1637 = vpop.f32.mrf.mxu0
  %v1638 = vadd.f32 %v1545, %v1637
  %1639 = vmatmul.bf16.gmra.mxu0 %v379
  %v1640 = vpop.f32.mrf.mxu0
  %v1641 = vadd.f32 %v1548, %v1640
  %v1642 = vpop.f32.mrf.mxu0
  %v1643 = vadd.f32 %v1550, %v1642
  %1644 = vmatmul.bf16.gmra.mxu0 %v387
  %v1645 = vpop.f32.mrf.mxu0
  %v1646 = vadd.f32 %v1553, %v1645
  %v1647 = vpop.f32.mrf.mxu0
  %v1648 = vadd.f32 %v1555, %v1647
  %1649 = vmatmul.bf16.gmra.mxu0 %v395
  %v1650 = vpop.f32.mrf.mxu0
  %v1651 = vadd.f32 %v1558, %v1650
  %v1652 = vpop.f32.mrf.mxu0
  %v1653 = vadd.f32 %v1560, %v1652
  %1654 = vmatmul.bf16.gmra.mxu0 %v403
  %v1655 = vpop.f32.mrf.mxu0
  %v1656 = vadd.f32 %v1563, %v1655
  %v1657 = vpop.f32.mrf.mxu0
  %v1658 = vadd.f32 %v1565, %v1657
  %1659 = vmatmul.bf16.gmra.mxu0 %v411
  %v1660 = vpop.f32.mrf.mxu0
  %v1661 = vadd.f32 %v1568, %v1660
  %v1662 = vpop.f32.mrf.mxu0
  %v1663 = vadd.f32 %v1570, %v1662
  %1664 = vmatmul.bf16.gmra.mxu0 %v419
  %v1665 = vpop.f32.mrf.mxu0
  %v1666 = vadd.f32 %v1573, %v1665
  %v1667 = vpop.f32.mrf.mxu0
  %1668 = vdwg.mxu0
  %1669 = vmatpush.bf16.msra.mxu0 0
  %1670 = vmatpush.bf16.msra.mxu0 %v1016
  %1671 = vmatpush.bf16.msra.mxu0 %v898
  %1672 = vmatpush.bf16.msra.mxu0 %v897
  %1673 = vmatpush.bf16.msra.mxu0 %v896
  %1674 = vmatpush.bf16.msra.mxu0 %v895
  %1675 = vmatpush.bf16.msra.mxu0 %v894
  %1676 = vmatpush.bf16.msra.mxu0 %v893
  %1677 = vmatmul.bf16.gmra.mxu0 %v964
  %v1678 = vpop.f32.mrf.mxu0
  %v1679 = vadd.f32 %v1586, %v1678
  %v1680 = vpop.f32.mrf.mxu0
  %v1681 = vadd.f32 %v1588, %v1680
  %1682 = vmatmul.bf16.gmra.mxu0 %v967
  %v1683 = vpop.f32.mrf.mxu0
  %v1684 = vadd.f32 %v1591, %v1683
  %v1685 = vpop.f32.mrf.mxu0
  %v1686 = vadd.f32 %v1593, %v1685
  %1687 = vmatmul.bf16.gmra.mxu0 %v970
  %v1688 = vpop.f32.mrf.mxu0
  %v1689 = vadd.f32 %v1596, %v1688
  %v1690 = vpop.f32.mrf.mxu0
  %v1691 = vadd.f32 %v1598, %v1690
  %1692 = vmatmul.bf16.gmra.mxu0 %v973
  %v1693 = vpop.f32.mrf.mxu0
  %v1694 = vadd.f32 %v1601, %v1693
  %v1695 = vpop.f32.mrf.mxu0
  %v1696 = vadd.f32 %v1603, %v1695
  %1697 = vmatmul.bf16.gmra.mxu0 %v976
  %v1698 = vpop.f32.mrf.mxu0
  %v1699 = vadd.f32 %v1606, %v1698
  %v1700 = vpop.f32.mrf.mxu0
  %v1701 = vadd.f32 %v1608, %v1700
  %1702 = vmatmul.bf16.gmra.mxu0 %v979
  %v1703 = vpop.f32.mrf.mxu0
  %v1704 = vadd.f32 %v1611, %v1703
  %v1705 = vpop.f32.mrf.mxu0
  %v1706 = vadd.f32 %v1613, %v1705
  %1707 = vmatmul.bf16.gmra.mxu0 %v982
  %v1708 = vpop.f32.mrf.mxu0
  %v1709 = vadd.f32 %v1616, %v1708
  %v1710 = vpop.f32.mrf.mxu0
  %v1711 = vadd.f32 %v1618, %v1710
  %1712 = vmatmul.bf16.gmra.mxu0 %v985
  %v1713 = vpop.f32.mrf.mxu0
  %v1714 = vadd.f32 %v1621, %v1713
  %v1715 = vpop.f32.mrf.mxu0
  %v1716 = vadd.f32 %v1623, %v1715
  %1717 = vmatmul.bf16.gmra.mxu0 %v988
  %v1718 = vpop.f32.mrf.mxu0
  %v1719 = vadd.f32 %v1626, %v1718
  %v1720 = vpop.f32.mrf.mxu0
  %v1721 = vadd.f32 %v1628, %v1720
  %1722 = vmatmul.bf16.gmra.mxu0 %v991
  %v1723 = vpop.f32.mrf.mxu0
  %v1724 = vadd.f32 %v1631, %v1723
  %v1725 = vpop.f32.mrf.mxu0
  %v1726 = vadd.f32 %v1633, %v1725
  %1727 = vmatmul.bf16.gmra.mxu0 %v994
  %v1728 = vpop.f32.mrf.mxu0
  %v1729 = vadd.f32 %v1636, %v1728
  %v1730 = vpop.f32.mrf.mxu0
  %v1731 = vadd.f32 %v1638, %v1730
  %1732 = vmatmul.bf16.gmra.mxu0 %v997
  %v1733 = vpop.f32.mrf.mxu0
  %v1734 = vadd.f32 %v1641, %v1733
  %v1735 = vpop.f32.mrf.mxu0
  %v1736 = vadd.f32 %v1643, %v1735
  %1737 = vmatmul.bf16.gmra.mxu0 %v1000
  %v1738 = vpop.f32.mrf.mxu0
  %v1739 = vadd.f32 %v1646, %v1738
  %v1740 = vpop.f32.mrf.mxu0
  %v1741 = vadd.f32 %v1648, %v1740
  %1742 = vmatmul.bf16.gmra.mxu0 %v1003
  %v1743 = vpop.f32.mrf.mxu0
  %v1744 = vadd.f32 %v1651, %v1743
  %v1745 = vpop.f32.mrf.mxu0
  %v1746 = vadd.f32 %v1653, %v1745
  %1747 = vmatmul.bf16.gmra.mxu0 %v1006
  %v1748 = vpop.f32.mrf.mxu0
  %v1749 = vadd.f32 %v1656, %v1748
  %v1750 = vpop.f32.mrf.mxu0
  %v1751 = vadd.f32 %v1658, %v1750
  %1752 = vmatmul.bf16.gmra.mxu0 %v1009
  %v1753 = vpop.f32.mrf.mxu0
  %v1754 = vadd.f32 %v1661, %v1753
  %v1755 = vpop.f32.mrf.mxu0
  %v1756 = vadd.f32 %v1663, %v1755
  %1757 = vmatmul.bf16.gmra.mxu0 %v1012
  %v1758 = vpop.f32.mrf.mxu0
  %v1759 = vadd.f32 %v1666, %v1758
  %v1760 = vpop.f32.mrf.mxu0
  %1761 = vdwg.mxu0
  %v1762 = vmax.f32 %v1679, 0.0
  %v1763 = vmax.f32 %v1681, 0.0
  %v1764 = vmax.f32 %v1684, 0.0
  %v1765 = vmax.f32 %v1686, 0.0
  %v1766 = vmax.f32 %v1689, 0.0
  %v1767 = vmax.f32 %v1691, 0.0
  %v1768 = vmax.f32 %v1694, 0.0
  %v1769 = vmax.f32 %v1696, 0.0
  %v1770 = vmax.f32 %v1699, 0.0
  %v1771 = vmax.f32 %v1701, 0.0
  %v1772 = vmax.f32 %v1704, 0.0
  %v1773 = vmax.f32 %v1706, 0.0
  %v1774 = vmax.f32 %v1709, 0.0
  %v1775 = vmax.f32 %v1711, 0.0
  %v1776 = vmax.f32 %v1714, 0.0
  %v1777 = vmax.f32 %v1716, 0.0
  %v1778 = vmax.f32 %v1719, 0.0
  %v1779 = vmax.f32 %v1721, 0.0
  %v1780 = vmax.f32 %v1724, 0.0
  %v1781 = vmax.f32 %v1726, 0.0
  %v1782 = vmax.f32 %v1729, 0.0
  %v1783 = vmax.f32 %v1731, 0.0
  %v1784 = vmax.f32 %v1734, 0.0
  %v1785 = vmax.f32 %v1736, 0.0
  %v1786 = vmax.f32 %v1739, 0.0
  %v1787 = vmax.f32 %v1741, 0.0
  %v1788 = vmax.f32 %v1744, 0.0
  %v1789 = vmax.f32 %v1746, 0.0
  %v1790 = vmax.f32 %v1749, 0.0
  %v1791 = vmax.f32 %v1751, 0.0
  %v1792 = vmax.f32 %v1754, 0.0
  %v1793 = vmax.f32 %v1756, 0.0
  %v1794 = vmax.f32 %v1759, 0.0
  %v1795 = vld [vmem:[%s5] sm:$0xff]
  %v1796 = vld [vmem:[%s5 + $0x8] sm:$0xff]
  %v1797 = vld [vmem:[%s5 + $0x10] sm:$0xff]
  %v1798 = vld [vmem:[%s5 + $0x18] sm:$0xff]
  %v1799 = vld [vmem:[%s5 + $0x20] sm:$0xff]
  %v1800 = vld [vmem:[%s5 + $0x28] sm:$0xff]
  %v1801 = vld [vmem:[%s5 + $0x30] sm:$0xff]
  %v1802 = vld [vmem:[%s5 + $0x38] sm:$0xff]
  %v1803 = vld [vmem:[%s5 + $0x40] sm:$0xff]
  %v1804 = vld [vmem:[%s5 + $0x48] sm:$0xff]
  %v1805 = vld [vmem:[%s5 + $0x50] sm:$0xff]
  %v1806 = vld [vmem:[%s5 + $0x58] sm:$0xff]
  %v1807 = vld [vmem:[%s5 + $0x60] sm:$0xff]
  %v1808 = vld [vmem:[%s5 + $0x68] sm:$0xff]
  %v1809 = vld [vmem:[%s5 + $0x70] sm:$0xff]
  %v1810 = vld [vmem:[%s5 + $0x78] sm:$0xff]
  %v1811 = vld [vmem:[%s5 + $0x80] sm:$0xff]
  %v1812 = vld [vmem:[%s5 + $0x88] sm:$0xff]
  %v1813 = vld [vmem:[%s5 + $0x90] sm:$0xff]
  %v1814 = vld [vmem:[%s5 + $0x98] sm:$0xff]
  %v1815 = vld [vmem:[%s5 + $0xa0] sm:$0xff]
  %v1816 = vld [vmem:[%s5 + $0xa8] sm:$0xff]
  %v1817 = vld [vmem:[%s5 + $0xb0] sm:$0xff]
  %v1818 = vld [vmem:[%s5 + $0xb8] sm:$0xff]
  %v1819 = vld [vmem:[%s5 + $0xc0] sm:$0xff]
  %v1820 = vld [vmem:[%s5 + $0xc8] sm:$0xff]
  %v1821 = vld [vmem:[%s5 + $0xd0] sm:$0xff]
  %v1822 = vld [vmem:[%s5 + $0xd8] sm:$0xff]
  %v1823 = vld [vmem:[%s5 + $0xe0] sm:$0xff]
  %v1824 = vld [vmem:[%s5 + $0xe8] sm:$0xff]
  %v1825 = vld [vmem:[%s5 + $0xf0] sm:$0xff]
  %v1826 = vld [vmem:[%s5 + $0xf8] sm:$0xff]
  %v1827 = vld [vmem:[%s5 + $0x100] sm:$0xff]
  %v1828 = vpack.c.bf16 %v1763, %v1762
  %v1829 = vpack.c.bf16 %v1765, %v1764
  %v1830 = vpack.c.bf16 %v1767, %v1766
  %v1831 = vpack.c.bf16 %v1769, %v1768
  %v1832 = vpack.c.bf16 %v1771, %v1770
  %v1833 = vpack.c.bf16 %v1773, %v1772
  %v1834 = vpack.c.bf16 %v1775, %v1774
  %v1835 = vpack.c.bf16 %v1777, %v1776
  %v1836 = vpack.c.bf16 %v1779, %v1778
  %v1837 = vpack.c.bf16 %v1781, %v1780
  %v1838 = vpack.c.bf16 %v1783, %v1782
  %v1839 = vpack.c.bf16 %v1785, %v1784
  %v1840 = vpack.c.bf16 %v1787, %v1786
  %v1841 = vpack.c.bf16 %v1789, %v1788
  %v1842 = vpack.c.bf16 %v1791, %v1790
  %v1843 = vpack.c.bf16 %v1793, %v1792
  %v1844 = vpack.c.bf16 %v1794, %v1794
  %v1845 = vld [vmem:[%s3] sm:$0xf]
  %v1846 = vld [vmem:[%s3 + $0x4] sm:$0xf]
  %v1847 = vld [vmem:[%s3 + $0x8] sm:$0xf]
  %v1848 = vld [vmem:[%s3 + $0xc] sm:$0xf]
  %v1849 = vld [vmem:[%s3 + $0x10] sm:$0xf]
  %v1850 = vld [vmem:[%s3 + $0x14] sm:$0xf]
  %v1851 = vld [vmem:[%s3 + $0x18] sm:$0xf]
  %v1852 = vld [vmem:[%s3 + $0x1c] sm:$0xf]
  %v1853 = vld [vmem:[%s3 + $0x20] sm:$0xf]
  %v1854 = vld [vmem:[%s3 + $0x24] sm:$0xf]
  %v1855 = vld [vmem:[%s3 + $0x28] sm:$0xf]
  %v1856 = vld [vmem:[%s3 + $0x2c] sm:$0xf]
  %v1857 = vld [vmem:[%s3 + $0x30] sm:$0xf]
  %v1858 = vld [vmem:[%s3 + $0x34] sm:$0xf]
  %v1859 = vld [vmem:[%s3 + $0x38] sm:$0xf]
  %v1860 = vld [vmem:[%s3 + $0x3c] sm:$0xf]
  %v1877 = vunpack.c.l.b16 %v1845
  %v1878 = vunpack.c.l.b16 %v1846
  %v1879 = vunpack.c.l.b16 %v1847
  %v1880 = vunpack.c.l.b16 %v1848
  %v1881 = vunpack.c.l.b16 %v1849
  %v1882 = vunpack.c.l.b16 %v1850
  %v1883 = vunpack.c.l.b16 %v1851
  %v1884 = vunpack.c.l.b16 %v1852
  %v1885 = vunpack.c.l.b16 %v1853
  %v1886 = vunpack.c.l.b16 %v1854
  %v1887 = vunpack.c.l.b16 %v1855
  %v1888 = vunpack.c.l.b16 %v1856
  %v1889 = vunpack.c.l.b16 %v1857
  %v1890 = vunpack.c.l.b16 %v1858
  %v1891 = vunpack.c.l.b16 %v1859
  %v1892 = vunpack.c.l.b16 %v1860
  %v1893 = vpack.c.b16 %v1878, %v1877
  %v1894 = vpack.c.b16 %v1880, %v1879
  %v1895 = vpack.c.b16 %v1882, %v1881
  %v1896 = vpack.c.b16 %v1884, %v1883
  %v1897 = vpack.c.b16 %v1886, %v1885
  %v1898 = vpack.c.b16 %v1888, %v1887
  %v1899 = vpack.c.b16 %v1890, %v1889
  %v1900 = vpack.c.b16 %v1892, %v1891
  %1909 = vmatpush.bf16.msra.mxu0 %v1900
  %1910 = vmatpush.bf16.msra.mxu0 %v1899
  %1911 = vmatpush.bf16.msra.mxu0 %v1898
  %1912 = vmatpush.bf16.msra.mxu0 %v1897
  %1913 = vmatpush.bf16.msra.mxu0 %v1896
  %1914 = vmatpush.bf16.msra.mxu0 %v1895
  %1915 = vmatpush.bf16.msra.mxu0 %v1894
  %1916 = vmatpush.bf16.msra.mxu0 %v1893
  %1917 = vmatmul.bf16.gmra.mxu0 %v1828
  %v1918 = vpop.f32.mrf.mxu0
  %v1919 = vadd.f32 0.0, %v1918
  %v1920 = vpop.f32.mrf.mxu0
  %v1921 = vadd.f32 0.0, %v1920
  %1922 = vmatmul.bf16.gmra.mxu0 %v1829
  %v1923 = vpop.f32.mrf.mxu0
  %v1924 = vadd.f32 0.0, %v1923
  %v1925 = vpop.f32.mrf.mxu0
  %v1926 = vadd.f32 0.0, %v1925
  %1927 = vmatmul.bf16.gmra.mxu0 %v1830
  %v1928 = vpop.f32.mrf.mxu0
  %v1929 = vadd.f32 0.0, %v1928
  %v1930 = vpop.f32.mrf.mxu0
  %v1931 = vadd.f32 0.0, %v1930
  %1932 = vmatmul.bf16.gmra.mxu0 %v1831
  %v1933 = vpop.f32.mrf.mxu0
  %v1934 = vadd.f32 0.0, %v1933
  %v1935 = vpop.f32.mrf.mxu0
  %v1936 = vadd.f32 0.0, %v1935
  %1937 = vmatmul.bf16.gmra.mxu0 %v1832
  %v1938 = vpop.f32.mrf.mxu0
  %v1939 = vadd.f32 0.0, %v1938
  %v1940 = vpop.f32.mrf.mxu0
  %v1941 = vadd.f32 0.0, %v1940
  %1942 = vmatmul.bf16.gmra.mxu0 %v1833
  %v1943 = vpop.f32.mrf.mxu0
  %v1944 = vadd.f32 0.0, %v1943
  %v1945 = vpop.f32.mrf.mxu0
  %v1946 = vadd.f32 0.0, %v1945
  %1947 = vmatmul.bf16.gmra.mxu0 %v1834
  %v1948 = vpop.f32.mrf.mxu0
  %v1949 = vadd.f32 0.0, %v1948
  %v1950 = vpop.f32.mrf.mxu0
  %v1951 = vadd.f32 0.0, %v1950
  %1952 = vmatmul.bf16.gmra.mxu0 %v1835
  %v1953 = vpop.f32.mrf.mxu0
  %v1954 = vadd.f32 0.0, %v1953
  %v1955 = vpop.f32.mrf.mxu0
  %v1956 = vadd.f32 0.0, %v1955
  %1957 = vmatmul.bf16.gmra.mxu0 %v1836
  %v1958 = vpop.f32.mrf.mxu0
  %v1959 = vadd.f32 0.0, %v1958
  %v1960 = vpop.f32.mrf.mxu0
  %v1961 = vadd.f32 0.0, %v1960
  %1962 = vmatmul.bf16.gmra.mxu0 %v1837
  %v1963 = vpop.f32.mrf.mxu0
  %v1964 = vadd.f32 0.0, %v1963
  %v1965 = vpop.f32.mrf.mxu0
  %v1966 = vadd.f32 0.0, %v1965
  %1967 = vmatmul.bf16.gmra.mxu0 %v1838
  %v1968 = vpop.f32.mrf.mxu0
  %v1969 = vadd.f32 0.0, %v1968
  %v1970 = vpop.f32.mrf.mxu0
  %v1971 = vadd.f32 0.0, %v1970
  %1972 = vmatmul.bf16.gmra.mxu0 %v1839
  %v1973 = vpop.f32.mrf.mxu0
  %v1974 = vadd.f32 0.0, %v1973
  %v1975 = vpop.f32.mrf.mxu0
  %v1976 = vadd.f32 0.0, %v1975
  %1977 = vmatmul.bf16.gmra.mxu0 %v1840
  %v1978 = vpop.f32.mrf.mxu0
  %v1979 = vadd.f32 0.0, %v1978
  %v1980 = vpop.f32.mrf.mxu0
  %v1981 = vadd.f32 0.0, %v1980
  %1982 = vmatmul.bf16.gmra.mxu0 %v1841
  %v1983 = vpop.f32.mrf.mxu0
  %v1984 = vadd.f32 0.0, %v1983
  %v1985 = vpop.f32.mrf.mxu0
  %v1986 = vadd.f32 0.0, %v1985
  %1987 = vmatmul.bf16.gmra.mxu0 %v1842
  %v1988 = vpop.f32.mrf.mxu0
  %v1989 = vadd.f32 0.0, %v1988
  %v1990 = vpop.f32.mrf.mxu0
  %v1991 = vadd.f32 0.0, %v1990
  %1992 = vmatmul.bf16.gmra.mxu0 %v1843
  %v1993 = vpop.f32.mrf.mxu0
  %v1994 = vadd.f32 0.0, %v1993
  %v1995 = vpop.f32.mrf.mxu0
  %v1996 = vadd.f32 0.0, %v1995
  %1997 = vmatmul.bf16.gmra.mxu0 %v1844
  %v1998 = vpop.f32.mrf.mxu0
  %v1999 = vadd.f32 0.0, %v1998
  %v2000 = vpop.f32.mrf.mxu0
  %2001 = vdwg.mxu0
  %v2002 = vadd.f32 %v1795, %v1919
  %v2003 = vadd.f32 %v1796, %v1921
  %v2004 = vadd.f32 %v1797, %v1924
  %v2005 = vadd.f32 %v1798, %v1926
  %v2006 = vadd.f32 %v1799, %v1929
  %v2007 = vadd.f32 %v1800, %v1931
  %v2008 = vadd.f32 %v1801, %v1934
  %v2009 = vadd.f32 %v1802, %v1936
  %v2010 = vadd.f32 %v1803, %v1939
  %v2011 = vadd.f32 %v1804, %v1941
  %v2012 = vadd.f32 %v1805, %v1944
  %v2013 = vadd.f32 %v1806, %v1946
  %v2014 = vadd.f32 %v1807, %v1949
  %v2015 = vadd.f32 %v1808, %v1951
  %v2016 = vadd.f32 %v1809, %v1954
  %v2017 = vadd.f32 %v1810, %v1956
  %v2018 = vadd.f32 %v1811, %v1959
  %v2019 = vadd.f32 %v1812, %v1961
  %v2020 = vadd.f32 %v1813, %v1964
  %v2021 = vadd.f32 %v1814, %v1966
  %v2022 = vadd.f32 %v1815, %v1969
  %v2023 = vadd.f32 %v1816, %v1971
  %v2024 = vadd.f32 %v1817, %v1974
  %v2025 = vadd.f32 %v1818, %v1976
  %v2026 = vadd.f32 %v1819, %v1979
  %v2027 = vadd.f32 %v1820, %v1981
  %v2028 = vadd.f32 %v1821, %v1984
  %v2029 = vadd.f32 %v1822, %v1986
  %v2030 = vadd.f32 %v1823, %v1989
  %v2031 = vadd.f32 %v1824, %v1991
  %v2032 = vadd.f32 %v1825, %v1994
  %v2033 = vadd.f32 %v1826, %v1996
  %v2034 = vadd.f32 %v1827, %v1999
  %2035 = vst [vmem:[%s5] sm:$0xff] %v2002
  %2036 = vst [vmem:[%s5 + $0x8] sm:$0xff] %v2003
  %2037 = vst [vmem:[%s5 + $0x10] sm:$0xff] %v2004
  %2038 = vst [vmem:[%s5 + $0x18] sm:$0xff] %v2005
  %2039 = vst [vmem:[%s5 + $0x20] sm:$0xff] %v2006
  %2040 = vst [vmem:[%s5 + $0x28] sm:$0xff] %v2007
  %2041 = vst [vmem:[%s5 + $0x30] sm:$0xff] %v2008
  %2042 = vst [vmem:[%s5 + $0x38] sm:$0xff] %v2009
  %2043 = vst [vmem:[%s5 + $0x40] sm:$0xff] %v2010
  %2044 = vst [vmem:[%s5 + $0x48] sm:$0xff] %v2011
  %2045 = vst [vmem:[%s5 + $0x50] sm:$0xff] %v2012
  %2046 = vst [vmem:[%s5 + $0x58] sm:$0xff] %v2013
  %2047 = vst [vmem:[%s5 + $0x60] sm:$0xff] %v2014
  %2048 = vst [vmem:[%s5 + $0x68] sm:$0xff] %v2015
  %2049 = vst [vmem:[%s5 + $0x70] sm:$0xff] %v2016
  %2050 = vst [vmem:[%s5 + $0x78] sm:$0xff] %v2017
  %2051 = vst [vmem:[%s5 + $0x80] sm:$0xff] %v2018
  %2052 = vst [vmem:[%s5 + $0x88] sm:$0xff] %v2019
  %2053 = vst [vmem:[%s5 + $0x90] sm:$0xff] %v2020
  %2054 = vst [vmem:[%s5 + $0x98] sm:$0xff] %v2021
  %2055 = vst [vmem:[%s5 + $0xa0] sm:$0xff] %v2022
  %2056 = vst [vmem:[%s5 + $0xa8] sm:$0xff] %v2023
  %2057 = vst [vmem:[%s5 + $0xb0] sm:$0xff] %v2024
  %2058 = vst [vmem:[%s5 + $0xb8] sm:$0xff] %v2025
  %2059 = vst [vmem:[%s5 + $0xc0] sm:$0xff] %v2026
  %2060 = vst [vmem:[%s5 + $0xc8] sm:$0xff] %v2027
  %2061 = vst [vmem:[%s5 + $0xd0] sm:$0xff] %v2028
  %2062 = vst [vmem:[%s5 + $0xd8] sm:$0xff] %v2029
  %2063 = vst [vmem:[%s5 + $0xe0] sm:$0xff] %v2030
  %2064 = vst [vmem:[%s5 + $0xe8] sm:$0xff] %v2031
  %2065 = vst [vmem:[%s5 + $0xf0] sm:$0xff] %v2032
  %2066 = vst [vmem:[%s5 + $0xf8] sm:$0xff] %v2033
  %2067 = vst [vmem:[%s5 + $0x100] sm:$0xff] %v2034
  %v2068 = vld [vmem:[%s1 + $0x4] sm:$0xf]
  %v2069 = vld [vmem:[%s1 + $0x14] sm:$0xf]
  %v2070 = vld [vmem:[%s1 + $0x24] sm:$0xf]
  %v2071 = vld [vmem:[%s1 + $0x34] sm:$0xf]
  %v2072 = vld [vmem:[%s1 + $0x44] sm:$0xf]
  %v2073 = vld [vmem:[%s1 + $0x54] sm:$0xf]
  %v2074 = vld [vmem:[%s1 + $0x64] sm:$0xf]
  %v2075 = vld [vmem:[%s1 + $0x74] sm:$0xf]
  %v2076 = vld [vmem:[%s1 + $0x84] sm:$0xf]
  %v2077 = vld [vmem:[%s1 + $0x94] sm:$0xf]
  %v2078 = vld [vmem:[%s1 + $0xa4] sm:$0xf]
  %v2079 = vld [vmem:[%s1 + $0xb4] sm:$0xf]
  %v2080 = vld [vmem:[%s1 + $0xc4] sm:$0xf]
  %v2081 = vld [vmem:[%s1 + $0xd4] sm:$0xf]
  %v2082 = vld [vmem:[%s1 + $0xe4] sm:$0xf]
  %v2083 = vld [vmem:[%s1 + $0xf4] sm:$0xf]
  %v2084 = vld [vmem:[%s1 + $0x104] sm:$0xf]
  %v2085 = vld [vmem:[%s1 + $0x114] sm:$0xf]
  %v2086 = vld [vmem:[%s1 + $0x124] sm:$0xf]
  %v2087 = vld [vmem:[%s1 + $0x134] sm:$0xf]
  %v2088 = vld [vmem:[%s1 + $0x144] sm:$0xf]
  %v2089 = vld [vmem:[%s1 + $0x154] sm:$0xf]
  %v2090 = vld [vmem:[%s1 + $0x164] sm:$0xf]
  %v2091 = vld [vmem:[%s1 + $0x174] sm:$0xf]
  %v2092 = vld [vmem:[%s1 + $0x184] sm:$0xf]
  %v2093 = vld [vmem:[%s1 + $0x194] sm:$0xf]
  %v2094 = vld [vmem:[%s1 + $0x1a4] sm:$0xf]
  %v2095 = vld [vmem:[%s1 + $0x1b4] sm:$0xf]
  %v2096 = vld [vmem:[%s1 + $0x1c4] sm:$0xf]
  %v2097 = vld [vmem:[%s1 + $0x1d4] sm:$0xf]
  %v2098 = vld [vmem:[%s1 + $0x1e4] sm:$0xf]
  %v2099 = vld [vmem:[%s1 + $0x1f4] sm:$0xf]
  %v2100 = vld [vmem:[%s1 + $0x204] sm:$0xf]
  %v2101 = vld [vmem:[%s1 + $0x214] sm:$0xf]
  %v2102 = vld [vmem:[%s1 + $0x224] sm:$0xf]
  %v2103 = vld [vmem:[%s1 + $0x234] sm:$0xf]
  %v2104 = vld [vmem:[%s1 + $0x244] sm:$0xf]
  %v2105 = vld [vmem:[%s1 + $0x254] sm:$0xf]
  %v2106 = vld [vmem:[%s1 + $0x264] sm:$0xf]
  %v2107 = vld [vmem:[%s1 + $0x274] sm:$0xf]
  %v2108 = vld [vmem:[%s1 + $0x284] sm:$0xf]
  %v2109 = vld [vmem:[%s1 + $0x294] sm:$0xf]
  %v2110 = vld [vmem:[%s1 + $0x2a4] sm:$0xf]
  %v2111 = vld [vmem:[%s1 + $0x2b4] sm:$0xf]
  %v2112 = vld [vmem:[%s1 + $0x2c4] sm:$0xf]
  %v2113 = vld [vmem:[%s1 + $0x2d4] sm:$0xf]
  %v2114 = vld [vmem:[%s1 + $0x2e4] sm:$0xf]
  %v2115 = vld [vmem:[%s1 + $0x2f4] sm:$0xf]
  %v2116 = vld [vmem:[%s1 + $0x304] sm:$0xf]
  %v2117 = vld [vmem:[%s1 + $0x314] sm:$0xf]
  %v2118 = vld [vmem:[%s1 + $0x324] sm:$0xf]
  %v2119 = vld [vmem:[%s1 + $0x334] sm:$0xf]
  %v2120 = vld [vmem:[%s1 + $0x344] sm:$0xf]
  %v2121 = vld [vmem:[%s1 + $0x354] sm:$0xf]
  %v2122 = vld [vmem:[%s1 + $0x364] sm:$0xf]
  %v2123 = vld [vmem:[%s1 + $0x374] sm:$0xf]
  %v2124 = vld [vmem:[%s1 + $0x384] sm:$0xf]
  %v2125 = vld [vmem:[%s1 + $0x394] sm:$0xf]
  %v2126 = vld [vmem:[%s1 + $0x3a4] sm:$0xf]
  %v2127 = vld [vmem:[%s1 + $0x3b4] sm:$0xf]
  %v2128 = vld [vmem:[%s1 + $0x3c4] sm:$0xf]
  %v2129 = vld [vmem:[%s1 + $0x3d4] sm:$0xf]
  %v2130 = vld [vmem:[%s1 + $0x3e4] sm:$0xf]
  %v2131 = vld [vmem:[%s1 + $0x3f4] sm:$0xf]
  %v2132 = vld [vmem:[%s1 + $0x404] sm:$0xf]
  %v2133 = vld [vmem:[%s1 + $0x414] sm:$0xf]
  %v2134 = vld [vmem:[%s1 + $0x424] sm:$0xf]
  %v2135 = vld [vmem:[%s1 + $0x434] sm:$0xf]
  %v2136 = vld [vmem:[%s1 + $0x444] sm:$0xf]
  %v2137 = vld [vmem:[%s1 + $0x454] sm:$0xf]
  %v2138 = vld [vmem:[%s1 + $0x464] sm:$0xf]
  %v2139 = vld [vmem:[%s1 + $0x474] sm:$0xf]
  %v2140 = vld [vmem:[%s1 + $0x484] sm:$0xf]
  %v2141 = vld [vmem:[%s1 + $0x494] sm:$0xf]
  %v2142 = vld [vmem:[%s1 + $0x4a4] sm:$0xf]
  %v2143 = vld [vmem:[%s1 + $0x4b4] sm:$0xf]
  %v2144 = vld [vmem:[%s1 + $0x4c4] sm:$0xf]
  %v2145 = vld [vmem:[%s1 + $0x4d4] sm:$0xf]
  %v2146 = vld [vmem:[%s1 + $0x4e4] sm:$0xf]
  %v2147 = vld [vmem:[%s1 + $0x4f4] sm:$0xf]
  %v2148 = vld [vmem:[%s1 + $0x504] sm:$0xf]
  %v2149 = vld [vmem:[%s1 + $0x514] sm:$0xf]
  %v2150 = vld [vmem:[%s1 + $0x524] sm:$0xf]
  %v2151 = vld [vmem:[%s1 + $0x534] sm:$0xf]
  %v2152 = vld [vmem:[%s1 + $0x544] sm:$0xf]
  %v2153 = vld [vmem:[%s1 + $0x554] sm:$0xf]
  %v2154 = vld [vmem:[%s1 + $0x564] sm:$0xf]
  %v2155 = vld [vmem:[%s1 + $0x574] sm:$0xf]
  %v2156 = vld [vmem:[%s1 + $0x584] sm:$0xf]
  %v2157 = vld [vmem:[%s1 + $0x594] sm:$0xf]
  %v2158 = vld [vmem:[%s1 + $0x5a4] sm:$0xf]
  %v2159 = vld [vmem:[%s1 + $0x5b4] sm:$0xf]
  %v2160 = vld [vmem:[%s1 + $0x5c4] sm:$0xf]
  %v2161 = vld [vmem:[%s1 + $0x5d4] sm:$0xf]
  %v2162 = vld [vmem:[%s1 + $0x5e4] sm:$0xf]
  %v2163 = vld [vmem:[%s1 + $0x5f4] sm:$0xf]
  %v2164 = vld [vmem:[%s1 + $0x604] sm:$0xf]
  %v2165 = vld [vmem:[%s1 + $0x614] sm:$0xf]
  %v2166 = vld [vmem:[%s1 + $0x624] sm:$0xf]
  %v2167 = vld [vmem:[%s1 + $0x634] sm:$0xf]
  %v2168 = vld [vmem:[%s1 + $0x644] sm:$0xf]
  %v2169 = vld [vmem:[%s1 + $0x654] sm:$0xf]
  %v2170 = vld [vmem:[%s1 + $0x664] sm:$0xf]
  %v2171 = vld [vmem:[%s1 + $0x674] sm:$0xf]
  %v2172 = vld [vmem:[%s1 + $0x684] sm:$0xf]
  %v2173 = vld [vmem:[%s1 + $0x694] sm:$0xf]
  %v2174 = vld [vmem:[%s1 + $0x6a4] sm:$0xf]
  %v2175 = vld [vmem:[%s1 + $0x6b4] sm:$0xf]
  %v2176 = vld [vmem:[%s1 + $0x6c4] sm:$0xf]
  %v2177 = vld [vmem:[%s1 + $0x6d4] sm:$0xf]
  %v2178 = vld [vmem:[%s1 + $0x6e4] sm:$0xf]
  %v2179 = vld [vmem:[%s1 + $0x6f4] sm:$0xf]
  %v2180 = vld [vmem:[%s1 + $0x704] sm:$0xf]
  %v2181 = vld [vmem:[%s1 + $0x714] sm:$0xf]
  %v2182 = vld [vmem:[%s1 + $0x724] sm:$0xf]
  %v2183 = vld [vmem:[%s1 + $0x734] sm:$0xf]
  %v2184 = vld [vmem:[%s1 + $0x744] sm:$0xf]
  %v2185 = vld [vmem:[%s1 + $0x754] sm:$0xf]
  %v2186 = vld [vmem:[%s1 + $0x764] sm:$0xf]
  %v2187 = vld [vmem:[%s1 + $0x774] sm:$0xf]
  %v2188 = vld [vmem:[%s1 + $0x784] sm:$0xf]
  %v2189 = vld [vmem:[%s1 + $0x794] sm:$0xf]
  %v2190 = vld [vmem:[%s1 + $0x7a4] sm:$0xf]
  %v2191 = vld [vmem:[%s1 + $0x7b4] sm:$0xf]
  %v2192 = vld [vmem:[%s1 + $0x7c4] sm:$0xf]
  %v2193 = vld [vmem:[%s2 + $0x1] sm:$0x1]
  %v2195 = vperm.slane %v2193, 0
  %v2322 = vunpack.c.l.b16 %v2068
  %v2323 = vunpack.c.l.b16 %v2069
  %v2324 = vunpack.c.l.b16 %v2070
  %v2325 = vunpack.c.l.b16 %v2071
  %v2326 = vunpack.c.l.b16 %v2072
  %v2327 = vunpack.c.l.b16 %v2073
  %v2328 = vunpack.c.l.b16 %v2074
  %v2329 = vunpack.c.l.b16 %v2075
  %v2330 = vunpack.c.l.b16 %v2076
  %v2331 = vunpack.c.l.b16 %v2077
  %v2332 = vunpack.c.l.b16 %v2078
  %v2333 = vunpack.c.l.b16 %v2079
  %v2334 = vunpack.c.l.b16 %v2080
  %v2335 = vunpack.c.l.b16 %v2081
  %v2336 = vunpack.c.l.b16 %v2082
  %v2337 = vunpack.c.l.b16 %v2083
  %v2338 = vunpack.c.l.b16 %v2084
  %v2339 = vunpack.c.l.b16 %v2085
  %v2340 = vunpack.c.l.b16 %v2086
  %v2341 = vunpack.c.l.b16 %v2087
  %v2342 = vunpack.c.l.b16 %v2088
  %v2343 = vunpack.c.l.b16 %v2089
  %v2344 = vunpack.c.l.b16 %v2090
  %v2345 = vunpack.c.l.b16 %v2091
  %v2346 = vunpack.c.l.b16 %v2092
  %v2347 = vunpack.c.l.b16 %v2093
  %v2348 = vunpack.c.l.b16 %v2094
  %v2349 = vunpack.c.l.b16 %v2095
  %v2350 = vunpack.c.l.b16 %v2096
  %v2351 = vunpack.c.l.b16 %v2097
  %v2352 = vunpack.c.l.b16 %v2098
  %v2353 = vunpack.c.l.b16 %v2099
  %v2354 = vunpack.c.l.b16 %v2100
  %v2355 = vunpack.c.l.b16 %v2101
  %v2356 = vunpack.c.l.b16 %v2102
  %v2357 = vunpack.c.l.b16 %v2103
  %v2358 = vunpack.c.l.b16 %v2104
  %v2359 = vunpack.c.l.b16 %v2105
  %v2360 = vunpack.c.l.b16 %v2106
  %v2361 = vunpack.c.l.b16 %v2107
  %v2362 = vunpack.c.l.b16 %v2108
  %v2363 = vunpack.c.l.b16 %v2109
  %v2364 = vunpack.c.l.b16 %v2110
  %v2365 = vunpack.c.l.b16 %v2111
  %v2366 = vunpack.c.l.b16 %v2112
  %v2367 = vunpack.c.l.b16 %v2113
  %v2368 = vunpack.c.l.b16 %v2114
  %v2369 = vunpack.c.l.b16 %v2115
  %v2370 = vunpack.c.l.b16 %v2116
  %v2371 = vunpack.c.l.b16 %v2117
  %v2372 = vunpack.c.l.b16 %v2118
  %v2373 = vunpack.c.l.b16 %v2119
  %v2374 = vunpack.c.l.b16 %v2120
  %v2375 = vunpack.c.l.b16 %v2121
  %v2376 = vunpack.c.l.b16 %v2122
  %v2377 = vunpack.c.l.b16 %v2123
  %v2378 = vunpack.c.l.b16 %v2124
  %v2379 = vunpack.c.l.b16 %v2125
  %v2380 = vunpack.c.l.b16 %v2126
  %v2381 = vunpack.c.l.b16 %v2127
  %v2382 = vunpack.c.l.b16 %v2128
  %v2383 = vunpack.c.l.b16 %v2129
  %v2384 = vunpack.c.l.b16 %v2130
  %v2385 = vunpack.c.l.b16 %v2131
  %v2386 = vunpack.c.l.b16 %v2132
  %v2387 = vunpack.c.l.b16 %v2133
  %v2388 = vunpack.c.l.b16 %v2134
  %v2389 = vunpack.c.l.b16 %v2135
  %v2390 = vunpack.c.l.b16 %v2136
  %v2391 = vunpack.c.l.b16 %v2137
  %v2392 = vunpack.c.l.b16 %v2138
  %v2393 = vunpack.c.l.b16 %v2139
  %v2394 = vunpack.c.l.b16 %v2140
  %v2395 = vunpack.c.l.b16 %v2141
  %v2396 = vunpack.c.l.b16 %v2142
  %v2397 = vunpack.c.l.b16 %v2143
  %v2398 = vunpack.c.l.b16 %v2144
  %v2399 = vunpack.c.l.b16 %v2145
  %v2400 = vunpack.c.l.b16 %v2146
  %v2401 = vunpack.c.l.b16 %v2147
  %v2402 = vunpack.c.l.b16 %v2148
  %v2403 = vunpack.c.l.b16 %v2149
  %v2404 = vunpack.c.l.b16 %v2150
  %v2405 = vunpack.c.l.b16 %v2151
  %v2406 = vunpack.c.l.b16 %v2152
  %v2407 = vunpack.c.l.b16 %v2153
  %v2408 = vunpack.c.l.b16 %v2154
  %v2409 = vunpack.c.l.b16 %v2155
  %v2410 = vunpack.c.l.b16 %v2156
  %v2411 = vunpack.c.l.b16 %v2157
  %v2412 = vunpack.c.l.b16 %v2158
  %v2413 = vunpack.c.l.b16 %v2159
  %v2414 = vunpack.c.l.b16 %v2160
  %v2415 = vunpack.c.l.b16 %v2161
  %v2416 = vunpack.c.l.b16 %v2162
  %v2417 = vunpack.c.l.b16 %v2163
  %v2418 = vunpack.c.l.b16 %v2164
  %v2419 = vunpack.c.l.b16 %v2165
  %v2420 = vunpack.c.l.b16 %v2166
  %v2421 = vunpack.c.l.b16 %v2167
  %v2422 = vunpack.c.l.b16 %v2168
  %v2423 = vunpack.c.l.b16 %v2169
  %v2424 = vunpack.c.l.b16 %v2170
  %v2425 = vunpack.c.l.b16 %v2171
  %v2426 = vunpack.c.l.b16 %v2172
  %v2427 = vunpack.c.l.b16 %v2173
  %v2428 = vunpack.c.l.b16 %v2174
  %v2429 = vunpack.c.l.b16 %v2175
  %v2430 = vunpack.c.l.b16 %v2176
  %v2431 = vunpack.c.l.b16 %v2177
  %v2432 = vunpack.c.l.b16 %v2178
  %v2433 = vunpack.c.l.b16 %v2179
  %v2434 = vunpack.c.l.b16 %v2180
  %v2435 = vunpack.c.l.b16 %v2181
  %v2436 = vunpack.c.l.b16 %v2182
  %v2437 = vunpack.c.l.b16 %v2183
  %v2438 = vunpack.c.l.b16 %v2184
  %v2439 = vunpack.c.l.b16 %v2185
  %v2440 = vunpack.c.l.b16 %v2186
  %v2441 = vunpack.c.l.b16 %v2187
  %v2442 = vunpack.c.l.b16 %v2188
  %v2443 = vunpack.c.l.b16 %v2189
  %v2444 = vunpack.c.l.b16 %v2190
  %v2445 = vunpack.c.l.b16 %v2191
  %v2446 = vunpack.c.l.b16 %v2192
  %v2447 = vpack.c.b16 %v2323, %v2322
  %v2448 = vpack.c.b16 %v2325, %v2324
  %v2449 = vpack.c.b16 %v2327, %v2326
  %v2450 = vpack.c.b16 %v2329, %v2328
  %v2451 = vpack.c.b16 %v2331, %v2330
  %v2452 = vpack.c.b16 %v2333, %v2332
  %v2453 = vpack.c.b16 %v2335, %v2334
  %v2454 = vpack.c.b16 %v2337, %v2336
  %v2455 = vpack.c.b16 %v2339, %v2338
  %v2456 = vpack.c.b16 %v2341, %v2340
  %v2457 = vpack.c.b16 %v2343, %v2342
  %v2458 = vpack.c.b16 %v2345, %v2344
  %v2459 = vpack.c.b16 %v2347, %v2346
  %v2460 = vpack.c.b16 %v2349, %v2348
  %v2461 = vpack.c.b16 %v2351, %v2350
  %v2462 = vpack.c.b16 %v2353, %v2352
  %v2463 = vpack.c.b16 %v2355, %v2354
  %v2464 = vpack.c.b16 %v2357, %v2356
  %v2465 = vpack.c.b16 %v2359, %v2358
  %v2466 = vpack.c.b16 %v2361, %v2360
  %v2467 = vpack.c.b16 %v2363, %v2362
  %v2468 = vpack.c.b16 %v2365, %v2364
  %v2469 = vpack.c.b16 %v2367, %v2366
  %v2470 = vpack.c.b16 %v2369, %v2368
  %v2471 = vpack.c.b16 %v2371, %v2370
  %v2472 = vpack.c.b16 %v2373, %v2372
  %v2473 = vpack.c.b16 %v2375, %v2374
  %v2474 = vpack.c.b16 %v2377, %v2376
  %v2475 = vpack.c.b16 %v2379, %v2378
  %v2476 = vpack.c.b16 %v2381, %v2380
  %v2477 = vpack.c.b16 %v2383, %v2382
  %v2478 = vpack.c.b16 %v2385, %v2384
  %v2479 = vpack.c.b16 %v2387, %v2386
  %v2480 = vpack.c.b16 %v2389, %v2388
  %v2481 = vpack.c.b16 %v2391, %v2390
  %v2482 = vpack.c.b16 %v2393, %v2392
  %v2483 = vpack.c.b16 %v2395, %v2394
  %v2484 = vpack.c.b16 %v2397, %v2396
  %v2485 = vpack.c.b16 %v2399, %v2398
  %v2486 = vpack.c.b16 %v2401, %v2400
  %v2487 = vpack.c.b16 %v2403, %v2402
  %v2488 = vpack.c.b16 %v2405, %v2404
  %v2489 = vpack.c.b16 %v2407, %v2406
  %v2490 = vpack.c.b16 %v2409, %v2408
  %v2491 = vpack.c.b16 %v2411, %v2410
  %v2492 = vpack.c.b16 %v2413, %v2412
  %v2493 = vpack.c.b16 %v2415, %v2414
  %v2494 = vpack.c.b16 %v2417, %v2416
  %v2495 = vpack.c.b16 %v2419, %v2418
  %v2496 = vpack.c.b16 %v2421, %v2420
  %v2497 = vpack.c.b16 %v2423, %v2422
  %v2498 = vpack.c.b16 %v2425, %v2424
  %v2499 = vpack.c.b16 %v2427, %v2426
  %v2500 = vpack.c.b16 %v2429, %v2428
  %v2501 = vpack.c.b16 %v2431, %v2430
  %v2502 = vpack.c.b16 %v2433, %v2432
  %v2503 = vpack.c.b16 %v2435, %v2434
  %v2504 = vpack.c.b16 %v2437, %v2436
  %v2505 = vpack.c.b16 %v2439, %v2438
  %v2506 = vpack.c.b16 %v2441, %v2440
  %v2507 = vpack.c.b16 %v2443, %v2442
  %v2508 = vpack.c.b16 %v2445, %v2444
  %v2509 = vpack.c.b16 %v2446, %v2446
  %v2573 = vsel %vm1014, %v2509, 0
  %2575 = vmatpush.bf16.msra.mxu0 %v2454
  %2576 = vmatpush.bf16.msra.mxu0 %v2453
  %2577 = vmatpush.bf16.msra.mxu0 %v2452
  %2578 = vmatpush.bf16.msra.mxu0 %v2451
  %2579 = vmatpush.bf16.msra.mxu0 %v2450
  %2580 = vmatpush.bf16.msra.mxu0 %v2449
  %2581 = vmatpush.bf16.msra.mxu0 %v2448
  %2582 = vmatpush.bf16.msra.mxu0 %v2447
  %2583 = vmatmul.bf16.gmra.mxu0 %v285
  %v2584 = vpop.f32.mrf.mxu0
  %v2585 = vadd.f32 %v2195, %v2584
  %v2586 = vpop.f32.mrf.mxu0
  %v2587 = vadd.f32 %v2195, %v2586
  %2588 = vmatmul.bf16.gmra.mxu0 %v293
  %v2589 = vpop.f32.mrf.mxu0
  %v2590 = vadd.f32 %v2195, %v2589
  %v2591 = vpop.f32.mrf.mxu0
  %v2592 = vadd.f32 %v2195, %v2591
  %2593 = vmatmul.bf16.gmra.mxu0 %v301
  %v2594 = vpop.f32.mrf.mxu0
  %v2595 = vadd.f32 %v2195, %v2594
  %v2596 = vpop.f32.mrf.mxu0
  %v2597 = vadd.f32 %v2195, %v2596
  %2598 = vmatmul.bf16.gmra.mxu0 %v309
  %v2599 = vpop.f32.mrf.mxu0
  %v2600 = vadd.f32 %v2195, %v2599
  %v2601 = vpop.f32.mrf.mxu0
  %v2602 = vadd.f32 %v2195, %v2601
  %2603 = vmatmul.bf16.gmra.mxu0 %v317
  %v2604 = vpop.f32.mrf.mxu0
  %v2605 = vadd.f32 %v2195, %v2604
  %v2606 = vpop.f32.mrf.mxu0
  %v2607 = vadd.f32 %v2195, %v2606
  %2608 = vmatmul.bf16.gmra.mxu0 %v325
  %v2609 = vpop.f32.mrf.mxu0
  %v2610 = vadd.f32 %v2195, %v2609
  %v2611 = vpop.f32.mrf.mxu0
  %v2612 = vadd.f32 %v2195, %v2611
  %2613 = vmatmul.bf16.gmra.mxu0 %v333
  %v2614 = vpop.f32.mrf.mxu0
  %v2615 = vadd.f32 %v2195, %v2614
  %v2616 = vpop.f32.mrf.mxu0
  %v2617 = vadd.f32 %v2195, %v2616
  %2618 = vmatmul.bf16.gmra.mxu0 %v341
  %v2619 = vpop.f32.mrf.mxu0
  %v2620 = vadd.f32 %v2195, %v2619
  %v2621 = vpop.f32.mrf.mxu0
  %v2622 = vadd.f32 %v2195, %v2621
  %2623 = vmatmul.bf16.gmra.mxu0 %v349
  %v2624 = vpop.f32.mrf.mxu0
  %v2625 = vadd.f32 %v2195, %v2624
  %v2626 = vpop.f32.mrf.mxu0
  %v2627 = vadd.f32 %v2195, %v2626
  %2628 = vmatmul.bf16.gmra.mxu0 %v357
  %v2629 = vpop.f32.mrf.mxu0
  %v2630 = vadd.f32 %v2195, %v2629
  %v2631 = vpop.f32.mrf.mxu0
  %v2632 = vadd.f32 %v2195, %v2631
  %2633 = vmatmul.bf16.gmra.mxu0 %v365
  %v2634 = vpop.f32.mrf.mxu0
  %v2635 = vadd.f32 %v2195, %v2634
  %v2636 = vpop.f32.mrf.mxu0
  %v2637 = vadd.f32 %v2195, %v2636
  %2638 = vmatmul.bf16.gmra.mxu0 %v373
  %v2639 = vpop.f32.mrf.mxu0
  %v2640 = vadd.f32 %v2195, %v2639
  %v2641 = vpop.f32.mrf.mxu0
  %v2642 = vadd.f32 %v2195, %v2641
  %2643 = vmatmul.bf16.gmra.mxu0 %v381
  %v2644 = vpop.f32.mrf.mxu0
  %v2645 = vadd.f32 %v2195, %v2644
  %v2646 = vpop.f32.mrf.mxu0
  %v2647 = vadd.f32 %v2195, %v2646
  %2648 = vmatmul.bf16.gmra.mxu0 %v389
  %v2649 = vpop.f32.mrf.mxu0
  %v2650 = vadd.f32 %v2195, %v2649
  %v2651 = vpop.f32.mrf.mxu0
  %v2652 = vadd.f32 %v2195, %v2651
  %2653 = vmatmul.bf16.gmra.mxu0 %v397
  %v2654 = vpop.f32.mrf.mxu0
  %v2655 = vadd.f32 %v2195, %v2654
  %v2656 = vpop.f32.mrf.mxu0
  %v2657 = vadd.f32 %v2195, %v2656
  %2658 = vmatmul.bf16.gmra.mxu0 %v405
  %v2659 = vpop.f32.mrf.mxu0
  %v2660 = vadd.f32 %v2195, %v2659
  %v2661 = vpop.f32.mrf.mxu0
  %v2662 = vadd.f32 %v2195, %v2661
  %2663 = vmatmul.bf16.gmra.mxu0 %v413
  %v2664 = vpop.f32.mrf.mxu0
  %v2665 = vadd.f32 %v2195, %v2664
  %v2666 = vpop.f32.mrf.mxu0
  %2667 = vdwg.mxu0
  %2668 = vmatpush.bf16.msra.mxu0 %v2462
  %2669 = vmatpush.bf16.msra.mxu0 %v2461
  %2670 = vmatpush.bf16.msra.mxu0 %v2460
  %2671 = vmatpush.bf16.msra.mxu0 %v2459
  %2672 = vmatpush.bf16.msra.mxu0 %v2458
  %2673 = vmatpush.bf16.msra.mxu0 %v2457
  %2674 = vmatpush.bf16.msra.mxu0 %v2456
  %2675 = vmatpush.bf16.msra.mxu0 %v2455
  %2676 = vmatmul.bf16.gmra.mxu0 %v286
  %v2677 = vpop.f32.mrf.mxu0
  %v2678 = vadd.f32 %v2585, %v2677
  %v2679 = vpop.f32.mrf.mxu0
  %v2680 = vadd.f32 %v2587, %v2679
  %2681 = vmatmul.bf16.gmra.mxu0 %v294
  %v2682 = vpop.f32.mrf.mxu0
  %v2683 = vadd.f32 %v2590, %v2682
  %v2684 = vpop.f32.mrf.mxu0
  %v2685 = vadd.f32 %v2592, %v2684
  %2686 = vmatmul.bf16.gmra.mxu0 %v302
  %v2687 = vpop.f32.mrf.mxu0
  %v2688 = vadd.f32 %v2595, %v2687
  %v2689 = vpop.f32.mrf.mxu0
  %v2690 = vadd.f32 %v2597, %v2689
  %2691 = vmatmul.bf16.gmra.mxu0 %v310
  %v2692 = vpop.f32.mrf.mxu0
  %v2693 = vadd.f32 %v2600, %v2692
  %v2694 = vpop.f32.mrf.mxu0
  %v2695 = vadd.f32 %v2602, %v2694
  %2696 = vmatmul.bf16.gmra.mxu0 %v318
  %v2697 = vpop.f32.mrf.mxu0
  %v2698 = vadd.f32 %v2605, %v2697
  %v2699 = vpop.f32.mrf.mxu0
  %v2700 = vadd.f32 %v2607, %v2699
  %2701 = vmatmul.bf16.gmra.mxu0 %v326
  %v2702 = vpop.f32.mrf.mxu0
  %v2703 = vadd.f32 %v2610, %v2702
  %v2704 = vpop.f32.mrf.mxu0
  %v2705 = vadd.f32 %v2612, %v2704
  %2706 = vmatmul.bf16.gmra.mxu0 %v334
  %v2707 = vpop.f32.mrf.mxu0
  %v2708 = vadd.f32 %v2615, %v2707
  %v2709 = vpop.f32.mrf.mxu0
  %v2710 = vadd.f32 %v2617, %v2709
  %2711 = vmatmul.bf16.gmra.mxu0 %v342
  %v2712 = vpop.f32.mrf.mxu0
  %v2713 = vadd.f32 %v2620, %v2712
  %v2714 = vpop.f32.mrf.mxu0
  %v2715 = vadd.f32 %v2622, %v2714
  %2716 = vmatmul.bf16.gmra.mxu0 %v350
  %v2717 = vpop.f32.mrf.mxu0
  %v2718 = vadd.f32 %v2625, %v2717
  %v2719 = vpop.f32.mrf.mxu0
  %v2720 = vadd.f32 %v2627, %v2719
  %2721 = vmatmul.bf16.gmra.mxu0 %v358
  %v2722 = vpop.f32.mrf.mxu0
  %v2723 = vadd.f32 %v2630, %v2722
  %v2724 = vpop.f32.mrf.mxu0
  %v2725 = vadd.f32 %v2632, %v2724
  %2726 = vmatmul.bf16.gmra.mxu0 %v366
  %v2727 = vpop.f32.mrf.mxu0
  %v2728 = vadd.f32 %v2635, %v2727
  %v2729 = vpop.f32.mrf.mxu0
  %v2730 = vadd.f32 %v2637, %v2729
  %2731 = vmatmul.bf16.gmra.mxu0 %v374
  %v2732 = vpop.f32.mrf.mxu0
  %v2733 = vadd.f32 %v2640, %v2732
  %v2734 = vpop.f32.mrf.mxu0
  %v2735 = vadd.f32 %v2642, %v2734
  %2736 = vmatmul.bf16.gmra.mxu0 %v382
  %v2737 = vpop.f32.mrf.mxu0
  %v2738 = vadd.f32 %v2645, %v2737
  %v2739 = vpop.f32.mrf.mxu0
  %v2740 = vadd.f32 %v2647, %v2739
  %2741 = vmatmul.bf16.gmra.mxu0 %v390
  %v2742 = vpop.f32.mrf.mxu0
  %v2743 = vadd.f32 %v2650, %v2742
  %v2744 = vpop.f32.mrf.mxu0
  %v2745 = vadd.f32 %v2652, %v2744
  %2746 = vmatmul.bf16.gmra.mxu0 %v398
  %v2747 = vpop.f32.mrf.mxu0
  %v2748 = vadd.f32 %v2655, %v2747
  %v2749 = vpop.f32.mrf.mxu0
  %v2750 = vadd.f32 %v2657, %v2749
  %2751 = vmatmul.bf16.gmra.mxu0 %v406
  %v2752 = vpop.f32.mrf.mxu0
  %v2753 = vadd.f32 %v2660, %v2752
  %v2754 = vpop.f32.mrf.mxu0
  %v2755 = vadd.f32 %v2662, %v2754
  %2756 = vmatmul.bf16.gmra.mxu0 %v414
  %v2757 = vpop.f32.mrf.mxu0
  %v2758 = vadd.f32 %v2665, %v2757
  %v2759 = vpop.f32.mrf.mxu0
  %2760 = vdwg.mxu0
  %2761 = vmatpush.bf16.msra.mxu0 %v2470
  %2762 = vmatpush.bf16.msra.mxu0 %v2469
  %2763 = vmatpush.bf16.msra.mxu0 %v2468
  %2764 = vmatpush.bf16.msra.mxu0 %v2467
  %2765 = vmatpush.bf16.msra.mxu0 %v2466
  %2766 = vmatpush.bf16.msra.mxu0 %v2465
  %2767 = vmatpush.bf16.msra.mxu0 %v2464
  %2768 = vmatpush.bf16.msra.mxu0 %v2463
  %2769 = vmatmul.bf16.gmra.mxu0 %v287
  %v2770 = vpop.f32.mrf.mxu0
  %v2771 = vadd.f32 %v2678, %v2770
  %v2772 = vpop.f32.mrf.mxu0
  %v2773 = vadd.f32 %v2680, %v2772
  %2774 = vmatmul.bf16.gmra.mxu0 %v295
  %v2775 = vpop.f32.mrf.mxu0
  %v2776 = vadd.f32 %v2683, %v2775
  %v2777 = vpop.f32.mrf.mxu0
  %v2778 = vadd.f32 %v2685, %v2777
  %2779 = vmatmul.bf16.gmra.mxu0 %v303
  %v2780 = vpop.f32.mrf.mxu0
  %v2781 = vadd.f32 %v2688, %v2780
  %v2782 = vpop.f32.mrf.mxu0
  %v2783 = vadd.f32 %v2690, %v2782
  %2784 = vmatmul.bf16.gmra.mxu0 %v311
  %v2785 = vpop.f32.mrf.mxu0
  %v2786 = vadd.f32 %v2693, %v2785
  %v2787 = vpop.f32.mrf.mxu0
  %v2788 = vadd.f32 %v2695, %v2787
  %2789 = vmatmul.bf16.gmra.mxu0 %v319
  %v2790 = vpop.f32.mrf.mxu0
  %v2791 = vadd.f32 %v2698, %v2790
  %v2792 = vpop.f32.mrf.mxu0
  %v2793 = vadd.f32 %v2700, %v2792
  %2794 = vmatmul.bf16.gmra.mxu0 %v327
  %v2795 = vpop.f32.mrf.mxu0
  %v2796 = vadd.f32 %v2703, %v2795
  %v2797 = vpop.f32.mrf.mxu0
  %v2798 = vadd.f32 %v2705, %v2797
  %2799 = vmatmul.bf16.gmra.mxu0 %v335
  %v2800 = vpop.f32.mrf.mxu0
  %v2801 = vadd.f32 %v2708, %v2800
  %v2802 = vpop.f32.mrf.mxu0
  %v2803 = vadd.f32 %v2710, %v2802
  %2804 = vmatmul.bf16.gmra.mxu0 %v343
  %v2805 = vpop.f32.mrf.mxu0
  %v2806 = vadd.f32 %v2713, %v2805
  %v2807 = vpop.f32.mrf.mxu0
  %v2808 = vadd.f32 %v2715, %v2807
  %2809 = vmatmul.bf16.gmra.mxu0 %v351
  %v2810 = vpop.f32.mrf.mxu0
  %v2811 = vadd.f32 %v2718, %v2810
  %v2812 = vpop.f32.mrf.mxu0
  %v2813 = vadd.f32 %v2720, %v2812
  %2814 = vmatmul.bf16.gmra.mxu0 %v359
  %v2815 = vpop.f32.mrf.mxu0
  %v2816 = vadd.f32 %v2723, %v2815
  %v2817 = vpop.f32.mrf.mxu0
  %v2818 = vadd.f32 %v2725, %v2817
  %2819 = vmatmul.bf16.gmra.mxu0 %v367
  %v2820 = vpop.f32.mrf.mxu0
  %v2821 = vadd.f32 %v2728, %v2820
  %v2822 = vpop.f32.mrf.mxu0
  %v2823 = vadd.f32 %v2730, %v2822
  %2824 = vmatmul.bf16.gmra.mxu0 %v375
  %v2825 = vpop.f32.mrf.mxu0
  %v2826 = vadd.f32 %v2733, %v2825
  %v2827 = vpop.f32.mrf.mxu0
  %v2828 = vadd.f32 %v2735, %v2827
  %2829 = vmatmul.bf16.gmra.mxu0 %v383
  %v2830 = vpop.f32.mrf.mxu0
  %v2831 = vadd.f32 %v2738, %v2830
  %v2832 = vpop.f32.mrf.mxu0
  %v2833 = vadd.f32 %v2740, %v2832
  %2834 = vmatmul.bf16.gmra.mxu0 %v391
  %v2835 = vpop.f32.mrf.mxu0
  %v2836 = vadd.f32 %v2743, %v2835
  %v2837 = vpop.f32.mrf.mxu0
  %v2838 = vadd.f32 %v2745, %v2837
  %2839 = vmatmul.bf16.gmra.mxu0 %v399
  %v2840 = vpop.f32.mrf.mxu0
  %v2841 = vadd.f32 %v2748, %v2840
  %v2842 = vpop.f32.mrf.mxu0
  %v2843 = vadd.f32 %v2750, %v2842
  %2844 = vmatmul.bf16.gmra.mxu0 %v407
  %v2845 = vpop.f32.mrf.mxu0
  %v2846 = vadd.f32 %v2753, %v2845
  %v2847 = vpop.f32.mrf.mxu0
  %v2848 = vadd.f32 %v2755, %v2847
  %2849 = vmatmul.bf16.gmra.mxu0 %v415
  %v2850 = vpop.f32.mrf.mxu0
  %v2851 = vadd.f32 %v2758, %v2850
  %v2852 = vpop.f32.mrf.mxu0
  %2853 = vdwg.mxu0
  %2854 = vmatpush.bf16.msra.mxu0 %v2478
  %2855 = vmatpush.bf16.msra.mxu0 %v2477
  %2856 = vmatpush.bf16.msra.mxu0 %v2476
  %2857 = vmatpush.bf16.msra.mxu0 %v2475
  %2858 = vmatpush.bf16.msra.mxu0 %v2474
  %2859 = vmatpush.bf16.msra.mxu0 %v2473
  %2860 = vmatpush.bf16.msra.mxu0 %v2472
  %2861 = vmatpush.bf16.msra.mxu0 %v2471
  %2862 = vmatmul.bf16.gmra.mxu0 %v288
  %v2863 = vpop.f32.mrf.mxu0
  %v2864 = vadd.f32 %v2771, %v2863
  %v2865 = vpop.f32.mrf.mxu0
  %v2866 = vadd.f32 %v2773, %v2865
  %2867 = vmatmul.bf16.gmra.mxu0 %v296
  %v2868 = vpop.f32.mrf.mxu0
  %v2869 = vadd.f32 %v2776, %v2868
  %v2870 = vpop.f32.mrf.mxu0
  %v2871 = vadd.f32 %v2778, %v2870
  %2872 = vmatmul.bf16.gmra.mxu0 %v304
  %v2873 = vpop.f32.mrf.mxu0
  %v2874 = vadd.f32 %v2781, %v2873
  %v2875 = vpop.f32.mrf.mxu0
  %v2876 = vadd.f32 %v2783, %v2875
  %2877 = vmatmul.bf16.gmra.mxu0 %v312
  %v2878 = vpop.f32.mrf.mxu0
  %v2879 = vadd.f32 %v2786, %v2878
  %v2880 = vpop.f32.mrf.mxu0
  %v2881 = vadd.f32 %v2788, %v2880
  %2882 = vmatmul.bf16.gmra.mxu0 %v320
  %v2883 = vpop.f32.mrf.mxu0
  %v2884 = vadd.f32 %v2791, %v2883
  %v2885 = vpop.f32.mrf.mxu0
  %v2886 = vadd.f32 %v2793, %v2885
  %2887 = vmatmul.bf16.gmra.mxu0 %v328
  %v2888 = vpop.f32.mrf.mxu0
  %v2889 = vadd.f32 %v2796, %v2888
  %v2890 = vpop.f32.mrf.mxu0
  %v2891 = vadd.f32 %v2798, %v2890
  %2892 = vmatmul.bf16.gmra.mxu0 %v336
  %v2893 = vpop.f32.mrf.mxu0
  %v2894 = vadd.f32 %v2801, %v2893
  %v2895 = vpop.f32.mrf.mxu0
  %v2896 = vadd.f32 %v2803, %v2895
  %2897 = vmatmul.bf16.gmra.mxu0 %v344
  %v2898 = vpop.f32.mrf.mxu0
  %v2899 = vadd.f32 %v2806, %v2898
  %v2900 = vpop.f32.mrf.mxu0
  %v2901 = vadd.f32 %v2808, %v2900
  %2902 = vmatmul.bf16.gmra.mxu0 %v352
  %v2903 = vpop.f32.mrf.mxu0
  %v2904 = vadd.f32 %v2811, %v2903
  %v2905 = vpop.f32.mrf.mxu0
  %v2906 = vadd.f32 %v2813, %v2905
  %2907 = vmatmul.bf16.gmra.mxu0 %v360
  %v2908 = vpop.f32.mrf.mxu0
  %v2909 = vadd.f32 %v2816, %v2908
  %v2910 = vpop.f32.mrf.mxu0
  %v2911 = vadd.f32 %v2818, %v2910
  %2912 = vmatmul.bf16.gmra.mxu0 %v368
  %v2913 = vpop.f32.mrf.mxu0
  %v2914 = vadd.f32 %v2821, %v2913
  %v2915 = vpop.f32.mrf.mxu0
  %v2916 = vadd.f32 %v2823, %v2915
  %2917 = vmatmul.bf16.gmra.mxu0 %v376
  %v2918 = vpop.f32.mrf.mxu0
  %v2919 = vadd.f32 %v2826, %v2918
  %v2920 = vpop.f32.mrf.mxu0
  %v2921 = vadd.f32 %v2828, %v2920
  %2922 = vmatmul.bf16.gmra.mxu0 %v384
  %v2923 = vpop.f32.mrf.mxu0
  %v2924 = vadd.f32 %v2831, %v2923
  %v2925 = vpop.f32.mrf.mxu0
  %v2926 = vadd.f32 %v2833, %v2925
  %2927 = vmatmul.bf16.gmra.mxu0 %v392
  %v2928 = vpop.f32.mrf.mxu0
  %v2929 = vadd.f32 %v2836, %v2928
  %v2930 = vpop.f32.mrf.mxu0
  %v2931 = vadd.f32 %v2838, %v2930
  %2932 = vmatmul.bf16.gmra.mxu0 %v400
  %v2933 = vpop.f32.mrf.mxu0
  %v2934 = vadd.f32 %v2841, %v2933
  %v2935 = vpop.f32.mrf.mxu0
  %v2936 = vadd.f32 %v2843, %v2935
  %2937 = vmatmul.bf16.gmra.mxu0 %v408
  %v2938 = vpop.f32.mrf.mxu0
  %v2939 = vadd.f32 %v2846, %v2938
  %v2940 = vpop.f32.mrf.mxu0
  %v2941 = vadd.f32 %v2848, %v2940
  %2942 = vmatmul.bf16.gmra.mxu0 %v416
  %v2943 = vpop.f32.mrf.mxu0
  %v2944 = vadd.f32 %v2851, %v2943
  %v2945 = vpop.f32.mrf.mxu0
  %2946 = vdwg.mxu0
  %2947 = vmatpush.bf16.msra.mxu0 %v2486
  %2948 = vmatpush.bf16.msra.mxu0 %v2485
  %2949 = vmatpush.bf16.msra.mxu0 %v2484
  %2950 = vmatpush.bf16.msra.mxu0 %v2483
  %2951 = vmatpush.bf16.msra.mxu0 %v2482
  %2952 = vmatpush.bf16.msra.mxu0 %v2481
  %2953 = vmatpush.bf16.msra.mxu0 %v2480
  %2954 = vmatpush.bf16.msra.mxu0 %v2479
  %2955 = vmatmul.bf16.gmra.mxu0 %v289
  %v2956 = vpop.f32.mrf.mxu0
  %v2957 = vadd.f32 %v2864, %v2956
  %v2958 = vpop.f32.mrf.mxu0
  %v2959 = vadd.f32 %v2866, %v2958
  %2960 = vmatmul.bf16.gmra.mxu0 %v297
  %v2961 = vpop.f32.mrf.mxu0
  %v2962 = vadd.f32 %v2869, %v2961
  %v2963 = vpop.f32.mrf.mxu0
  %v2964 = vadd.f32 %v2871, %v2963
  %2965 = vmatmul.bf16.gmra.mxu0 %v305
  %v2966 = vpop.f32.mrf.mxu0
  %v2967 = vadd.f32 %v2874, %v2966
  %v2968 = vpop.f32.mrf.mxu0
  %v2969 = vadd.f32 %v2876, %v2968
  %2970 = vmatmul.bf16.gmra.mxu0 %v313
  %v2971 = vpop.f32.mrf.mxu0
  %v2972 = vadd.f32 %v2879, %v2971
  %v2973 = vpop.f32.mrf.mxu0
  %v2974 = vadd.f32 %v2881, %v2973
  %2975 = vmatmul.bf16.gmra.mxu0 %v321
  %v2976 = vpop.f32.mrf.mxu0
  %v2977 = vadd.f32 %v2884, %v2976
  %v2978 = vpop.f32.mrf.mxu0
  %v2979 = vadd.f32 %v2886, %v2978
  %2980 = vmatmul.bf16.gmra.mxu0 %v329
  %v2981 = vpop.f32.mrf.mxu0
  %v2982 = vadd.f32 %v2889, %v2981
  %v2983 = vpop.f32.mrf.mxu0
  %v2984 = vadd.f32 %v2891, %v2983
  %2985 = vmatmul.bf16.gmra.mxu0 %v337
  %v2986 = vpop.f32.mrf.mxu0
  %v2987 = vadd.f32 %v2894, %v2986
  %v2988 = vpop.f32.mrf.mxu0
  %v2989 = vadd.f32 %v2896, %v2988
  %2990 = vmatmul.bf16.gmra.mxu0 %v345
  %v2991 = vpop.f32.mrf.mxu0
  %v2992 = vadd.f32 %v2899, %v2991
  %v2993 = vpop.f32.mrf.mxu0
  %v2994 = vadd.f32 %v2901, %v2993
  %2995 = vmatmul.bf16.gmra.mxu0 %v353
  %v2996 = vpop.f32.mrf.mxu0
  %v2997 = vadd.f32 %v2904, %v2996
  %v2998 = vpop.f32.mrf.mxu0
  %v2999 = vadd.f32 %v2906, %v2998
  %3000 = vmatmul.bf16.gmra.mxu0 %v361
  %v3001 = vpop.f32.mrf.mxu0
  %v3002 = vadd.f32 %v2909, %v3001
  %v3003 = vpop.f32.mrf.mxu0
  %v3004 = vadd.f32 %v2911, %v3003
  %3005 = vmatmul.bf16.gmra.mxu0 %v369
  %v3006 = vpop.f32.mrf.mxu0
  %v3007 = vadd.f32 %v2914, %v3006
  %v3008 = vpop.f32.mrf.mxu0
  %v3009 = vadd.f32 %v2916, %v3008
  %3010 = vmatmul.bf16.gmra.mxu0 %v377
  %v3011 = vpop.f32.mrf.mxu0
  %v3012 = vadd.f32 %v2919, %v3011
  %v3013 = vpop.f32.mrf.mxu0
  %v3014 = vadd.f32 %v2921, %v3013
  %3015 = vmatmul.bf16.gmra.mxu0 %v385
  %v3016 = vpop.f32.mrf.mxu0
  %v3017 = vadd.f32 %v2924, %v3016
  %v3018 = vpop.f32.mrf.mxu0
  %v3019 = vadd.f32 %v2926, %v3018
  %3020 = vmatmul.bf16.gmra.mxu0 %v393
  %v3021 = vpop.f32.mrf.mxu0
  %v3022 = vadd.f32 %v2929, %v3021
  %v3023 = vpop.f32.mrf.mxu0
  %v3024 = vadd.f32 %v2931, %v3023
  %3025 = vmatmul.bf16.gmra.mxu0 %v401
  %v3026 = vpop.f32.mrf.mxu0
  %v3027 = vadd.f32 %v2934, %v3026
  %v3028 = vpop.f32.mrf.mxu0
  %v3029 = vadd.f32 %v2936, %v3028
  %3030 = vmatmul.bf16.gmra.mxu0 %v409
  %v3031 = vpop.f32.mrf.mxu0
  %v3032 = vadd.f32 %v2939, %v3031
  %v3033 = vpop.f32.mrf.mxu0
  %v3034 = vadd.f32 %v2941, %v3033
  %3035 = vmatmul.bf16.gmra.mxu0 %v417
  %v3036 = vpop.f32.mrf.mxu0
  %v3037 = vadd.f32 %v2944, %v3036
  %v3038 = vpop.f32.mrf.mxu0
  %3039 = vdwg.mxu0
  %3040 = vmatpush.bf16.msra.mxu0 %v2494
  %3041 = vmatpush.bf16.msra.mxu0 %v2493
  %3042 = vmatpush.bf16.msra.mxu0 %v2492
  %3043 = vmatpush.bf16.msra.mxu0 %v2491
  %3044 = vmatpush.bf16.msra.mxu0 %v2490
  %3045 = vmatpush.bf16.msra.mxu0 %v2489
  %3046 = vmatpush.bf16.msra.mxu0 %v2488
  %3047 = vmatpush.bf16.msra.mxu0 %v2487
  %3048 = vmatmul.bf16.gmra.mxu0 %v290
  %v3049 = vpop.f32.mrf.mxu0
  %v3050 = vadd.f32 %v2957, %v3049
  %v3051 = vpop.f32.mrf.mxu0
  %v3052 = vadd.f32 %v2959, %v3051
  %3053 = vmatmul.bf16.gmra.mxu0 %v298
  %v3054 = vpop.f32.mrf.mxu0
  %v3055 = vadd.f32 %v2962, %v3054
  %v3056 = vpop.f32.mrf.mxu0
  %v3057 = vadd.f32 %v2964, %v3056
  %3058 = vmatmul.bf16.gmra.mxu0 %v306
  %v3059 = vpop.f32.mrf.mxu0
  %v3060 = vadd.f32 %v2967, %v3059
  %v3061 = vpop.f32.mrf.mxu0
  %v3062 = vadd.f32 %v2969, %v3061
  %3063 = vmatmul.bf16.gmra.mxu0 %v314
  %v3064 = vpop.f32.mrf.mxu0
  %v3065 = vadd.f32 %v2972, %v3064
  %v3066 = vpop.f32.mrf.mxu0
  %v3067 = vadd.f32 %v2974, %v3066
  %3068 = vmatmul.bf16.gmra.mxu0 %v322
  %v3069 = vpop.f32.mrf.mxu0
  %v3070 = vadd.f32 %v2977, %v3069
  %v3071 = vpop.f32.mrf.mxu0
  %v3072 = vadd.f32 %v2979, %v3071
  %3073 = vmatmul.bf16.gmra.mxu0 %v330
  %v3074 = vpop.f32.mrf.mxu0
  %v3075 = vadd.f32 %v2982, %v3074
  %v3076 = vpop.f32.mrf.mxu0
  %v3077 = vadd.f32 %v2984, %v3076
  %3078 = vmatmul.bf16.gmra.mxu0 %v338
  %v3079 = vpop.f32.mrf.mxu0
  %v3080 = vadd.f32 %v2987, %v3079
  %v3081 = vpop.f32.mrf.mxu0
  %v3082 = vadd.f32 %v2989, %v3081
  %3083 = vmatmul.bf16.gmra.mxu0 %v346
  %v3084 = vpop.f32.mrf.mxu0
  %v3085 = vadd.f32 %v2992, %v3084
  %v3086 = vpop.f32.mrf.mxu0
  %v3087 = vadd.f32 %v2994, %v3086
  %3088 = vmatmul.bf16.gmra.mxu0 %v354
  %v3089 = vpop.f32.mrf.mxu0
  %v3090 = vadd.f32 %v2997, %v3089
  %v3091 = vpop.f32.mrf.mxu0
  %v3092 = vadd.f32 %v2999, %v3091
  %3093 = vmatmul.bf16.gmra.mxu0 %v362
  %v3094 = vpop.f32.mrf.mxu0
  %v3095 = vadd.f32 %v3002, %v3094
  %v3096 = vpop.f32.mrf.mxu0
  %v3097 = vadd.f32 %v3004, %v3096
  %3098 = vmatmul.bf16.gmra.mxu0 %v370
  %v3099 = vpop.f32.mrf.mxu0
  %v3100 = vadd.f32 %v3007, %v3099
  %v3101 = vpop.f32.mrf.mxu0
  %v3102 = vadd.f32 %v3009, %v3101
  %3103 = vmatmul.bf16.gmra.mxu0 %v378
  %v3104 = vpop.f32.mrf.mxu0
  %v3105 = vadd.f32 %v3012, %v3104
  %v3106 = vpop.f32.mrf.mxu0
  %v3107 = vadd.f32 %v3014, %v3106
  %3108 = vmatmul.bf16.gmra.mxu0 %v386
  %v3109 = vpop.f32.mrf.mxu0
  %v3110 = vadd.f32 %v3017, %v3109
  %v3111 = vpop.f32.mrf.mxu0
  %v3112 = vadd.f32 %v3019, %v3111
  %3113 = vmatmul.bf16.gmra.mxu0 %v394
  %v3114 = vpop.f32.mrf.mxu0
  %v3115 = vadd.f32 %v3022, %v3114
  %v3116 = vpop.f32.mrf.mxu0
  %v3117 = vadd.f32 %v3024, %v3116
  %3118 = vmatmul.bf16.gmra.mxu0 %v402
  %v3119 = vpop.f32.mrf.mxu0
  %v3120 = vadd.f32 %v3027, %v3119
  %v3121 = vpop.f32.mrf.mxu0
  %v3122 = vadd.f32 %v3029, %v3121
  %3123 = vmatmul.bf16.gmra.mxu0 %v410
  %v3124 = vpop.f32.mrf.mxu0
  %v3125 = vadd.f32 %v3032, %v3124
  %v3126 = vpop.f32.mrf.mxu0
  %v3127 = vadd.f32 %v3034, %v3126
  %3128 = vmatmul.bf16.gmra.mxu0 %v418
  %v3129 = vpop.f32.mrf.mxu0
  %v3130 = vadd.f32 %v3037, %v3129
  %v3131 = vpop.f32.mrf.mxu0
  %3132 = vdwg.mxu0
  %3133 = vmatpush.bf16.msra.mxu0 %v2502
  %3134 = vmatpush.bf16.msra.mxu0 %v2501
  %3135 = vmatpush.bf16.msra.mxu0 %v2500
  %3136 = vmatpush.bf16.msra.mxu0 %v2499
  %3137 = vmatpush.bf16.msra.mxu0 %v2498
  %3138 = vmatpush.bf16.msra.mxu0 %v2497
  %3139 = vmatpush.bf16.msra.mxu0 %v2496
  %3140 = vmatpush.bf16.msra.mxu0 %v2495
  %3141 = vmatmul.bf16.gmra.mxu0 %v291
  %v3142 = vpop.f32.mrf.mxu0
  %v3143 = vadd.f32 %v3050, %v3142
  %v3144 = vpop.f32.mrf.mxu0
  %v3145 = vadd.f32 %v3052, %v3144
  %3146 = vmatmul.bf16.gmra.mxu0 %v299
  %v3147 = vpop.f32.mrf.mxu0
  %v3148 = vadd.f32 %v3055, %v3147
  %v3149 = vpop.f32.mrf.mxu0
  %v3150 = vadd.f32 %v3057, %v3149
  %3151 = vmatmul.bf16.gmra.mxu0 %v307
  %v3152 = vpop.f32.mrf.mxu0
  %v3153 = vadd.f32 %v3060, %v3152
  %v3154 = vpop.f32.mrf.mxu0
  %v3155 = vadd.f32 %v3062, %v3154
  %3156 = vmatmul.bf16.gmra.mxu0 %v315
  %v3157 = vpop.f32.mrf.mxu0
  %v3158 = vadd.f32 %v3065, %v3157
  %v3159 = vpop.f32.mrf.mxu0
  %v3160 = vadd.f32 %v3067, %v3159
  %3161 = vmatmul.bf16.gmra.mxu0 %v323
  %v3162 = vpop.f32.mrf.mxu0
  %v3163 = vadd.f32 %v3070, %v3162
  %v3164 = vpop.f32.mrf.mxu0
  %v3165 = vadd.f32 %v3072, %v3164
  %3166 = vmatmul.bf16.gmra.mxu0 %v331
  %v3167 = vpop.f32.mrf.mxu0
  %v3168 = vadd.f32 %v3075, %v3167
  %v3169 = vpop.f32.mrf.mxu0
  %v3170 = vadd.f32 %v3077, %v3169
  %3171 = vmatmul.bf16.gmra.mxu0 %v339
  %v3172 = vpop.f32.mrf.mxu0
  %v3173 = vadd.f32 %v3080, %v3172
  %v3174 = vpop.f32.mrf.mxu0
  %v3175 = vadd.f32 %v3082, %v3174
  %3176 = vmatmul.bf16.gmra.mxu0 %v347
  %v3177 = vpop.f32.mrf.mxu0
  %v3178 = vadd.f32 %v3085, %v3177
  %v3179 = vpop.f32.mrf.mxu0
  %v3180 = vadd.f32 %v3087, %v3179
  %3181 = vmatmul.bf16.gmra.mxu0 %v355
  %v3182 = vpop.f32.mrf.mxu0
  %v3183 = vadd.f32 %v3090, %v3182
  %v3184 = vpop.f32.mrf.mxu0
  %v3185 = vadd.f32 %v3092, %v3184
  %3186 = vmatmul.bf16.gmra.mxu0 %v363
  %v3187 = vpop.f32.mrf.mxu0
  %v3188 = vadd.f32 %v3095, %v3187
  %v3189 = vpop.f32.mrf.mxu0
  %v3190 = vadd.f32 %v3097, %v3189
  %3191 = vmatmul.bf16.gmra.mxu0 %v371
  %v3192 = vpop.f32.mrf.mxu0
  %v3193 = vadd.f32 %v3100, %v3192
  %v3194 = vpop.f32.mrf.mxu0
  %v3195 = vadd.f32 %v3102, %v3194
  %3196 = vmatmul.bf16.gmra.mxu0 %v379
  %v3197 = vpop.f32.mrf.mxu0
  %v3198 = vadd.f32 %v3105, %v3197
  %v3199 = vpop.f32.mrf.mxu0
  %v3200 = vadd.f32 %v3107, %v3199
  %3201 = vmatmul.bf16.gmra.mxu0 %v387
  %v3202 = vpop.f32.mrf.mxu0
  %v3203 = vadd.f32 %v3110, %v3202
  %v3204 = vpop.f32.mrf.mxu0
  %v3205 = vadd.f32 %v3112, %v3204
  %3206 = vmatmul.bf16.gmra.mxu0 %v395
  %v3207 = vpop.f32.mrf.mxu0
  %v3208 = vadd.f32 %v3115, %v3207
  %v3209 = vpop.f32.mrf.mxu0
  %v3210 = vadd.f32 %v3117, %v3209
  %3211 = vmatmul.bf16.gmra.mxu0 %v403
  %v3212 = vpop.f32.mrf.mxu0
  %v3213 = vadd.f32 %v3120, %v3212
  %v3214 = vpop.f32.mrf.mxu0
  %v3215 = vadd.f32 %v3122, %v3214
  %3216 = vmatmul.bf16.gmra.mxu0 %v411
  %v3217 = vpop.f32.mrf.mxu0
  %v3218 = vadd.f32 %v3125, %v3217
  %v3219 = vpop.f32.mrf.mxu0
  %v3220 = vadd.f32 %v3127, %v3219
  %3221 = vmatmul.bf16.gmra.mxu0 %v419
  %v3222 = vpop.f32.mrf.mxu0
  %v3223 = vadd.f32 %v3130, %v3222
  %v3224 = vpop.f32.mrf.mxu0
  %3225 = vdwg.mxu0
  %3226 = vmatpush.bf16.msra.mxu0 0
  %3227 = vmatpush.bf16.msra.mxu0 %v2573
  %3228 = vmatpush.bf16.msra.mxu0 %v2508
  %3229 = vmatpush.bf16.msra.mxu0 %v2507
  %3230 = vmatpush.bf16.msra.mxu0 %v2506
  %3231 = vmatpush.bf16.msra.mxu0 %v2505
  %3232 = vmatpush.bf16.msra.mxu0 %v2504
  %3233 = vmatpush.bf16.msra.mxu0 %v2503
  %3234 = vmatmul.bf16.gmra.mxu0 %v964
  %v3235 = vpop.f32.mrf.mxu0
  %v3236 = vadd.f32 %v3143, %v3235
  %v3237 = vpop.f32.mrf.mxu0
  %v3238 = vadd.f32 %v3145, %v3237
  %3239 = vmatmul.bf16.gmra.mxu0 %v967
  %v3240 = vpop.f32.mrf.mxu0
  %v3241 = vadd.f32 %v3148, %v3240
  %v3242 = vpop.f32.mrf.mxu0
  %v3243 = vadd.f32 %v3150, %v3242
  %3244 = vmatmul.bf16.gmra.mxu0 %v970
  %v3245 = vpop.f32.mrf.mxu0
  %v3246 = vadd.f32 %v3153, %v3245
  %v3247 = vpop.f32.mrf.mxu0
  %v3248 = vadd.f32 %v3155, %v3247
  %3249 = vmatmul.bf16.gmra.mxu0 %v973
  %v3250 = vpop.f32.mrf.mxu0
  %v3251 = vadd.f32 %v3158, %v3250
  %v3252 = vpop.f32.mrf.mxu0
  %v3253 = vadd.f32 %v3160, %v3252
  %3254 = vmatmul.bf16.gmra.mxu0 %v976
  %v3255 = vpop.f32.mrf.mxu0
  %v3256 = vadd.f32 %v3163, %v3255
  %v3257 = vpop.f32.mrf.mxu0
  %v3258 = vadd.f32 %v3165, %v3257
  %3259 = vmatmul.bf16.gmra.mxu0 %v979
  %v3260 = vpop.f32.mrf.mxu0
  %v3261 = vadd.f32 %v3168, %v3260
  %v3262 = vpop.f32.mrf.mxu0
  %v3263 = vadd.f32 %v3170, %v3262
  %3264 = vmatmul.bf16.gmra.mxu0 %v982
  %v3265 = vpop.f32.mrf.mxu0
  %v3266 = vadd.f32 %v3173, %v3265
  %v3267 = vpop.f32.mrf.mxu0
  %v3268 = vadd.f32 %v3175, %v3267
  %3269 = vmatmul.bf16.gmra.mxu0 %v985
  %v3270 = vpop.f32.mrf.mxu0
  %v3271 = vadd.f32 %v3178, %v3270
  %v3272 = vpop.f32.mrf.mxu0
  %v3273 = vadd.f32 %v3180, %v3272
  %3274 = vmatmul.bf16.gmra.mxu0 %v988
  %v3275 = vpop.f32.mrf.mxu0
  %v3276 = vadd.f32 %v3183, %v3275
  %v3277 = vpop.f32.mrf.mxu0
  %v3278 = vadd.f32 %v3185, %v3277
  %3279 = vmatmul.bf16.gmra.mxu0 %v991
  %v3280 = vpop.f32.mrf.mxu0
  %v3281 = vadd.f32 %v3188, %v3280
  %v3282 = vpop.f32.mrf.mxu0
  %v3283 = vadd.f32 %v3190, %v3282
  %3284 = vmatmul.bf16.gmra.mxu0 %v994
  %v3285 = vpop.f32.mrf.mxu0
  %v3286 = vadd.f32 %v3193, %v3285
  %v3287 = vpop.f32.mrf.mxu0
  %v3288 = vadd.f32 %v3195, %v3287
  %3289 = vmatmul.bf16.gmra.mxu0 %v997
  %v3290 = vpop.f32.mrf.mxu0
  %v3291 = vadd.f32 %v3198, %v3290
  %v3292 = vpop.f32.mrf.mxu0
  %v3293 = vadd.f32 %v3200, %v3292
  %3294 = vmatmul.bf16.gmra.mxu0 %v1000
  %v3295 = vpop.f32.mrf.mxu0
  %v3296 = vadd.f32 %v3203, %v3295
  %v3297 = vpop.f32.mrf.mxu0
  %v3298 = vadd.f32 %v3205, %v3297
  %3299 = vmatmul.bf16.gmra.mxu0 %v1003
  %v3300 = vpop.f32.mrf.mxu0
  %v3301 = vadd.f32 %v3208, %v3300
  %v3302 = vpop.f32.mrf.mxu0
  %v3303 = vadd.f32 %v3210, %v3302
  %3304 = vmatmul.bf16.gmra.mxu0 %v1006
  %v3305 = vpop.f32.mrf.mxu0
  %v3306 = vadd.f32 %v3213, %v3305
  %v3307 = vpop.f32.mrf.mxu0
  %v3308 = vadd.f32 %v3215, %v3307
  %3309 = vmatmul.bf16.gmra.mxu0 %v1009
  %v3310 = vpop.f32.mrf.mxu0
  %v3311 = vadd.f32 %v3218, %v3310
  %v3312 = vpop.f32.mrf.mxu0
  %v3313 = vadd.f32 %v3220, %v3312
  %3314 = vmatmul.bf16.gmra.mxu0 %v1012
  %v3315 = vpop.f32.mrf.mxu0
  %v3316 = vadd.f32 %v3223, %v3315
  %v3317 = vpop.f32.mrf.mxu0
  %3318 = vdwg.mxu0
  %v3319 = vmax.f32 %v3236, 0.0
  %v3320 = vmax.f32 %v3238, 0.0
  %v3321 = vmax.f32 %v3241, 0.0
  %v3322 = vmax.f32 %v3243, 0.0
  %v3323 = vmax.f32 %v3246, 0.0
  %v3324 = vmax.f32 %v3248, 0.0
  %v3325 = vmax.f32 %v3251, 0.0
  %v3326 = vmax.f32 %v3253, 0.0
  %v3327 = vmax.f32 %v3256, 0.0
  %v3328 = vmax.f32 %v3258, 0.0
  %v3329 = vmax.f32 %v3261, 0.0
  %v3330 = vmax.f32 %v3263, 0.0
  %v3331 = vmax.f32 %v3266, 0.0
  %v3332 = vmax.f32 %v3268, 0.0
  %v3333 = vmax.f32 %v3271, 0.0
  %v3334 = vmax.f32 %v3273, 0.0
  %v3335 = vmax.f32 %v3276, 0.0
  %v3336 = vmax.f32 %v3278, 0.0
  %v3337 = vmax.f32 %v3281, 0.0
  %v3338 = vmax.f32 %v3283, 0.0
  %v3339 = vmax.f32 %v3286, 0.0
  %v3340 = vmax.f32 %v3288, 0.0
  %v3341 = vmax.f32 %v3291, 0.0
  %v3342 = vmax.f32 %v3293, 0.0
  %v3343 = vmax.f32 %v3296, 0.0
  %v3344 = vmax.f32 %v3298, 0.0
  %v3345 = vmax.f32 %v3301, 0.0
  %v3346 = vmax.f32 %v3303, 0.0
  %v3347 = vmax.f32 %v3306, 0.0
  %v3348 = vmax.f32 %v3308, 0.0
  %v3349 = vmax.f32 %v3311, 0.0
  %v3350 = vmax.f32 %v3313, 0.0
  %v3351 = vmax.f32 %v3316, 0.0
  %v3352 = vld [vmem:[%s5] sm:$0xff]
  %v3353 = vld [vmem:[%s5 + $0x8] sm:$0xff]
  %v3354 = vld [vmem:[%s5 + $0x10] sm:$0xff]
  %v3355 = vld [vmem:[%s5 + $0x18] sm:$0xff]
  %v3356 = vld [vmem:[%s5 + $0x20] sm:$0xff]
  %v3357 = vld [vmem:[%s5 + $0x28] sm:$0xff]
  %v3358 = vld [vmem:[%s5 + $0x30] sm:$0xff]
  %v3359 = vld [vmem:[%s5 + $0x38] sm:$0xff]
  %v3360 = vld [vmem:[%s5 + $0x40] sm:$0xff]
  %v3361 = vld [vmem:[%s5 + $0x48] sm:$0xff]
  %v3362 = vld [vmem:[%s5 + $0x50] sm:$0xff]
  %v3363 = vld [vmem:[%s5 + $0x58] sm:$0xff]
  %v3364 = vld [vmem:[%s5 + $0x60] sm:$0xff]
  %v3365 = vld [vmem:[%s5 + $0x68] sm:$0xff]
  %v3366 = vld [vmem:[%s5 + $0x70] sm:$0xff]
  %v3367 = vld [vmem:[%s5 + $0x78] sm:$0xff]
  %v3368 = vld [vmem:[%s5 + $0x80] sm:$0xff]
  %v3369 = vld [vmem:[%s5 + $0x88] sm:$0xff]
  %v3370 = vld [vmem:[%s5 + $0x90] sm:$0xff]
  %v3371 = vld [vmem:[%s5 + $0x98] sm:$0xff]
  %v3372 = vld [vmem:[%s5 + $0xa0] sm:$0xff]
  %v3373 = vld [vmem:[%s5 + $0xa8] sm:$0xff]
  %v3374 = vld [vmem:[%s5 + $0xb0] sm:$0xff]
  %v3375 = vld [vmem:[%s5 + $0xb8] sm:$0xff]
  %v3376 = vld [vmem:[%s5 + $0xc0] sm:$0xff]
  %v3377 = vld [vmem:[%s5 + $0xc8] sm:$0xff]
  %v3378 = vld [vmem:[%s5 + $0xd0] sm:$0xff]
  %v3379 = vld [vmem:[%s5 + $0xd8] sm:$0xff]
  %v3380 = vld [vmem:[%s5 + $0xe0] sm:$0xff]
  %v3381 = vld [vmem:[%s5 + $0xe8] sm:$0xff]
  %v3382 = vld [vmem:[%s5 + $0xf0] sm:$0xff]
  %v3383 = vld [vmem:[%s5 + $0xf8] sm:$0xff]
  %v3384 = vld [vmem:[%s5 + $0x100] sm:$0xff]
  %v3385 = vpack.c.bf16 %v3320, %v3319
  %v3386 = vpack.c.bf16 %v3322, %v3321
  %v3387 = vpack.c.bf16 %v3324, %v3323
  %v3388 = vpack.c.bf16 %v3326, %v3325
  %v3389 = vpack.c.bf16 %v3328, %v3327
  %v3390 = vpack.c.bf16 %v3330, %v3329
  %v3391 = vpack.c.bf16 %v3332, %v3331
  %v3392 = vpack.c.bf16 %v3334, %v3333
  %v3393 = vpack.c.bf16 %v3336, %v3335
  %v3394 = vpack.c.bf16 %v3338, %v3337
  %v3395 = vpack.c.bf16 %v3340, %v3339
  %v3396 = vpack.c.bf16 %v3342, %v3341
  %v3397 = vpack.c.bf16 %v3344, %v3343
  %v3398 = vpack.c.bf16 %v3346, %v3345
  %v3399 = vpack.c.bf16 %v3348, %v3347
  %v3400 = vpack.c.bf16 %v3350, %v3349
  %v3401 = vpack.c.bf16 %v3351, %v3351
  %v3402 = vld [vmem:[%s3 + $0x40] sm:$0xf]
  %v3403 = vld [vmem:[%s3 + $0x44] sm:$0xf]
  %v3404 = vld [vmem:[%s3 + $0x48] sm:$0xf]
  %v3405 = vld [vmem:[%s3 + $0x4c] sm:$0xf]
  %v3406 = vld [vmem:[%s3 + $0x50] sm:$0xf]
  %v3407 = vld [vmem:[%s3 + $0x54] sm:$0xf]
  %v3408 = vld [vmem:[%s3 + $0x58] sm:$0xf]
  %v3409 = vld [vmem:[%s3 + $0x5c] sm:$0xf]
  %v3410 = vld [vmem:[%s3 + $0x60] sm:$0xf]
  %v3411 = vld [vmem:[%s3 + $0x64] sm:$0xf]
  %v3412 = vld [vmem:[%s3 + $0x68] sm:$0xf]
  %v3413 = vld [vmem:[%s3 + $0x6c] sm:$0xf]
  %v3414 = vld [vmem:[%s3 + $0x70] sm:$0xf]
  %v3415 = vld [vmem:[%s3 + $0x74] sm:$0xf]
  %v3416 = vld [vmem:[%s3 + $0x78] sm:$0xf]
  %v3417 = vld [vmem:[%s3 + $0x7c] sm:$0xf]
  %v3434 = vunpack.c.l.b16 %v3402
  %v3435 = vunpack.c.l.b16 %v3403
  %v3436 = vunpack.c.l.b16 %v3404
  %v3437 = vunpack.c.l.b16 %v3405
  %v3438 = vunpack.c.l.b16 %v3406
  %v3439 = vunpack.c.l.b16 %v3407
  %v3440 = vunpack.c.l.b16 %v3408
  %v3441 = vunpack.c.l.b16 %v3409
  %v3442 = vunpack.c.l.b16 %v3410
  %v3443 = vunpack.c.l.b16 %v3411
  %v3444 = vunpack.c.l.b16 %v3412
  %v3445 = vunpack.c.l.b16 %v3413
  %v3446 = vunpack.c.l.b16 %v3414
  %v3447 = vunpack.c.l.b16 %v3415
  %v3448 = vunpack.c.l.b16 %v3416
  %v3449 = vunpack.c.l.b16 %v3417
  %v3450 = vpack.c.b16 %v3435, %v3434
  %v3451 = vpack.c.b16 %v3437, %v3436
  %v3452 = vpack.c.b16 %v3439, %v3438
  %v3453 = vpack.c.b16 %v3441, %v3440
  %v3454 = vpack.c.b16 %v3443, %v3442
  %v3455 = vpack.c.b16 %v3445, %v3444
  %v3456 = vpack.c.b16 %v3447, %v3446
  %v3457 = vpack.c.b16 %v3449, %v3448
  %3466 = vmatpush.bf16.msra.mxu0 %v3457
  %3467 = vmatpush.bf16.msra.mxu0 %v3456
  %3468 = vmatpush.bf16.msra.mxu0 %v3455
  %3469 = vmatpush.bf16.msra.mxu0 %v3454
  %3470 = vmatpush.bf16.msra.mxu0 %v3453
  %3471 = vmatpush.bf16.msra.mxu0 %v3452
  %3472 = vmatpush.bf16.msra.mxu0 %v3451
  %3473 = vmatpush.bf16.msra.mxu0 %v3450
  %3474 = vmatmul.bf16.gmra.mxu0 %v3385
  %v3475 = vpop.f32.mrf.mxu0
  %v3476 = vadd.f32 0.0, %v3475
  %v3477 = vpop.f32.mrf.mxu0
  %v3478 = vadd.f32 0.0, %v3477
  %3479 = vmatmul.bf16.gmra.mxu0 %v3386
  %v3480 = vpop.f32.mrf.mxu0
  %v3481 = vadd.f32 0.0, %v3480
  %v3482 = vpop.f32.mrf.mxu0
  %v3483 = vadd.f32 0.0, %v3482
  %3484 = vmatmul.bf16.gmra.mxu0 %v3387
  %v3485 = vpop.f32.mrf.mxu0
  %v3486 = vadd.f32 0.0, %v3485
  %v3487 = vpop.f32.mrf.mxu0
  %v3488 = vadd.f32 0.0, %v3487
  %3489 = vmatmul.bf16.gmra.mxu0 %v3388
  %v3490 = vpop.f32.mrf.mxu0
  %v3491 = vadd.f32 0.0, %v3490
  %v3492 = vpop.f32.mrf.mxu0
  %v3493 = vadd.f32 0.0, %v3492
  %3494 = vmatmul.bf16.gmra.mxu0 %v3389
  %v3495 = vpop.f32.mrf.mxu0
  %v3496 = vadd.f32 0.0, %v3495
  %v3497 = vpop.f32.mrf.mxu0
  %v3498 = vadd.f32 0.0, %v3497
  %3499 = vmatmul.bf16.gmra.mxu0 %v3390
  %v3500 = vpop.f32.mrf.mxu0
  %v3501 = vadd.f32 0.0, %v3500
  %v3502 = vpop.f32.mrf.mxu0
  %v3503 = vadd.f32 0.0, %v3502
  %3504 = vmatmul.bf16.gmra.mxu0 %v3391
  %v3505 = vpop.f32.mrf.mxu0
  %v3506 = vadd.f32 0.0, %v3505
  %v3507 = vpop.f32.mrf.mxu0
  %v3508 = vadd.f32 0.0, %v3507
  %3509 = vmatmul.bf16.gmra.mxu0 %v3392
  %v3510 = vpop.f32.mrf.mxu0
  %v3511 = vadd.f32 0.0, %v3510
  %v3512 = vpop.f32.mrf.mxu0
  %v3513 = vadd.f32 0.0, %v3512
  %3514 = vmatmul.bf16.gmra.mxu0 %v3393
  %v3515 = vpop.f32.mrf.mxu0
  %v3516 = vadd.f32 0.0, %v3515
  %v3517 = vpop.f32.mrf.mxu0
  %v3518 = vadd.f32 0.0, %v3517
  %3519 = vmatmul.bf16.gmra.mxu0 %v3394
  %v3520 = vpop.f32.mrf.mxu0
  %v3521 = vadd.f32 0.0, %v3520
  %v3522 = vpop.f32.mrf.mxu0
  %v3523 = vadd.f32 0.0, %v3522
  %3524 = vmatmul.bf16.gmra.mxu0 %v3395
  %v3525 = vpop.f32.mrf.mxu0
  %v3526 = vadd.f32 0.0, %v3525
  %v3527 = vpop.f32.mrf.mxu0
  %v3528 = vadd.f32 0.0, %v3527
  %3529 = vmatmul.bf16.gmra.mxu0 %v3396
  %v3530 = vpop.f32.mrf.mxu0
  %v3531 = vadd.f32 0.0, %v3530
  %v3532 = vpop.f32.mrf.mxu0
  %v3533 = vadd.f32 0.0, %v3532
  %3534 = vmatmul.bf16.gmra.mxu0 %v3397
  %v3535 = vpop.f32.mrf.mxu0
  %v3536 = vadd.f32 0.0, %v3535
  %v3537 = vpop.f32.mrf.mxu0
  %v3538 = vadd.f32 0.0, %v3537
  %3539 = vmatmul.bf16.gmra.mxu0 %v3398
  %v3540 = vpop.f32.mrf.mxu0
  %v3541 = vadd.f32 0.0, %v3540
  %v3542 = vpop.f32.mrf.mxu0
  %v3543 = vadd.f32 0.0, %v3542
  %3544 = vmatmul.bf16.gmra.mxu0 %v3399
  %v3545 = vpop.f32.mrf.mxu0
  %v3546 = vadd.f32 0.0, %v3545
  %v3547 = vpop.f32.mrf.mxu0
  %v3548 = vadd.f32 0.0, %v3547
  %3549 = vmatmul.bf16.gmra.mxu0 %v3400
  %v3550 = vpop.f32.mrf.mxu0
  %v3551 = vadd.f32 0.0, %v3550
  %v3552 = vpop.f32.mrf.mxu0
  %v3553 = vadd.f32 0.0, %v3552
  %3554 = vmatmul.bf16.gmra.mxu0 %v3401
  %v3555 = vpop.f32.mrf.mxu0
  %v3556 = vadd.f32 0.0, %v3555
  %v3557 = vpop.f32.mrf.mxu0
  %3558 = vdwg.mxu0
  %v3559 = vadd.f32 %v3352, %v3476
  %v3560 = vadd.f32 %v3353, %v3478
  %v3561 = vadd.f32 %v3354, %v3481
  %v3562 = vadd.f32 %v3355, %v3483
  %v3563 = vadd.f32 %v3356, %v3486
  %v3564 = vadd.f32 %v3357, %v3488
  %v3565 = vadd.f32 %v3358, %v3491
  %v3566 = vadd.f32 %v3359, %v3493
  %v3567 = vadd.f32 %v3360, %v3496
  %v3568 = vadd.f32 %v3361, %v3498
  %v3569 = vadd.f32 %v3362, %v3501
  %v3570 = vadd.f32 %v3363, %v3503
  %v3571 = vadd.f32 %v3364, %v3506
  %v3572 = vadd.f32 %v3365, %v3508
  %v3573 = vadd.f32 %v3366, %v3511
  %v3574 = vadd.f32 %v3367, %v3513
  %v3575 = vadd.f32 %v3368, %v3516
  %v3576 = vadd.f32 %v3369, %v3518
  %v3577 = vadd.f32 %v3370, %v3521
  %v3578 = vadd.f32 %v3371, %v3523
  %v3579 = vadd.f32 %v3372, %v3526
  %v3580 = vadd.f32 %v3373, %v3528
  %v3581 = vadd.f32 %v3374, %v3531
  %v3582 = vadd.f32 %v3375, %v3533
  %v3583 = vadd.f32 %v3376, %v3536
  %v3584 = vadd.f32 %v3377, %v3538
  %v3585 = vadd.f32 %v3378, %v3541
  %v3586 = vadd.f32 %v3379, %v3543
  %v3587 = vadd.f32 %v3380, %v3546
  %v3588 = vadd.f32 %v3381, %v3548
  %v3589 = vadd.f32 %v3382, %v3551
  %v3590 = vadd.f32 %v3383, %v3553
  %v3591 = vadd.f32 %v3384, %v3556
  %3592 = vst [vmem:[%s5] sm:$0xff] %v3559
  %3593 = vst [vmem:[%s5 + $0x8] sm:$0xff] %v3560
  %3594 = vst [vmem:[%s5 + $0x10] sm:$0xff] %v3561
  %3595 = vst [vmem:[%s5 + $0x18] sm:$0xff] %v3562
  %3596 = vst [vmem:[%s5 + $0x20] sm:$0xff] %v3563
  %3597 = vst [vmem:[%s5 + $0x28] sm:$0xff] %v3564
  %3598 = vst [vmem:[%s5 + $0x30] sm:$0xff] %v3565
  %3599 = vst [vmem:[%s5 + $0x38] sm:$0xff] %v3566
  %3600 = vst [vmem:[%s5 + $0x40] sm:$0xff] %v3567
  %3601 = vst [vmem:[%s5 + $0x48] sm:$0xff] %v3568
  %3602 = vst [vmem:[%s5 + $0x50] sm:$0xff] %v3569
  %3603 = vst [vmem:[%s5 + $0x58] sm:$0xff] %v3570
  %3604 = vst [vmem:[%s5 + $0x60] sm:$0xff] %v3571
  %3605 = vst [vmem:[%s5 + $0x68] sm:$0xff] %v3572
  %3606 = vst [vmem:[%s5 + $0x70] sm:$0xff] %v3573
  %3607 = vst [vmem:[%s5 + $0x78] sm:$0xff] %v3574
  %3608 = vst [vmem:[%s5 + $0x80] sm:$0xff] %v3575
  %3609 = vst [vmem:[%s5 + $0x88] sm:$0xff] %v3576
  %3610 = vst [vmem:[%s5 + $0x90] sm:$0xff] %v3577
  %3611 = vst [vmem:[%s5 + $0x98] sm:$0xff] %v3578
  %3612 = vst [vmem:[%s5 + $0xa0] sm:$0xff] %v3579
  %3613 = vst [vmem:[%s5 + $0xa8] sm:$0xff] %v3580
  %3614 = vst [vmem:[%s5 + $0xb0] sm:$0xff] %v3581
  %3615 = vst [vmem:[%s5 + $0xb8] sm:$0xff] %v3582
  %3616 = vst [vmem:[%s5 + $0xc0] sm:$0xff] %v3583
  %3617 = vst [vmem:[%s5 + $0xc8] sm:$0xff] %v3584
  %3618 = vst [vmem:[%s5 + $0xd0] sm:$0xff] %v3585
  %3619 = vst [vmem:[%s5 + $0xd8] sm:$0xff] %v3586
  %3620 = vst [vmem:[%s5 + $0xe0] sm:$0xff] %v3587
  %3621 = vst [vmem:[%s5 + $0xe8] sm:$0xff] %v3588
  %3622 = vst [vmem:[%s5 + $0xf0] sm:$0xff] %v3589
  %3623 = vst [vmem:[%s5 + $0xf8] sm:$0xff] %v3590
  %3624 = vst [vmem:[%s5 + $0x100] sm:$0xff] %v3591
  %v3625 = vld [vmem:[%s1 + $0x8] sm:$0xf]
  %v3626 = vld [vmem:[%s1 + $0x18] sm:$0xf]
  %v3627 = vld [vmem:[%s1 + $0x28] sm:$0xf]
  %v3628 = vld [vmem:[%s1 + $0x38] sm:$0xf]
  %v3629 = vld [vmem:[%s1 + $0x48] sm:$0xf]
  %v3630 = vld [vmem:[%s1 + $0x58] sm:$0xf]
  %v3631 = vld [vmem:[%s1 + $0x68] sm:$0xf]
  %v3632 = vld [vmem:[%s1 + $0x78] sm:$0xf]
  %v3633 = vld [vmem:[%s1 + $0x88] sm:$0xf]
  %v3634 = vld [vmem:[%s1 + $0x98] sm:$0xf]
  %v3635 = vld [vmem:[%s1 + $0xa8] sm:$0xf]
  %v3636 = vld [vmem:[%s1 + $0xb8] sm:$0xf]
  %v3637 = vld [vmem:[%s1 + $0xc8] sm:$0xf]
  %v3638 = vld [vmem:[%s1 + $0xd8] sm:$0xf]
  %v3639 = vld [vmem:[%s1 + $0xe8] sm:$0xf]
  %v3640 = vld [vmem:[%s1 + $0xf8] sm:$0xf]
  %v3641 = vld [vmem:[%s1 + $0x108] sm:$0xf]
  %v3642 = vld [vmem:[%s1 + $0x118] sm:$0xf]
  %v3643 = vld [vmem:[%s1 + $0x128] sm:$0xf]
  %v3644 = vld [vmem:[%s1 + $0x138] sm:$0xf]
  %v3645 = vld [vmem:[%s1 + $0x148] sm:$0xf]
  %v3646 = vld [vmem:[%s1 + $0x158] sm:$0xf]
  %v3647 = vld [vmem:[%s1 + $0x168] sm:$0xf]
  %v3648 = vld [vmem:[%s1 + $0x178] sm:$0xf]
  %v3649 = vld [vmem:[%s1 + $0x188] sm:$0xf]
  %v3650 = vld [vmem:[%s1 + $0x198] sm:$0xf]
  %v3651 = vld [vmem:[%s1 + $0x1a8] sm:$0xf]
  %v3652 = vld [vmem:[%s1 + $0x1b8] sm:$0xf]
  %v3653 = vld [vmem:[%s1 + $0x1c8] sm:$0xf]
  %v3654 = vld [vmem:[%s1 + $0x1d8] sm:$0xf]
  %v3655 = vld [vmem:[%s1 + $0x1e8] sm:$0xf]
  %v3656 = vld [vmem:[%s1 + $0x1f8] sm:$0xf]
  %v3657 = vld [vmem:[%s1 + $0x208] sm:$0xf]
  %v3658 = vld [vmem:[%s1 + $0x218] sm:$0xf]
  %v3659 = vld [vmem:[%s1 + $0x228] sm:$0xf]
  %v3660 = vld [vmem:[%s1 + $0x238] sm:$0xf]
  %v3661 = vld [vmem:[%s1 + $0x248] sm:$0xf]
  %v3662 = vld [vmem:[%s1 + $0x258] sm:$0xf]
  %v3663 = vld [vmem:[%s1 + $0x268] sm:$0xf]
  %v3664 = vld [vmem:[%s1 + $0x278] sm:$0xf]
  %v3665 = vld [vmem:[%s1 + $0x288] sm:$0xf]
  %v3666 = vld [vmem:[%s1 + $0x298] sm:$0xf]
  %v3667 = vld [vmem:[%s1 + $0x2a8] sm:$0xf]
  %v3668 = vld [vmem:[%s1 + $0x2b8] sm:$0xf]
  %v3669 = vld [vmem:[%s1 + $0x2c8] sm:$0xf]
  %v3670 = vld [vmem:[%s1 + $0x2d8] sm:$0xf]
  %v3671 = vld [vmem:[%s1 + $0x2e8] sm:$0xf]
  %v3672 = vld [vmem:[%s1 + $0x2f8] sm:$0xf]
  %v3673 = vld [vmem:[%s1 + $0x308] sm:$0xf]
  %v3674 = vld [vmem:[%s1 + $0x318] sm:$0xf]
  %v3675 = vld [vmem:[%s1 + $0x328] sm:$0xf]
  %v3676 = vld [vmem:[%s1 + $0x338] sm:$0xf]
  %v3677 = vld [vmem:[%s1 + $0x348] sm:$0xf]
  %v3678 = vld [vmem:[%s1 + $0x358] sm:$0xf]
  %v3679 = vld [vmem:[%s1 + $0x368] sm:$0xf]
  %v3680 = vld [vmem:[%s1 + $0x378] sm:$0xf]
  %v3681 = vld [vmem:[%s1 + $0x388] sm:$0xf]
  %v3682 = vld [vmem:[%s1 + $0x398] sm:$0xf]
  %v3683 = vld [vmem:[%s1 + $0x3a8] sm:$0xf]
  %v3684 = vld [vmem:[%s1 + $0x3b8] sm:$0xf]
  %v3685 = vld [vmem:[%s1 + $0x3c8] sm:$0xf]
  %v3686 = vld [vmem:[%s1 + $0x3d8] sm:$0xf]
  %v3687 = vld [vmem:[%s1 + $0x3e8] sm:$0xf]
  %v3688 = vld [vmem:[%s1 + $0x3f8] sm:$0xf]
  %v3689 = vld [vmem:[%s1 + $0x408] sm:$0xf]
  %v3690 = vld [vmem:[%s1 + $0x418] sm:$0xf]
  %v3691 = vld [vmem:[%s1 + $0x428] sm:$0xf]
  %v3692 = vld [vmem:[%s1 + $0x438] sm:$0xf]
  %v3693 = vld [vmem:[%s1 + $0x448] sm:$0xf]
  %v3694 = vld [vmem:[%s1 + $0x458] sm:$0xf]
  %v3695 = vld [vmem:[%s1 + $0x468] sm:$0xf]
  %v3696 = vld [vmem:[%s1 + $0x478] sm:$0xf]
  %v3697 = vld [vmem:[%s1 + $0x488] sm:$0xf]
  %v3698 = vld [vmem:[%s1 + $0x498] sm:$0xf]
  %v3699 = vld [vmem:[%s1 + $0x4a8] sm:$0xf]
  %v3700 = vld [vmem:[%s1 + $0x4b8] sm:$0xf]
  %v3701 = vld [vmem:[%s1 + $0x4c8] sm:$0xf]
  %v3702 = vld [vmem:[%s1 + $0x4d8] sm:$0xf]
  %v3703 = vld [vmem:[%s1 + $0x4e8] sm:$0xf]
  %v3704 = vld [vmem:[%s1 + $0x4f8] sm:$0xf]
  %v3705 = vld [vmem:[%s1 + $0x508] sm:$0xf]
  %v3706 = vld [vmem:[%s1 + $0x518] sm:$0xf]
  %v3707 = vld [vmem:[%s1 + $0x528] sm:$0xf]
  %v3708 = vld [vmem:[%s1 + $0x538] sm:$0xf]
  %v3709 = vld [vmem:[%s1 + $0x548] sm:$0xf]
  %v3710 = vld [vmem:[%s1 + $0x558] sm:$0xf]
  %v3711 = vld [vmem:[%s1 + $0x568] sm:$0xf]
  %v3712 = vld [vmem:[%s1 + $0x578] sm:$0xf]
  %v3713 = vld [vmem:[%s1 + $0x588] sm:$0xf]
  %v3714 = vld [vmem:[%s1 + $0x598] sm:$0xf]
  %v3715 = vld [vmem:[%s1 + $0x5a8] sm:$0xf]
  %v3716 = vld [vmem:[%s1 + $0x5b8] sm:$0xf]
  %v3717 = vld [vmem:[%s1 + $0x5c8] sm:$0xf]
  %v3718 = vld [vmem:[%s1 + $0x5d8] sm:$0xf]
  %v3719 = vld [vmem:[%s1 + $0x5e8] sm:$0xf]
  %v3720 = vld [vmem:[%s1 + $0x5f8] sm:$0xf]
  %v3721 = vld [vmem:[%s1 + $0x608] sm:$0xf]
  %v3722 = vld [vmem:[%s1 + $0x618] sm:$0xf]
  %v3723 = vld [vmem:[%s1 + $0x628] sm:$0xf]
  %v3724 = vld [vmem:[%s1 + $0x638] sm:$0xf]
  %v3725 = vld [vmem:[%s1 + $0x648] sm:$0xf]
  %v3726 = vld [vmem:[%s1 + $0x658] sm:$0xf]
  %v3727 = vld [vmem:[%s1 + $0x668] sm:$0xf]
  %v3728 = vld [vmem:[%s1 + $0x678] sm:$0xf]
  %v3729 = vld [vmem:[%s1 + $0x688] sm:$0xf]
  %v3730 = vld [vmem:[%s1 + $0x698] sm:$0xf]
  %v3731 = vld [vmem:[%s1 + $0x6a8] sm:$0xf]
  %v3732 = vld [vmem:[%s1 + $0x6b8] sm:$0xf]
  %v3733 = vld [vmem:[%s1 + $0x6c8] sm:$0xf]
  %v3734 = vld [vmem:[%s1 + $0x6d8] sm:$0xf]
  %v3735 = vld [vmem:[%s1 + $0x6e8] sm:$0xf]
  %v3736 = vld [vmem:[%s1 + $0x6f8] sm:$0xf]
  %v3737 = vld [vmem:[%s1 + $0x708] sm:$0xf]
  %v3738 = vld [vmem:[%s1 + $0x718] sm:$0xf]
  %v3739 = vld [vmem:[%s1 + $0x728] sm:$0xf]
  %v3740 = vld [vmem:[%s1 + $0x738] sm:$0xf]
  %v3741 = vld [vmem:[%s1 + $0x748] sm:$0xf]
  %v3742 = vld [vmem:[%s1 + $0x758] sm:$0xf]
  %v3743 = vld [vmem:[%s1 + $0x768] sm:$0xf]
  %v3744 = vld [vmem:[%s1 + $0x778] sm:$0xf]
  %v3745 = vld [vmem:[%s1 + $0x788] sm:$0xf]
  %v3746 = vld [vmem:[%s1 + $0x798] sm:$0xf]
  %v3747 = vld [vmem:[%s1 + $0x7a8] sm:$0xf]
  %v3748 = vld [vmem:[%s1 + $0x7b8] sm:$0xf]
  %v3749 = vld [vmem:[%s1 + $0x7c8] sm:$0xf]
  %v3750 = vld [vmem:[%s2 + $0x2] sm:$0x1]
  %v3752 = vperm.slane %v3750, 0
  %v3879 = vunpack.c.l.b16 %v3625
  %v3880 = vunpack.c.l.b16 %v3626
  %v3881 = vunpack.c.l.b16 %v3627
  %v3882 = vunpack.c.l.b16 %v3628
  %v3883 = vunpack.c.l.b16 %v3629
  %v3884 = vunpack.c.l.b16 %v3630
  %v3885 = vunpack.c.l.b16 %v3631
  %v3886 = vunpack.c.l.b16 %v3632
  %v3887 = vunpack.c.l.b16 %v3633
  %v3888 = vunpack.c.l.b16 %v3634
  %v3889 = vunpack.c.l.b16 %v3635
  %v3890 = vunpack.c.l.b16 %v3636
  %v3891 = vunpack.c.l.b16 %v3637
  %v3892 = vunpack.c.l.b16 %v3638
  %v3893 = vunpack.c.l.b16 %v3639
  %v3894 = vunpack.c.l.b16 %v3640
  %v3895 = vunpack.c.l.b16 %v3641
  %v3896 = vunpack.c.l.b16 %v3642
  %v3897 = vunpack.c.l.b16 %v3643
  %v3898 = vunpack.c.l.b16 %v3644
  %v3899 = vunpack.c.l.b16 %v3645
  %v3900 = vunpack.c.l.b16 %v3646
  %v3901 = vunpack.c.l.b16 %v3647
  %v3902 = vunpack.c.l.b16 %v3648
  %v3903 = vunpack.c.l.b16 %v3649
  %v3904 = vunpack.c.l.b16 %v3650
  %v3905 = vunpack.c.l.b16 %v3651
  %v3906 = vunpack.c.l.b16 %v3652
  %v3907 = vunpack.c.l.b16 %v3653
  %v3908 = vunpack.c.l.b16 %v3654
  %v3909 = vunpack.c.l.b16 %v3655
  %v3910 = vunpack.c.l.b16 %v3656
  %v3911 = vunpack.c.l.b16 %v3657
  %v3912 = vunpack.c.l.b16 %v3658
  %v3913 = vunpack.c.l.b16 %v3659
  %v3914 = vunpack.c.l.b16 %v3660
  %v3915 = vunpack.c.l.b16 %v3661
  %v3916 = vunpack.c.l.b16 %v3662
  %v3917 = vunpack.c.l.b16 %v3663
  %v3918 = vunpack.c.l.b16 %v3664
  %v3919 = vunpack.c.l.b16 %v3665
  %v3920 = vunpack.c.l.b16 %v3666
  %v3921 = vunpack.c.l.b16 %v3667
  %v3922 = vunpack.c.l.b16 %v3668
  %v3923 = vunpack.c.l.b16 %v3669
  %v3924 = vunpack.c.l.b16 %v3670
  %v3925 = vunpack.c.l.b16 %v3671
  %v3926 = vunpack.c.l.b16 %v3672
  %v3927 = vunpack.c.l.b16 %v3673
  %v3928 = vunpack.c.l.b16 %v3674
  %v3929 = vunpack.c.l.b16 %v3675
  %v3930 = vunpack.c.l.b16 %v3676
  %v3931 = vunpack.c.l.b16 %v3677
  %v3932 = vunpack.c.l.b16 %v3678
  %v3933 = vunpack.c.l.b16 %v3679
  %v3934 = vunpack.c.l.b16 %v3680
  %v3935 = vunpack.c.l.b16 %v3681
  %v3936 = vunpack.c.l.b16 %v3682
  %v3937 = vunpack.c.l.b16 %v3683
  %v3938 = vunpack.c.l.b16 %v3684
  %v3939 = vunpack.c.l.b16 %v3685
  %v3940 = vunpack.c.l.b16 %v3686
  %v3941 = vunpack.c.l.b16 %v3687
  %v3942 = vunpack.c.l.b16 %v3688
  %v3943 = vunpack.c.l.b16 %v3689
  %v3944 = vunpack.c.l.b16 %v3690
  %v3945 = vunpack.c.l.b16 %v3691
  %v3946 = vunpack.c.l.b16 %v3692
  %v3947 = vunpack.c.l.b16 %v3693
  %v3948 = vunpack.c.l.b16 %v3694
  %v3949 = vunpack.c.l.b16 %v3695
  %v3950 = vunpack.c.l.b16 %v3696
  %v3951 = vunpack.c.l.b16 %v3697
  %v3952 = vunpack.c.l.b16 %v3698
  %v3953 = vunpack.c.l.b16 %v3699
  %v3954 = vunpack.c.l.b16 %v3700
  %v3955 = vunpack.c.l.b16 %v3701
  %v3956 = vunpack.c.l.b16 %v3702
  %v3957 = vunpack.c.l.b16 %v3703
  %v3958 = vunpack.c.l.b16 %v3704
  %v3959 = vunpack.c.l.b16 %v3705
  %v3960 = vunpack.c.l.b16 %v3706
  %v3961 = vunpack.c.l.b16 %v3707
  %v3962 = vunpack.c.l.b16 %v3708
  %v3963 = vunpack.c.l.b16 %v3709
  %v3964 = vunpack.c.l.b16 %v3710
  %v3965 = vunpack.c.l.b16 %v3711
  %v3966 = vunpack.c.l.b16 %v3712
  %v3967 = vunpack.c.l.b16 %v3713
  %v3968 = vunpack.c.l.b16 %v3714
  %v3969 = vunpack.c.l.b16 %v3715
  %v3970 = vunpack.c.l.b16 %v3716
  %v3971 = vunpack.c.l.b16 %v3717
  %v3972 = vunpack.c.l.b16 %v3718
  %v3973 = vunpack.c.l.b16 %v3719
  %v3974 = vunpack.c.l.b16 %v3720
  %v3975 = vunpack.c.l.b16 %v3721
  %v3976 = vunpack.c.l.b16 %v3722
  %v3977 = vunpack.c.l.b16 %v3723
  %v3978 = vunpack.c.l.b16 %v3724
  %v3979 = vunpack.c.l.b16 %v3725
  %v3980 = vunpack.c.l.b16 %v3726
  %v3981 = vunpack.c.l.b16 %v3727
  %v3982 = vunpack.c.l.b16 %v3728
  %v3983 = vunpack.c.l.b16 %v3729
  %v3984 = vunpack.c.l.b16 %v3730
  %v3985 = vunpack.c.l.b16 %v3731
  %v3986 = vunpack.c.l.b16 %v3732
  %v3987 = vunpack.c.l.b16 %v3733
  %v3988 = vunpack.c.l.b16 %v3734
  %v3989 = vunpack.c.l.b16 %v3735
  %v3990 = vunpack.c.l.b16 %v3736
  %v3991 = vunpack.c.l.b16 %v3737
  %v3992 = vunpack.c.l.b16 %v3738
  %v3993 = vunpack.c.l.b16 %v3739
  %v3994 = vunpack.c.l.b16 %v3740
  %v3995 = vunpack.c.l.b16 %v3741
  %v3996 = vunpack.c.l.b16 %v3742
  %v3997 = vunpack.c.l.b16 %v3743
  %v3998 = vunpack.c.l.b16 %v3744
  %v3999 = vunpack.c.l.b16 %v3745
  %v4000 = vunpack.c.l.b16 %v3746
  %v4001 = vunpack.c.l.b16 %v3747
  %v4002 = vunpack.c.l.b16 %v3748
  %v4003 = vunpack.c.l.b16 %v3749
  %v4004 = vpack.c.b16 %v3880, %v3879
  %v4005 = vpack.c.b16 %v3882, %v3881
  %v4006 = vpack.c.b16 %v3884, %v3883
  %v4007 = vpack.c.b16 %v3886, %v3885
  %v4008 = vpack.c.b16 %v3888, %v3887
  %v4009 = vpack.c.b16 %v3890, %v3889
  %v4010 = vpack.c.b16 %v3892, %v3891
  %v4011 = vpack.c.b16 %v3894, %v3893
  %v4012 = vpack.c.b16 %v3896, %v3895
  %v4013 = vpack.c.b16 %v3898, %v3897
  %v4014 = vpack.c.b16 %v3900, %v3899
  %v4015 = vpack.c.b16 %v3902, %v3901
  %v4016 = vpack.c.b16 %v3904, %v3903
  %v4017 = vpack.c.b16 %v3906, %v3905
  %v4018 = vpack.c.b16 %v3908, %v3907
  %v4019 = vpack.c.b16 %v3910, %v3909
  %v4020 = vpack.c.b16 %v3912, %v3911
  %v4021 = vpack.c.b16 %v3914, %v3913
  %v4022 = vpack.c.b16 %v3916, %v3915
  %v4023 = vpack.c.b16 %v3918, %v3917
  %v4024 = vpack.c.b16 %v3920, %v3919
  %v4025 = vpack.c.b16 %v3922, %v3921
  %v4026 = vpack.c.b16 %v3924, %v3923
  %v4027 = vpack.c.b16 %v3926, %v3925
  %v4028 = vpack.c.b16 %v3928, %v3927
  %v4029 = vpack.c.b16 %v3930, %v3929
  %v4030 = vpack.c.b16 %v3932, %v3931
  %v4031 = vpack.c.b16 %v3934, %v3933
  %v4032 = vpack.c.b16 %v3936, %v3935
  %v4033 = vpack.c.b16 %v3938, %v3937
  %v4034 = vpack.c.b16 %v3940, %v3939
  %v4035 = vpack.c.b16 %v3942, %v3941
  %v4036 = vpack.c.b16 %v3944, %v3943
  %v4037 = vpack.c.b16 %v3946, %v3945
  %v4038 = vpack.c.b16 %v3948, %v3947
  %v4039 = vpack.c.b16 %v3950, %v3949
  %v4040 = vpack.c.b16 %v3952, %v3951
  %v4041 = vpack.c.b16 %v3954, %v3953
  %v4042 = vpack.c.b16 %v3956, %v3955
  %v4043 = vpack.c.b16 %v3958, %v3957
  %v4044 = vpack.c.b16 %v3960, %v3959
  %v4045 = vpack.c.b16 %v3962, %v3961
  %v4046 = vpack.c.b16 %v3964, %v3963
  %v4047 = vpack.c.b16 %v3966, %v3965
  %v4048 = vpack.c.b16 %v3968, %v3967
  %v4049 = vpack.c.b16 %v3970, %v3969
  %v4050 = vpack.c.b16 %v3972, %v3971
  %v4051 = vpack.c.b16 %v3974, %v3973
  %v4052 = vpack.c.b16 %v3976, %v3975
  %v4053 = vpack.c.b16 %v3978, %v3977
  %v4054 = vpack.c.b16 %v3980, %v3979
  %v4055 = vpack.c.b16 %v3982, %v3981
  %v4056 = vpack.c.b16 %v3984, %v3983
  %v4057 = vpack.c.b16 %v3986, %v3985
  %v4058 = vpack.c.b16 %v3988, %v3987
  %v4059 = vpack.c.b16 %v3990, %v3989
  %v4060 = vpack.c.b16 %v3992, %v3991
  %v4061 = vpack.c.b16 %v3994, %v3993
  %v4062 = vpack.c.b16 %v3996, %v3995
  %v4063 = vpack.c.b16 %v3998, %v3997
  %v4064 = vpack.c.b16 %v4000, %v3999
  %v4065 = vpack.c.b16 %v4002, %v4001
  %v4066 = vpack.c.b16 %v4003, %v4003
  %v4130 = vsel %vm1014, %v4066, 0
  %4132 = vmatpush.bf16.msra.mxu0 %v4011
  %4133 = vmatpush.bf16.msra.mxu0 %v4010
  %4134 = vmatpush.bf16.msra.mxu0 %v4009
  %4135 = vmatpush.bf16.msra.mxu0 %v4008
  %4136 = vmatpush.bf16.msra.mxu0 %v4007
  %4137 = vmatpush.bf16.msra.mxu0 %v4006
  %4138 = vmatpush.bf16.msra.mxu0 %v4005
  %4139 = vmatpush.bf16.msra.mxu0 %v4004
  %4140 = vmatmul.bf16.gmra.mxu0 %v285
  %v4141 = vpop.f32.mrf.mxu0
  %v4142 = vadd.f32 %v3752, %v4141
  %v4143 = vpop.f32.mrf.mxu0
  %v4144 = vadd.f32 %v3752, %v4143
  %4145 = vmatmul.bf16.gmra.mxu0 %v293
  %v4146 = vpop.f32.mrf.mxu0
  %v4147 = vadd.f32 %v3752, %v4146
  %v4148 = vpop.f32.mrf.mxu0
  %v4149 = vadd.f32 %v3752, %v4148
  %4150 = vmatmul.bf16.gmra.mxu0 %v301
  %v4151 = vpop.f32.mrf.mxu0
  %v4152 = vadd.f32 %v3752, %v4151
  %v4153 = vpop.f32.mrf.mxu0
  %v4154 = vadd.f32 %v3752, %v4153
  %4155 = vmatmul.bf16.gmra.mxu0 %v309
  %v4156 = vpop.f32.mrf.mxu0
  %v4157 = vadd.f32 %v3752, %v4156
  %v4158 = vpop.f32.mrf.mxu0
  %v4159 = vadd.f32 %v3752, %v4158
  %4160 = vmatmul.bf16.gmra.mxu0 %v317
  %v4161 = vpop.f32.mrf.mxu0
  %v4162 = vadd.f32 %v3752, %v4161
  %v4163 = vpop.f32.mrf.mxu0
  %v4164 = vadd.f32 %v3752, %v4163
  %4165 = vmatmul.bf16.gmra.mxu0 %v325
  %v4166 = vpop.f32.mrf.mxu0
  %v4167 = vadd.f32 %v3752, %v4166
  %v4168 = vpop.f32.mrf.mxu0
  %v4169 = vadd.f32 %v3752, %v4168
  %4170 = vmatmul.bf16.gmra.mxu0 %v333
  %v4171 = vpop.f32.mrf.mxu0
  %v4172 = vadd.f32 %v3752, %v4171
  %v4173 = vpop.f32.mrf.mxu0
  %v4174 = vadd.f32 %v3752, %v4173
  %4175 = vmatmul.bf16.gmra.mxu0 %v341
  %v4176 = vpop.f32.mrf.mxu0
  %v4177 = vadd.f32 %v3752, %v4176
  %v4178 = vpop.f32.mrf.mxu0
  %v4179 = vadd.f32 %v3752, %v4178
  %4180 = vmatmul.bf16.gmra.mxu0 %v349
  %v4181 = vpop.f32.mrf.mxu0
  %v4182 = vadd.f32 %v3752, %v4181
  %v4183 = vpop.f32.mrf.mxu0
  %v4184 = vadd.f32 %v3752, %v4183
  %4185 = vmatmul.bf16.gmra.mxu0 %v357
  %v4186 = vpop.f32.mrf.mxu0
  %v4187 = vadd.f32 %v3752, %v4186
  %v4188 = vpop.f32.mrf.mxu0
  %v4189 = vadd.f32 %v3752, %v4188
  %4190 = vmatmul.bf16.gmra.mxu0 %v365
  %v4191 = vpop.f32.mrf.mxu0
  %v4192 = vadd.f32 %v3752, %v4191
  %v4193 = vpop.f32.mrf.mxu0
  %v4194 = vadd.f32 %v3752, %v4193
  %4195 = vmatmul.bf16.gmra.mxu0 %v373
  %v4196 = vpop.f32.mrf.mxu0
  %v4197 = vadd.f32 %v3752, %v4196
  %v4198 = vpop.f32.mrf.mxu0
  %v4199 = vadd.f32 %v3752, %v4198
  %4200 = vmatmul.bf16.gmra.mxu0 %v381
  %v4201 = vpop.f32.mrf.mxu0
  %v4202 = vadd.f32 %v3752, %v4201
  %v4203 = vpop.f32.mrf.mxu0
  %v4204 = vadd.f32 %v3752, %v4203
  %4205 = vmatmul.bf16.gmra.mxu0 %v389
  %v4206 = vpop.f32.mrf.mxu0
  %v4207 = vadd.f32 %v3752, %v4206
  %v4208 = vpop.f32.mrf.mxu0
  %v4209 = vadd.f32 %v3752, %v4208
  %4210 = vmatmul.bf16.gmra.mxu0 %v397
  %v4211 = vpop.f32.mrf.mxu0
  %v4212 = vadd.f32 %v3752, %v4211
  %v4213 = vpop.f32.mrf.mxu0
  %v4214 = vadd.f32 %v3752, %v4213
  %4215 = vmatmul.bf16.gmra.mxu0 %v405
  %v4216 = vpop.f32.mrf.mxu0
  %v4217 = vadd.f32 %v3752, %v4216
  %v4218 = vpop.f32.mrf.mxu0
  %v4219 = vadd.f32 %v3752, %v4218
  %4220 = vmatmul.bf16.gmra.mxu0 %v413
  %v4221 = vpop.f32.mrf.mxu0
  %v4222 = vadd.f32 %v3752, %v4221
  %v4223 = vpop.f32.mrf.mxu0
  %4224 = vdwg.mxu0
  %4225 = vmatpush.bf16.msra.mxu0 %v4019
  %4226 = vmatpush.bf16.msra.mxu0 %v4018
  %4227 = vmatpush.bf16.msra.mxu0 %v4017
  %4228 = vmatpush.bf16.msra.mxu0 %v4016
  %4229 = vmatpush.bf16.msra.mxu0 %v4015
  %4230 = vmatpush.bf16.msra.mxu0 %v4014
  %4231 = vmatpush.bf16.msra.mxu0 %v4013
  %4232 = vmatpush.bf16.msra.mxu0 %v4012
  %4233 = vmatmul.bf16.gmra.mxu0 %v286
  %v4234 = vpop.f32.mrf.mxu0
  %v4235 = vadd.f32 %v4142, %v4234
  %v4236 = vpop.f32.mrf.mxu0
  %v4237 = vadd.f32 %v4144, %v4236
  %4238 = vmatmul.bf16.gmra.mxu0 %v294
  %v4239 = vpop.f32.mrf.mxu0
  %v4240 = vadd.f32 %v4147, %v4239
  %v4241 = vpop.f32.mrf.mxu0
  %v4242 = vadd.f32 %v4149, %v4241
  %4243 = vmatmul.bf16.gmra.mxu0 %v302
  %v4244 = vpop.f32.mrf.mxu0
  %v4245 = vadd.f32 %v4152, %v4244
  %v4246 = vpop.f32.mrf.mxu0
  %v4247 = vadd.f32 %v4154, %v4246
  %4248 = vmatmul.bf16.gmra.mxu0 %v310
  %v4249 = vpop.f32.mrf.mxu0
  %v4250 = vadd.f32 %v4157, %v4249
  %v4251 = vpop.f32.mrf.mxu0
  %v4252 = vadd.f32 %v4159, %v4251
  %4253 = vmatmul.bf16.gmra.mxu0 %v318
  %v4254 = vpop.f32.mrf.mxu0
  %v4255 = vadd.f32 %v4162, %v4254
  %v4256 = vpop.f32.mrf.mxu0
  %v4257 = vadd.f32 %v4164, %v4256
  %4258 = vmatmul.bf16.gmra.mxu0 %v326
  %v4259 = vpop.f32.mrf.mxu0
  %v4260 = vadd.f32 %v4167, %v4259
  %v4261 = vpop.f32.mrf.mxu0
  %v4262 = vadd.f32 %v4169, %v4261
  %4263 = vmatmul.bf16.gmra.mxu0 %v334
  %v4264 = vpop.f32.mrf.mxu0
  %v4265 = vadd.f32 %v4172, %v4264
  %v4266 = vpop.f32.mrf.mxu0
  %v4267 = vadd.f32 %v4174, %v4266
  %4268 = vmatmul.bf16.gmra.mxu0 %v342
  %v4269 = vpop.f32.mrf.mxu0
  %v4270 = vadd.f32 %v4177, %v4269
  %v4271 = vpop.f32.mrf.mxu0
  %v4272 = vadd.f32 %v4179, %v4271
  %4273 = vmatmul.bf16.gmra.mxu0 %v350
  %v4274 = vpop.f32.mrf.mxu0
  %v4275 = vadd.f32 %v4182, %v4274
  %v4276 = vpop.f32.mrf.mxu0
  %v4277 = vadd.f32 %v4184, %v4276
  %4278 = vmatmul.bf16.gmra.mxu0 %v358
  %v4279 = vpop.f32.mrf.mxu0
  %v4280 = vadd.f32 %v4187, %v4279
  %v4281 = vpop.f32.mrf.mxu0
  %v4282 = vadd.f32 %v4189, %v4281
  %4283 = vmatmul.bf16.gmra.mxu0 %v366
  %v4284 = vpop.f32.mrf.mxu0
  %v4285 = vadd.f32 %v4192, %v4284
  %v4286 = vpop.f32.mrf.mxu0
  %v4287 = vadd.f32 %v4194, %v4286
  %4288 = vmatmul.bf16.gmra.mxu0 %v374
  %v4289 = vpop.f32.mrf.mxu0
  %v4290 = vadd.f32 %v4197, %v4289
  %v4291 = vpop.f32.mrf.mxu0
  %v4292 = vadd.f32 %v4199, %v4291
  %4293 = vmatmul.bf16.gmra.mxu0 %v382
  %v4294 = vpop.f32.mrf.mxu0
  %v4295 = vadd.f32 %v4202, %v4294
  %v4296 = vpop.f32.mrf.mxu0
  %v4297 = vadd.f32 %v4204, %v4296
  %4298 = vmatmul.bf16.gmra.mxu0 %v390
  %v4299 = vpop.f32.mrf.mxu0
  %v4300 = vadd.f32 %v4207, %v4299
  %v4301 = vpop.f32.mrf.mxu0
  %v4302 = vadd.f32 %v4209, %v4301
  %4303 = vmatmul.bf16.gmra.mxu0 %v398
  %v4304 = vpop.f32.mrf.mxu0
  %v4305 = vadd.f32 %v4212, %v4304
  %v4306 = vpop.f32.mrf.mxu0
  %v4307 = vadd.f32 %v4214, %v4306
  %4308 = vmatmul.bf16.gmra.mxu0 %v406
  %v4309 = vpop.f32.mrf.mxu0
  %v4310 = vadd.f32 %v4217, %v4309
  %v4311 = vpop.f32.mrf.mxu0
  %v4312 = vadd.f32 %v4219, %v4311
  %4313 = vmatmul.bf16.gmra.mxu0 %v414
  %v4314 = vpop.f32.mrf.mxu0
  %v4315 = vadd.f32 %v4222, %v4314
  %v4316 = vpop.f32.mrf.mxu0
  %4317 = vdwg.mxu0
  %4318 = vmatpush.bf16.msra.mxu0 %v4027
  %4319 = vmatpush.bf16.msra.mxu0 %v4026
  %4320 = vmatpush.bf16.msra.mxu0 %v4025
  %4321 = vmatpush.bf16.msra.mxu0 %v4024
  %4322 = vmatpush.bf16.msra.mxu0 %v4023
  %4323 = vmatpush.bf16.msra.mxu0 %v4022
  %4324 = vmatpush.bf16.msra.mxu0 %v4021
  %4325 = vmatpush.bf16.msra.mxu0 %v4020
  %4326 = vmatmul.bf16.gmra.mxu0 %v287
  %v4327 = vpop.f32.mrf.mxu0
  %v4328 = vadd.f32 %v4235, %v4327
  %v4329 = vpop.f32.mrf.mxu0
  %v4330 = vadd.f32 %v4237, %v4329
  %4331 = vmatmul.bf16.gmra.mxu0 %v295
  %v4332 = vpop.f32.mrf.mxu0
  %v4333 = vadd.f32 %v4240, %v4332
  %v4334 = vpop.f32.mrf.mxu0
  %v4335 = vadd.f32 %v4242, %v4334
  %4336 = vmatmul.bf16.gmra.mxu0 %v303
  %v4337 = vpop.f32.mrf.mxu0
  %v4338 = vadd.f32 %v4245, %v4337
  %v4339 = vpop.f32.mrf.mxu0
  %v4340 = vadd.f32 %v4247, %v4339
  %4341 = vmatmul.bf16.gmra.mxu0 %v311
  %v4342 = vpop.f32.mrf.mxu0
  %v4343 = vadd.f32 %v4250, %v4342
  %v4344 = vpop.f32.mrf.mxu0
  %v4345 = vadd.f32 %v4252, %v4344
  %4346 = vmatmul.bf16.gmra.mxu0 %v319
  %v4347 = vpop.f32.mrf.mxu0
  %v4348 = vadd.f32 %v4255, %v4347
  %v4349 = vpop.f32.mrf.mxu0
  %v4350 = vadd.f32 %v4257, %v4349
  %4351 = vmatmul.bf16.gmra.mxu0 %v327
  %v4352 = vpop.f32.mrf.mxu0
  %v4353 = vadd.f32 %v4260, %v4352
  %v4354 = vpop.f32.mrf.mxu0
  %v4355 = vadd.f32 %v4262, %v4354
  %4356 = vmatmul.bf16.gmra.mxu0 %v335
  %v4357 = vpop.f32.mrf.mxu0
  %v4358 = vadd.f32 %v4265, %v4357
  %v4359 = vpop.f32.mrf.mxu0
  %v4360 = vadd.f32 %v4267, %v4359
  %4361 = vmatmul.bf16.gmra.mxu0 %v343
  %v4362 = vpop.f32.mrf.mxu0
  %v4363 = vadd.f32 %v4270, %v4362
  %v4364 = vpop.f32.mrf.mxu0
  %v4365 = vadd.f32 %v4272, %v4364
  %4366 = vmatmul.bf16.gmra.mxu0 %v351
  %v4367 = vpop.f32.mrf.mxu0
  %v4368 = vadd.f32 %v4275, %v4367
  %v4369 = vpop.f32.mrf.mxu0
  %v4370 = vadd.f32 %v4277, %v4369
  %4371 = vmatmul.bf16.gmra.mxu0 %v359
  %v4372 = vpop.f32.mrf.mxu0
  %v4373 = vadd.f32 %v4280, %v4372
  %v4374 = vpop.f32.mrf.mxu0
  %v4375 = vadd.f32 %v4282, %v4374
  %4376 = vmatmul.bf16.gmra.mxu0 %v367
  %v4377 = vpop.f32.mrf.mxu0
  %v4378 = vadd.f32 %v4285, %v4377
  %v4379 = vpop.f32.mrf.mxu0
  %v4380 = vadd.f32 %v4287, %v4379
  %4381 = vmatmul.bf16.gmra.mxu0 %v375
  %v4382 = vpop.f32.mrf.mxu0
  %v4383 = vadd.f32 %v4290, %v4382
  %v4384 = vpop.f32.mrf.mxu0
  %v4385 = vadd.f32 %v4292, %v4384
  %4386 = vmatmul.bf16.gmra.mxu0 %v383
  %v4387 = vpop.f32.mrf.mxu0
  %v4388 = vadd.f32 %v4295, %v4387
  %v4389 = vpop.f32.mrf.mxu0
  %v4390 = vadd.f32 %v4297, %v4389
  %4391 = vmatmul.bf16.gmra.mxu0 %v391
  %v4392 = vpop.f32.mrf.mxu0
  %v4393 = vadd.f32 %v4300, %v4392
  %v4394 = vpop.f32.mrf.mxu0
  %v4395 = vadd.f32 %v4302, %v4394
  %4396 = vmatmul.bf16.gmra.mxu0 %v399
  %v4397 = vpop.f32.mrf.mxu0
  %v4398 = vadd.f32 %v4305, %v4397
  %v4399 = vpop.f32.mrf.mxu0
  %v4400 = vadd.f32 %v4307, %v4399
  %4401 = vmatmul.bf16.gmra.mxu0 %v407
  %v4402 = vpop.f32.mrf.mxu0
  %v4403 = vadd.f32 %v4310, %v4402
  %v4404 = vpop.f32.mrf.mxu0
  %v4405 = vadd.f32 %v4312, %v4404
  %4406 = vmatmul.bf16.gmra.mxu0 %v415
  %v4407 = vpop.f32.mrf.mxu0
  %v4408 = vadd.f32 %v4315, %v4407
  %v4409 = vpop.f32.mrf.mxu0
  %4410 = vdwg.mxu0
  %4411 = vmatpush.bf16.msra.mxu0 %v4035
  %4412 = vmatpush.bf16.msra.mxu0 %v4034
  %4413 = vmatpush.bf16.msra.mxu0 %v4033
  %4414 = vmatpush.bf16.msra.mxu0 %v4032
  %4415 = vmatpush.bf16.msra.mxu0 %v4031
  %4416 = vmatpush.bf16.msra.mxu0 %v4030
  %4417 = vmatpush.bf16.msra.mxu0 %v4029
  %4418 = vmatpush.bf16.msra.mxu0 %v4028
  %4419 = vmatmul.bf16.gmra.mxu0 %v288
  %v4420 = vpop.f32.mrf.mxu0
  %v4421 = vadd.f32 %v4328, %v4420
  %v4422 = vpop.f32.mrf.mxu0
  %v4423 = vadd.f32 %v4330, %v4422
  %4424 = vmatmul.bf16.gmra.mxu0 %v296
  %v4425 = vpop.f32.mrf.mxu0
  %v4426 = vadd.f32 %v4333, %v4425
  %v4427 = vpop.f32.mrf.mxu0
  %v4428 = vadd.f32 %v4335, %v4427
  %4429 = vmatmul.bf16.gmra.mxu0 %v304
  %v4430 = vpop.f32.mrf.mxu0
  %v4431 = vadd.f32 %v4338, %v4430
  %v4432 = vpop.f32.mrf.mxu0
  %v4433 = vadd.f32 %v4340, %v4432
  %4434 = vmatmul.bf16.gmra.mxu0 %v312
  %v4435 = vpop.f32.mrf.mxu0
  %v4436 = vadd.f32 %v4343, %v4435
  %v4437 = vpop.f32.mrf.mxu0
  %v4438 = vadd.f32 %v4345, %v4437
  %4439 = vmatmul.bf16.gmra.mxu0 %v320
  %v4440 = vpop.f32.mrf.mxu0
  %v4441 = vadd.f32 %v4348, %v4440
  %v4442 = vpop.f32.mrf.mxu0
  %v4443 = vadd.f32 %v4350, %v4442
  %4444 = vmatmul.bf16.gmra.mxu0 %v328
  %v4445 = vpop.f32.mrf.mxu0
  %v4446 = vadd.f32 %v4353, %v4445
  %v4447 = vpop.f32.mrf.mxu0
  %v4448 = vadd.f32 %v4355, %v4447
  %4449 = vmatmul.bf16.gmra.mxu0 %v336
  %v4450 = vpop.f32.mrf.mxu0
  %v4451 = vadd.f32 %v4358, %v4450
  %v4452 = vpop.f32.mrf.mxu0
  %v4453 = vadd.f32 %v4360, %v4452
  %4454 = vmatmul.bf16.gmra.mxu0 %v344
  %v4455 = vpop.f32.mrf.mxu0
  %v4456 = vadd.f32 %v4363, %v4455
  %v4457 = vpop.f32.mrf.mxu0
  %v4458 = vadd.f32 %v4365, %v4457
  %4459 = vmatmul.bf16.gmra.mxu0 %v352
  %v4460 = vpop.f32.mrf.mxu0
  %v4461 = vadd.f32 %v4368, %v4460
  %v4462 = vpop.f32.mrf.mxu0
  %v4463 = vadd.f32 %v4370, %v4462
  %4464 = vmatmul.bf16.gmra.mxu0 %v360
  %v4465 = vpop.f32.mrf.mxu0
  %v4466 = vadd.f32 %v4373, %v4465
  %v4467 = vpop.f32.mrf.mxu0
  %v4468 = vadd.f32 %v4375, %v4467
  %4469 = vmatmul.bf16.gmra.mxu0 %v368
  %v4470 = vpop.f32.mrf.mxu0
  %v4471 = vadd.f32 %v4378, %v4470
  %v4472 = vpop.f32.mrf.mxu0
  %v4473 = vadd.f32 %v4380, %v4472
  %4474 = vmatmul.bf16.gmra.mxu0 %v376
  %v4475 = vpop.f32.mrf.mxu0
  %v4476 = vadd.f32 %v4383, %v4475
  %v4477 = vpop.f32.mrf.mxu0
  %v4478 = vadd.f32 %v4385, %v4477
  %4479 = vmatmul.bf16.gmra.mxu0 %v384
  %v4480 = vpop.f32.mrf.mxu0
  %v4481 = vadd.f32 %v4388, %v4480
  %v4482 = vpop.f32.mrf.mxu0
  %v4483 = vadd.f32 %v4390, %v4482
  %4484 = vmatmul.bf16.gmra.mxu0 %v392
  %v4485 = vpop.f32.mrf.mxu0
  %v4486 = vadd.f32 %v4393, %v4485
  %v4487 = vpop.f32.mrf.mxu0
  %v4488 = vadd.f32 %v4395, %v4487
  %4489 = vmatmul.bf16.gmra.mxu0 %v400
  %v4490 = vpop.f32.mrf.mxu0
  %v4491 = vadd.f32 %v4398, %v4490
  %v4492 = vpop.f32.mrf.mxu0
  %v4493 = vadd.f32 %v4400, %v4492
  %4494 = vmatmul.bf16.gmra.mxu0 %v408
  %v4495 = vpop.f32.mrf.mxu0
  %v4496 = vadd.f32 %v4403, %v4495
  %v4497 = vpop.f32.mrf.mxu0
  %v4498 = vadd.f32 %v4405, %v4497
  %4499 = vmatmul.bf16.gmra.mxu0 %v416
  %v4500 = vpop.f32.mrf.mxu0
  %v4501 = vadd.f32 %v4408, %v4500
  %v4502 = vpop.f32.mrf.mxu0
  %4503 = vdwg.mxu0
  %4504 = vmatpush.bf16.msra.mxu0 %v4043
  %4505 = vmatpush.bf16.msra.mxu0 %v4042
  %4506 = vmatpush.bf16.msra.mxu0 %v4041
  %4507 = vmatpush.bf16.msra.mxu0 %v4040
  %4508 = vmatpush.bf16.msra.mxu0 %v4039
  %4509 = vmatpush.bf16.msra.mxu0 %v4038
  %4510 = vmatpush.bf16.msra.mxu0 %v4037
  %4511 = vmatpush.bf16.msra.mxu0 %v4036
  %4512 = vmatmul.bf16.gmra.mxu0 %v289
  %v4513 = vpop.f32.mrf.mxu0
  %v4514 = vadd.f32 %v4421, %v4513
  %v4515 = vpop.f32.mrf.mxu0
  %v4516 = vadd.f32 %v4423, %v4515
  %4517 = vmatmul.bf16.gmra.mxu0 %v297
  %v4518 = vpop.f32.mrf.mxu0
  %v4519 = vadd.f32 %v4426, %v4518
  %v4520 = vpop.f32.mrf.mxu0
  %v4521 = vadd.f32 %v4428, %v4520
  %4522 = vmatmul.bf16.gmra.mxu0 %v305
  %v4523 = vpop.f32.mrf.mxu0
  %v4524 = vadd.f32 %v4431, %v4523
  %v4525 = vpop.f32.mrf.mxu0
  %v4526 = vadd.f32 %v4433, %v4525
  %4527 = vmatmul.bf16.gmra.mxu0 %v313
  %v4528 = vpop.f32.mrf.mxu0
  %v4529 = vadd.f32 %v4436, %v4528
  %v4530 = vpop.f32.mrf.mxu0
  %v4531 = vadd.f32 %v4438, %v4530
  %4532 = vmatmul.bf16.gmra.mxu0 %v321
  %v4533 = vpop.f32.mrf.mxu0
  %v4534 = vadd.f32 %v4441, %v4533
  %v4535 = vpop.f32.mrf.mxu0
  %v4536 = vadd.f32 %v4443, %v4535
  %4537 = vmatmul.bf16.gmra.mxu0 %v329
  %v4538 = vpop.f32.mrf.mxu0
  %v4539 = vadd.f32 %v4446, %v4538
  %v4540 = vpop.f32.mrf.mxu0
  %v4541 = vadd.f32 %v4448, %v4540
  %4542 = vmatmul.bf16.gmra.mxu0 %v337
  %v4543 = vpop.f32.mrf.mxu0
  %v4544 = vadd.f32 %v4451, %v4543
  %v4545 = vpop.f32.mrf.mxu0
  %v4546 = vadd.f32 %v4453, %v4545
  %4547 = vmatmul.bf16.gmra.mxu0 %v345
  %v4548 = vpop.f32.mrf.mxu0
  %v4549 = vadd.f32 %v4456, %v4548
  %v4550 = vpop.f32.mrf.mxu0
  %v4551 = vadd.f32 %v4458, %v4550
  %4552 = vmatmul.bf16.gmra.mxu0 %v353
  %v4553 = vpop.f32.mrf.mxu0
  %v4554 = vadd.f32 %v4461, %v4553
  %v4555 = vpop.f32.mrf.mxu0
  %v4556 = vadd.f32 %v4463, %v4555
  %4557 = vmatmul.bf16.gmra.mxu0 %v361
  %v4558 = vpop.f32.mrf.mxu0
  %v4559 = vadd.f32 %v4466, %v4558
  %v4560 = vpop.f32.mrf.mxu0
  %v4561 = vadd.f32 %v4468, %v4560
  %4562 = vmatmul.bf16.gmra.mxu0 %v369
  %v4563 = vpop.f32.mrf.mxu0
  %v4564 = vadd.f32 %v4471, %v4563
  %v4565 = vpop.f32.mrf.mxu0
  %v4566 = vadd.f32 %v4473, %v4565
  %4567 = vmatmul.bf16.gmra.mxu0 %v377
  %v4568 = vpop.f32.mrf.mxu0
  %v4569 = vadd.f32 %v4476, %v4568
  %v4570 = vpop.f32.mrf.mxu0
  %v4571 = vadd.f32 %v4478, %v4570
  %4572 = vmatmul.bf16.gmra.mxu0 %v385
  %v4573 = vpop.f32.mrf.mxu0
  %v4574 = vadd.f32 %v4481, %v4573
  %v4575 = vpop.f32.mrf.mxu0
  %v4576 = vadd.f32 %v4483, %v4575
  %4577 = vmatmul.bf16.gmra.mxu0 %v393
  %v4578 = vpop.f32.mrf.mxu0
  %v4579 = vadd.f32 %v4486, %v4578
  %v4580 = vpop.f32.mrf.mxu0
  %v4581 = vadd.f32 %v4488, %v4580
  %4582 = vmatmul.bf16.gmra.mxu0 %v401
  %v4583 = vpop.f32.mrf.mxu0
  %v4584 = vadd.f32 %v4491, %v4583
  %v4585 = vpop.f32.mrf.mxu0
  %v4586 = vadd.f32 %v4493, %v4585
  %4587 = vmatmul.bf16.gmra.mxu0 %v409
  %v4588 = vpop.f32.mrf.mxu0
  %v4589 = vadd.f32 %v4496, %v4588
  %v4590 = vpop.f32.mrf.mxu0
  %v4591 = vadd.f32 %v4498, %v4590
  %4592 = vmatmul.bf16.gmra.mxu0 %v417
  %v4593 = vpop.f32.mrf.mxu0
  %v4594 = vadd.f32 %v4501, %v4593
  %v4595 = vpop.f32.mrf.mxu0
  %4596 = vdwg.mxu0
  %4597 = vmatpush.bf16.msra.mxu0 %v4051
  %4598 = vmatpush.bf16.msra.mxu0 %v4050
  %4599 = vmatpush.bf16.msra.mxu0 %v4049
  %4600 = vmatpush.bf16.msra.mxu0 %v4048
  %4601 = vmatpush.bf16.msra.mxu0 %v4047
  %4602 = vmatpush.bf16.msra.mxu0 %v4046
  %4603 = vmatpush.bf16.msra.mxu0 %v4045
  %4604 = vmatpush.bf16.msra.mxu0 %v4044
  %4605 = vmatmul.bf16.gmra.mxu0 %v290
  %v4606 = vpop.f32.mrf.mxu0
  %v4607 = vadd.f32 %v4514, %v4606
  %v4608 = vpop.f32.mrf.mxu0
  %v4609 = vadd.f32 %v4516, %v4608
  %4610 = vmatmul.bf16.gmra.mxu0 %v298
  %v4611 = vpop.f32.mrf.mxu0
  %v4612 = vadd.f32 %v4519, %v4611
  %v4613 = vpop.f32.mrf.mxu0
  %v4614 = vadd.f32 %v4521, %v4613
  %4615 = vmatmul.bf16.gmra.mxu0 %v306
  %v4616 = vpop.f32.mrf.mxu0
  %v4617 = vadd.f32 %v4524, %v4616
  %v4618 = vpop.f32.mrf.mxu0
  %v4619 = vadd.f32 %v4526, %v4618
  %4620 = vmatmul.bf16.gmra.mxu0 %v314
  %v4621 = vpop.f32.mrf.mxu0
  %v4622 = vadd.f32 %v4529, %v4621
  %v4623 = vpop.f32.mrf.mxu0
  %v4624 = vadd.f32 %v4531, %v4623
  %4625 = vmatmul.bf16.gmra.mxu0 %v322
  %v4626 = vpop.f32.mrf.mxu0
  %v4627 = vadd.f32 %v4534, %v4626
  %v4628 = vpop.f32.mrf.mxu0
  %v4629 = vadd.f32 %v4536, %v4628
  %4630 = vmatmul.bf16.gmra.mxu0 %v330
  %v4631 = vpop.f32.mrf.mxu0
  %v4632 = vadd.f32 %v4539, %v4631
  %v4633 = vpop.f32.mrf.mxu0
  %v4634 = vadd.f32 %v4541, %v4633
  %4635 = vmatmul.bf16.gmra.mxu0 %v338
  %v4636 = vpop.f32.mrf.mxu0
  %v4637 = vadd.f32 %v4544, %v4636
  %v4638 = vpop.f32.mrf.mxu0
  %v4639 = vadd.f32 %v4546, %v4638
  %4640 = vmatmul.bf16.gmra.mxu0 %v346
  %v4641 = vpop.f32.mrf.mxu0
  %v4642 = vadd.f32 %v4549, %v4641
  %v4643 = vpop.f32.mrf.mxu0
  %v4644 = vadd.f32 %v4551, %v4643
  %4645 = vmatmul.bf16.gmra.mxu0 %v354
  %v4646 = vpop.f32.mrf.mxu0
  %v4647 = vadd.f32 %v4554, %v4646
  %v4648 = vpop.f32.mrf.mxu0
  %v4649 = vadd.f32 %v4556, %v4648
  %4650 = vmatmul.bf16.gmra.mxu0 %v362
  %v4651 = vpop.f32.mrf.mxu0
  %v4652 = vadd.f32 %v4559, %v4651
  %v4653 = vpop.f32.mrf.mxu0
  %v4654 = vadd.f32 %v4561, %v4653
  %4655 = vmatmul.bf16.gmra.mxu0 %v370
  %v4656 = vpop.f32.mrf.mxu0
  %v4657 = vadd.f32 %v4564, %v4656
  %v4658 = vpop.f32.mrf.mxu0
  %v4659 = vadd.f32 %v4566, %v4658
  %4660 = vmatmul.bf16.gmra.mxu0 %v378
  %v4661 = vpop.f32.mrf.mxu0
  %v4662 = vadd.f32 %v4569, %v4661
  %v4663 = vpop.f32.mrf.mxu0
  %v4664 = vadd.f32 %v4571, %v4663
  %4665 = vmatmul.bf16.gmra.mxu0 %v386
  %v4666 = vpop.f32.mrf.mxu0
  %v4667 = vadd.f32 %v4574, %v4666
  %v4668 = vpop.f32.mrf.mxu0
  %v4669 = vadd.f32 %v4576, %v4668
  %4670 = vmatmul.bf16.gmra.mxu0 %v394
  %v4671 = vpop.f32.mrf.mxu0
  %v4672 = vadd.f32 %v4579, %v4671
  %v4673 = vpop.f32.mrf.mxu0
  %v4674 = vadd.f32 %v4581, %v4673
  %4675 = vmatmul.bf16.gmra.mxu0 %v402
  %v4676 = vpop.f32.mrf.mxu0
  %v4677 = vadd.f32 %v4584, %v4676
  %v4678 = vpop.f32.mrf.mxu0
  %v4679 = vadd.f32 %v4586, %v4678
  %4680 = vmatmul.bf16.gmra.mxu0 %v410
  %v4681 = vpop.f32.mrf.mxu0
  %v4682 = vadd.f32 %v4589, %v4681
  %v4683 = vpop.f32.mrf.mxu0
  %v4684 = vadd.f32 %v4591, %v4683
  %4685 = vmatmul.bf16.gmra.mxu0 %v418
  %v4686 = vpop.f32.mrf.mxu0
  %v4687 = vadd.f32 %v4594, %v4686
  %v4688 = vpop.f32.mrf.mxu0
  %4689 = vdwg.mxu0
  %4690 = vmatpush.bf16.msra.mxu0 %v4059
  %4691 = vmatpush.bf16.msra.mxu0 %v4058
  %4692 = vmatpush.bf16.msra.mxu0 %v4057
  %4693 = vmatpush.bf16.msra.mxu0 %v4056
  %4694 = vmatpush.bf16.msra.mxu0 %v4055
  %4695 = vmatpush.bf16.msra.mxu0 %v4054
  %4696 = vmatpush.bf16.msra.mxu0 %v4053
  %4697 = vmatpush.bf16.msra.mxu0 %v4052
  %4698 = vmatmul.bf16.gmra.mxu0 %v291
  %v4699 = vpop.f32.mrf.mxu0
  %v4700 = vadd.f32 %v4607, %v4699
  %v4701 = vpop.f32.mrf.mxu0
  %v4702 = vadd.f32 %v4609, %v4701
  %4703 = vmatmul.bf16.gmra.mxu0 %v299
  %v4704 = vpop.f32.mrf.mxu0
  %v4705 = vadd.f32 %v4612, %v4704
  %v4706 = vpop.f32.mrf.mxu0
  %v4707 = vadd.f32 %v4614, %v4706
  %4708 = vmatmul.bf16.gmra.mxu0 %v307
  %v4709 = vpop.f32.mrf.mxu0
  %v4710 = vadd.f32 %v4617, %v4709
  %v4711 = vpop.f32.mrf.mxu0
  %v4712 = vadd.f32 %v4619, %v4711
  %4713 = vmatmul.bf16.gmra.mxu0 %v315
  %v4714 = vpop.f32.mrf.mxu0
  %v4715 = vadd.f32 %v4622, %v4714
  %v4716 = vpop.f32.mrf.mxu0
  %v4717 = vadd.f32 %v4624, %v4716
  %4718 = vmatmul.bf16.gmra.mxu0 %v323
  %v4719 = vpop.f32.mrf.mxu0
  %v4720 = vadd.f32 %v4627, %v4719
  %v4721 = vpop.f32.mrf.mxu0
  %v4722 = vadd.f32 %v4629, %v4721
  %4723 = vmatmul.bf16.gmra.mxu0 %v331
  %v4724 = vpop.f32.mrf.mxu0
  %v4725 = vadd.f32 %v4632, %v4724
  %v4726 = vpop.f32.mrf.mxu0
  %v4727 = vadd.f32 %v4634, %v4726
  %4728 = vmatmul.bf16.gmra.mxu0 %v339
  %v4729 = vpop.f32.mrf.mxu0
  %v4730 = vadd.f32 %v4637, %v4729
  %v4731 = vpop.f32.mrf.mxu0
  %v4732 = vadd.f32 %v4639, %v4731
  %4733 = vmatmul.bf16.gmra.mxu0 %v347
  %v4734 = vpop.f32.mrf.mxu0
  %v4735 = vadd.f32 %v4642, %v4734
  %v4736 = vpop.f32.mrf.mxu0
  %v4737 = vadd.f32 %v4644, %v4736
  %4738 = vmatmul.bf16.gmra.mxu0 %v355
  %v4739 = vpop.f32.mrf.mxu0
  %v4740 = vadd.f32 %v4647, %v4739
  %v4741 = vpop.f32.mrf.mxu0
  %v4742 = vadd.f32 %v4649, %v4741
  %4743 = vmatmul.bf16.gmra.mxu0 %v363
  %v4744 = vpop.f32.mrf.mxu0
  %v4745 = vadd.f32 %v4652, %v4744
  %v4746 = vpop.f32.mrf.mxu0
  %v4747 = vadd.f32 %v4654, %v4746
  %4748 = vmatmul.bf16.gmra.mxu0 %v371
  %v4749 = vpop.f32.mrf.mxu0
  %v4750 = vadd.f32 %v4657, %v4749
  %v4751 = vpop.f32.mrf.mxu0
  %v4752 = vadd.f32 %v4659, %v4751
  %4753 = vmatmul.bf16.gmra.mxu0 %v379
  %v4754 = vpop.f32.mrf.mxu0
  %v4755 = vadd.f32 %v4662, %v4754
  %v4756 = vpop.f32.mrf.mxu0
  %v4757 = vadd.f32 %v4664, %v4756
  %4758 = vmatmul.bf16.gmra.mxu0 %v387
  %v4759 = vpop.f32.mrf.mxu0
  %v4760 = vadd.f32 %v4667, %v4759
  %v4761 = vpop.f32.mrf.mxu0
  %v4762 = vadd.f32 %v4669, %v4761
  %4763 = vmatmul.bf16.gmra.mxu0 %v395
  %v4764 = vpop.f32.mrf.mxu0
  %v4765 = vadd.f32 %v4672, %v4764
  %v4766 = vpop.f32.mrf.mxu0
  %v4767 = vadd.f32 %v4674, %v4766
  %4768 = vmatmul.bf16.gmra.mxu0 %v403
  %v4769 = vpop.f32.mrf.mxu0
  %v4770 = vadd.f32 %v4677, %v4769
  %v4771 = vpop.f32.mrf.mxu0
  %v4772 = vadd.f32 %v4679, %v4771
  %4773 = vmatmul.bf16.gmra.mxu0 %v411
  %v4774 = vpop.f32.mrf.mxu0
  %v4775 = vadd.f32 %v4682, %v4774
  %v4776 = vpop.f32.mrf.mxu0
  %v4777 = vadd.f32 %v4684, %v4776
  %4778 = vmatmul.bf16.gmra.mxu0 %v419
  %v4779 = vpop.f32.mrf.mxu0
  %v4780 = vadd.f32 %v4687, %v4779
  %v4781 = vpop.f32.mrf.mxu0
  %4782 = vdwg.mxu0
  %4783 = vmatpush.bf16.msra.mxu0 0
  %4784 = vmatpush.bf16.msra.mxu0 %v4130
  %4785 = vmatpush.bf16.msra.mxu0 %v4065
  %4786 = vmatpush.bf16.msra.mxu0 %v4064
  %4787 = vmatpush.bf16.msra.mxu0 %v4063
  %4788 = vmatpush.bf16.msra.mxu0 %v4062
  %4789 = vmatpush.bf16.msra.mxu0 %v4061
  %4790 = vmatpush.bf16.msra.mxu0 %v4060
  %4791 = vmatmul.bf16.gmra.mxu0 %v964
  %v4792 = vpop.f32.mrf.mxu0
  %v4793 = vadd.f32 %v4700, %v4792
  %v4794 = vpop.f32.mrf.mxu0
  %v4795 = vadd.f32 %v4702, %v4794
  %4796 = vmatmul.bf16.gmra.mxu0 %v967
  %v4797 = vpop.f32.mrf.mxu0
  %v4798 = vadd.f32 %v4705, %v4797
  %v4799 = vpop.f32.mrf.mxu0
  %v4800 = vadd.f32 %v4707, %v4799
  %4801 = vmatmul.bf16.gmra.mxu0 %v970
  %v4802 = vpop.f32.mrf.mxu0
  %v4803 = vadd.f32 %v4710, %v4802
  %v4804 = vpop.f32.mrf.mxu0
  %v4805 = vadd.f32 %v4712, %v4804
  %4806 = vmatmul.bf16.gmra.mxu0 %v973
  %v4807 = vpop.f32.mrf.mxu0
  %v4808 = vadd.f32 %v4715, %v4807
  %v4809 = vpop.f32.mrf.mxu0
  %v4810 = vadd.f32 %v4717, %v4809
  %4811 = vmatmul.bf16.gmra.mxu0 %v976
  %v4812 = vpop.f32.mrf.mxu0
  %v4813 = vadd.f32 %v4720, %v4812
  %v4814 = vpop.f32.mrf.mxu0
  %v4815 = vadd.f32 %v4722, %v4814
  %4816 = vmatmul.bf16.gmra.mxu0 %v979
  %v4817 = vpop.f32.mrf.mxu0
  %v4818 = vadd.f32 %v4725, %v4817
  %v4819 = vpop.f32.mrf.mxu0
  %v4820 = vadd.f32 %v4727, %v4819
  %4821 = vmatmul.bf16.gmra.mxu0 %v982
  %v4822 = vpop.f32.mrf.mxu0
  %v4823 = vadd.f32 %v4730, %v4822
  %v4824 = vpop.f32.mrf.mxu0
  %v4825 = vadd.f32 %v4732, %v4824
  %4826 = vmatmul.bf16.gmra.mxu0 %v985
  %v4827 = vpop.f32.mrf.mxu0
  %v4828 = vadd.f32 %v4735, %v4827
  %v4829 = vpop.f32.mrf.mxu0
  %v4830 = vadd.f32 %v4737, %v4829
  %4831 = vmatmul.bf16.gmra.mxu0 %v988
  %v4832 = vpop.f32.mrf.mxu0
  %v4833 = vadd.f32 %v4740, %v4832
  %v4834 = vpop.f32.mrf.mxu0
  %v4835 = vadd.f32 %v4742, %v4834
  %4836 = vmatmul.bf16.gmra.mxu0 %v991
  %v4837 = vpop.f32.mrf.mxu0
  %v4838 = vadd.f32 %v4745, %v4837
  %v4839 = vpop.f32.mrf.mxu0
  %v4840 = vadd.f32 %v4747, %v4839
  %4841 = vmatmul.bf16.gmra.mxu0 %v994
  %v4842 = vpop.f32.mrf.mxu0
  %v4843 = vadd.f32 %v4750, %v4842
  %v4844 = vpop.f32.mrf.mxu0
  %v4845 = vadd.f32 %v4752, %v4844
  %4846 = vmatmul.bf16.gmra.mxu0 %v997
  %v4847 = vpop.f32.mrf.mxu0
  %v4848 = vadd.f32 %v4755, %v4847
  %v4849 = vpop.f32.mrf.mxu0
  %v4850 = vadd.f32 %v4757, %v4849
  %4851 = vmatmul.bf16.gmra.mxu0 %v1000
  %v4852 = vpop.f32.mrf.mxu0
  %v4853 = vadd.f32 %v4760, %v4852
  %v4854 = vpop.f32.mrf.mxu0
  %v4855 = vadd.f32 %v4762, %v4854
  %4856 = vmatmul.bf16.gmra.mxu0 %v1003
  %v4857 = vpop.f32.mrf.mxu0
  %v4858 = vadd.f32 %v4765, %v4857
  %v4859 = vpop.f32.mrf.mxu0
  %v4860 = vadd.f32 %v4767, %v4859
  %4861 = vmatmul.bf16.gmra.mxu0 %v1006
  %v4862 = vpop.f32.mrf.mxu0
  %v4863 = vadd.f32 %v4770, %v4862
  %v4864 = vpop.f32.mrf.mxu0
  %v4865 = vadd.f32 %v4772, %v4864
  %4866 = vmatmul.bf16.gmra.mxu0 %v1009
  %v4867 = vpop.f32.mrf.mxu0
  %v4868 = vadd.f32 %v4775, %v4867
  %v4869 = vpop.f32.mrf.mxu0
  %v4870 = vadd.f32 %v4777, %v4869
  %4871 = vmatmul.bf16.gmra.mxu0 %v1012
  %v4872 = vpop.f32.mrf.mxu0
  %v4873 = vadd.f32 %v4780, %v4872
  %v4874 = vpop.f32.mrf.mxu0
  %4875 = vdwg.mxu0
  %v4876 = vmax.f32 %v4793, 0.0
  %v4877 = vmax.f32 %v4795, 0.0
  %v4878 = vmax.f32 %v4798, 0.0
  %v4879 = vmax.f32 %v4800, 0.0
  %v4880 = vmax.f32 %v4803, 0.0
  %v4881 = vmax.f32 %v4805, 0.0
  %v4882 = vmax.f32 %v4808, 0.0
  %v4883 = vmax.f32 %v4810, 0.0
  %v4884 = vmax.f32 %v4813, 0.0
  %v4885 = vmax.f32 %v4815, 0.0
  %v4886 = vmax.f32 %v4818, 0.0
  %v4887 = vmax.f32 %v4820, 0.0
  %v4888 = vmax.f32 %v4823, 0.0
  %v4889 = vmax.f32 %v4825, 0.0
  %v4890 = vmax.f32 %v4828, 0.0
  %v4891 = vmax.f32 %v4830, 0.0
  %v4892 = vmax.f32 %v4833, 0.0
  %v4893 = vmax.f32 %v4835, 0.0
  %v4894 = vmax.f32 %v4838, 0.0
  %v4895 = vmax.f32 %v4840, 0.0
  %v4896 = vmax.f32 %v4843, 0.0
  %v4897 = vmax.f32 %v4845, 0.0
  %v4898 = vmax.f32 %v4848, 0.0
  %v4899 = vmax.f32 %v4850, 0.0
  %v4900 = vmax.f32 %v4853, 0.0
  %v4901 = vmax.f32 %v4855, 0.0
  %v4902 = vmax.f32 %v4858, 0.0
  %v4903 = vmax.f32 %v4860, 0.0
  %v4904 = vmax.f32 %v4863, 0.0
  %v4905 = vmax.f32 %v4865, 0.0
  %v4906 = vmax.f32 %v4868, 0.0
  %v4907 = vmax.f32 %v4870, 0.0
  %v4908 = vmax.f32 %v4873, 0.0
  %v4909 = vld [vmem:[%s5] sm:$0xff]
  %v4910 = vld [vmem:[%s5 + $0x8] sm:$0xff]
  %v4911 = vld [vmem:[%s5 + $0x10] sm:$0xff]
  %v4912 = vld [vmem:[%s5 + $0x18] sm:$0xff]
  %v4913 = vld [vmem:[%s5 + $0x20] sm:$0xff]
  %v4914 = vld [vmem:[%s5 + $0x28] sm:$0xff]
  %v4915 = vld [vmem:[%s5 + $0x30] sm:$0xff]
  %v4916 = vld [vmem:[%s5 + $0x38] sm:$0xff]
  %v4917 = vld [vmem:[%s5 + $0x40] sm:$0xff]
  %v4918 = vld [vmem:[%s5 + $0x48] sm:$0xff]
  %v4919 = vld [vmem:[%s5 + $0x50] sm:$0xff]
  %v4920 = vld [vmem:[%s5 + $0x58] sm:$0xff]
  %v4921 = vld [vmem:[%s5 + $0x60] sm:$0xff]
  %v4922 = vld [vmem:[%s5 + $0x68] sm:$0xff]
  %v4923 = vld [vmem:[%s5 + $0x70] sm:$0xff]
  %v4924 = vld [vmem:[%s5 + $0x78] sm:$0xff]
  %v4925 = vld [vmem:[%s5 + $0x80] sm:$0xff]
  %v4926 = vld [vmem:[%s5 + $0x88] sm:$0xff]
  %v4927 = vld [vmem:[%s5 + $0x90] sm:$0xff]
  %v4928 = vld [vmem:[%s5 + $0x98] sm:$0xff]
  %v4929 = vld [vmem:[%s5 + $0xa0] sm:$0xff]
  %v4930 = vld [vmem:[%s5 + $0xa8] sm:$0xff]
  %v4931 = vld [vmem:[%s5 + $0xb0] sm:$0xff]
  %v4932 = vld [vmem:[%s5 + $0xb8] sm:$0xff]
  %v4933 = vld [vmem:[%s5 + $0xc0] sm:$0xff]
  %v4934 = vld [vmem:[%s5 + $0xc8] sm:$0xff]
  %v4935 = vld [vmem:[%s5 + $0xd0] sm:$0xff]
  %v4936 = vld [vmem:[%s5 + $0xd8] sm:$0xff]
  %v4937 = vld [vmem:[%s5 + $0xe0] sm:$0xff]
  %v4938 = vld [vmem:[%s5 + $0xe8] sm:$0xff]
  %v4939 = vld [vmem:[%s5 + $0xf0] sm:$0xff]
  %v4940 = vld [vmem:[%s5 + $0xf8] sm:$0xff]
  %v4941 = vld [vmem:[%s5 + $0x100] sm:$0xff]
  %v4942 = vpack.c.bf16 %v4877, %v4876
  %v4943 = vpack.c.bf16 %v4879, %v4878
  %v4944 = vpack.c.bf16 %v4881, %v4880
  %v4945 = vpack.c.bf16 %v4883, %v4882
  %v4946 = vpack.c.bf16 %v4885, %v4884
  %v4947 = vpack.c.bf16 %v4887, %v4886
  %v4948 = vpack.c.bf16 %v4889, %v4888
  %v4949 = vpack.c.bf16 %v4891, %v4890
  %v4950 = vpack.c.bf16 %v4893, %v4892
  %v4951 = vpack.c.bf16 %v4895, %v4894
  %v4952 = vpack.c.bf16 %v4897, %v4896
  %v4953 = vpack.c.bf16 %v4899, %v4898
  %v4954 = vpack.c.bf16 %v4901, %v4900
  %v4955 = vpack.c.bf16 %v4903, %v4902
  %v4956 = vpack.c.bf16 %v4905, %v4904
  %v4957 = vpack.c.bf16 %v4907, %v4906
  %v4958 = vpack.c.bf16 %v4908, %v4908
  %v4959 = vld [vmem:[%s3 + $0x80] sm:$0xf]
  %v4960 = vld [vmem:[%s3 + $0x84] sm:$0xf]
  %v4961 = vld [vmem:[%s3 + $0x88] sm:$0xf]
  %v4962 = vld [vmem:[%s3 + $0x8c] sm:$0xf]
  %v4963 = vld [vmem:[%s3 + $0x90] sm:$0xf]
  %v4964 = vld [vmem:[%s3 + $0x94] sm:$0xf]
  %v4965 = vld [vmem:[%s3 + $0x98] sm:$0xf]
  %v4966 = vld [vmem:[%s3 + $0x9c] sm:$0xf]
  %v4967 = vld [vmem:[%s3 + $0xa0] sm:$0xf]
  %v4968 = vld [vmem:[%s3 + $0xa4] sm:$0xf]
  %v4969 = vld [vmem:[%s3 + $0xa8] sm:$0xf]
  %v4970 = vld [vmem:[%s3 + $0xac] sm:$0xf]
  %v4971 = vld [vmem:[%s3 + $0xb0] sm:$0xf]
  %v4972 = vld [vmem:[%s3 + $0xb4] sm:$0xf]
  %v4973 = vld [vmem:[%s3 + $0xb8] sm:$0xf]
  %v4974 = vld [vmem:[%s3 + $0xbc] sm:$0xf]
  %v4991 = vunpack.c.l.b16 %v4959
  %v4992 = vunpack.c.l.b16 %v4960
  %v4993 = vunpack.c.l.b16 %v4961
  %v4994 = vunpack.c.l.b16 %v4962
  %v4995 = vunpack.c.l.b16 %v4963
  %v4996 = vunpack.c.l.b16 %v4964
  %v4997 = vunpack.c.l.b16 %v4965
  %v4998 = vunpack.c.l.b16 %v4966
  %v4999 = vunpack.c.l.b16 %v4967
  %v5000 = vunpack.c.l.b16 %v4968
  %v5001 = vunpack.c.l.b16 %v4969
  %v5002 = vunpack.c.l.b16 %v4970
  %v5003 = vunpack.c.l.b16 %v4971
  %v5004 = vunpack.c.l.b16 %v4972
  %v5005 = vunpack.c.l.b16 %v4973
  %v5006 = vunpack.c.l.b16 %v4974
  %v5007 = vpack.c.b16 %v4992, %v4991
  %v5008 = vpack.c.b16 %v4994, %v4993
  %v5009 = vpack.c.b16 %v4996, %v4995
  %v5010 = vpack.c.b16 %v4998, %v4997
  %v5011 = vpack.c.b16 %v5000, %v4999
  %v5012 = vpack.c.b16 %v5002, %v5001
  %v5013 = vpack.c.b16 %v5004, %v5003
  %v5014 = vpack.c.b16 %v5006, %v5005
  %5023 = vmatpush.bf16.msra.mxu0 %v5014
  %5024 = vmatpush.bf16.msra.mxu0 %v5013
  %5025 = vmatpush.bf16.msra.mxu0 %v5012
  %5026 = vmatpush.bf16.msra.mxu0 %v5011
  %5027 = vmatpush.bf16.msra.mxu0 %v5010
  %5028 = vmatpush.bf16.msra.mxu0 %v5009
  %5029 = vmatpush.bf16.msra.mxu0 %v5008
  %5030 = vmatpush.bf16.msra.mxu0 %v5007
  %5031 = vmatmul.bf16.gmra.mxu0 %v4942
  %v5032 = vpop.f32.mrf.mxu0
  %v5033 = vadd.f32 0.0, %v5032
  %v5034 = vpop.f32.mrf.mxu0
  %v5035 = vadd.f32 0.0, %v5034
  %5036 = vmatmul.bf16.gmra.mxu0 %v4943
  %v5037 = vpop.f32.mrf.mxu0
  %v5038 = vadd.f32 0.0, %v5037
  %v5039 = vpop.f32.mrf.mxu0
  %v5040 = vadd.f32 0.0, %v5039
  %5041 = vmatmul.bf16.gmra.mxu0 %v4944
  %v5042 = vpop.f32.mrf.mxu0
  %v5043 = vadd.f32 0.0, %v5042
  %v5044 = vpop.f32.mrf.mxu0
  %v5045 = vadd.f32 0.0, %v5044
  %5046 = vmatmul.bf16.gmra.mxu0 %v4945
  %v5047 = vpop.f32.mrf.mxu0
  %v5048 = vadd.f32 0.0, %v5047
  %v5049 = vpop.f32.mrf.mxu0
  %v5050 = vadd.f32 0.0, %v5049
  %5051 = vmatmul.bf16.gmra.mxu0 %v4946
  %v5052 = vpop.f32.mrf.mxu0
  %v5053 = vadd.f32 0.0, %v5052
  %v5054 = vpop.f32.mrf.mxu0
  %v5055 = vadd.f32 0.0, %v5054
  %5056 = vmatmul.bf16.gmra.mxu0 %v4947
  %v5057 = vpop.f32.mrf.mxu0
  %v5058 = vadd.f32 0.0, %v5057
  %v5059 = vpop.f32.mrf.mxu0
  %v5060 = vadd.f32 0.0, %v5059
  %5061 = vmatmul.bf16.gmra.mxu0 %v4948
  %v5062 = vpop.f32.mrf.mxu0
  %v5063 = vadd.f32 0.0, %v5062
  %v5064 = vpop.f32.mrf.mxu0
  %v5065 = vadd.f32 0.0, %v5064
  %5066 = vmatmul.bf16.gmra.mxu0 %v4949
  %v5067 = vpop.f32.mrf.mxu0
  %v5068 = vadd.f32 0.0, %v5067
  %v5069 = vpop.f32.mrf.mxu0
  %v5070 = vadd.f32 0.0, %v5069
  %5071 = vmatmul.bf16.gmra.mxu0 %v4950
  %v5072 = vpop.f32.mrf.mxu0
  %v5073 = vadd.f32 0.0, %v5072
  %v5074 = vpop.f32.mrf.mxu0
  %v5075 = vadd.f32 0.0, %v5074
  %5076 = vmatmul.bf16.gmra.mxu0 %v4951
  %v5077 = vpop.f32.mrf.mxu0
  %v5078 = vadd.f32 0.0, %v5077
  %v5079 = vpop.f32.mrf.mxu0
  %v5080 = vadd.f32 0.0, %v5079
  %5081 = vmatmul.bf16.gmra.mxu0 %v4952
  %v5082 = vpop.f32.mrf.mxu0
  %v5083 = vadd.f32 0.0, %v5082
  %v5084 = vpop.f32.mrf.mxu0
  %v5085 = vadd.f32 0.0, %v5084
  %5086 = vmatmul.bf16.gmra.mxu0 %v4953
  %v5087 = vpop.f32.mrf.mxu0
  %v5088 = vadd.f32 0.0, %v5087
  %v5089 = vpop.f32.mrf.mxu0
  %v5090 = vadd.f32 0.0, %v5089
  %5091 = vmatmul.bf16.gmra.mxu0 %v4954
  %v5092 = vpop.f32.mrf.mxu0
  %v5093 = vadd.f32 0.0, %v5092
  %v5094 = vpop.f32.mrf.mxu0
  %v5095 = vadd.f32 0.0, %v5094
  %5096 = vmatmul.bf16.gmra.mxu0 %v4955
  %v5097 = vpop.f32.mrf.mxu0
  %v5098 = vadd.f32 0.0, %v5097
  %v5099 = vpop.f32.mrf.mxu0
  %v5100 = vadd.f32 0.0, %v5099
  %5101 = vmatmul.bf16.gmra.mxu0 %v4956
  %v5102 = vpop.f32.mrf.mxu0
  %v5103 = vadd.f32 0.0, %v5102
  %v5104 = vpop.f32.mrf.mxu0
  %v5105 = vadd.f32 0.0, %v5104
  %5106 = vmatmul.bf16.gmra.mxu0 %v4957
  %v5107 = vpop.f32.mrf.mxu0
  %v5108 = vadd.f32 0.0, %v5107
  %v5109 = vpop.f32.mrf.mxu0
  %v5110 = vadd.f32 0.0, %v5109
  %5111 = vmatmul.bf16.gmra.mxu0 %v4958
  %v5112 = vpop.f32.mrf.mxu0
  %v5113 = vadd.f32 0.0, %v5112
  %v5114 = vpop.f32.mrf.mxu0
  %5115 = vdwg.mxu0
  %v5116 = vadd.f32 %v4909, %v5033
  %v5117 = vadd.f32 %v4910, %v5035
  %v5118 = vadd.f32 %v4911, %v5038
  %v5119 = vadd.f32 %v4912, %v5040
  %v5120 = vadd.f32 %v4913, %v5043
  %v5121 = vadd.f32 %v4914, %v5045
  %v5122 = vadd.f32 %v4915, %v5048
  %v5123 = vadd.f32 %v4916, %v5050
  %v5124 = vadd.f32 %v4917, %v5053
  %v5125 = vadd.f32 %v4918, %v5055
  %v5126 = vadd.f32 %v4919, %v5058
  %v5127 = vadd.f32 %v4920, %v5060
  %v5128 = vadd.f32 %v4921, %v5063
  %v5129 = vadd.f32 %v4922, %v5065
  %v5130 = vadd.f32 %v4923, %v5068
  %v5131 = vadd.f32 %v4924, %v5070
  %v5132 = vadd.f32 %v4925, %v5073
  %v5133 = vadd.f32 %v4926, %v5075
  %v5134 = vadd.f32 %v4927, %v5078
  %v5135 = vadd.f32 %v4928, %v5080
  %v5136 = vadd.f32 %v4929, %v5083
  %v5137 = vadd.f32 %v4930, %v5085
  %v5138 = vadd.f32 %v4931, %v5088
  %v5139 = vadd.f32 %v4932, %v5090
  %v5140 = vadd.f32 %v4933, %v5093
  %v5141 = vadd.f32 %v4934, %v5095
  %v5142 = vadd.f32 %v4935, %v5098
  %v5143 = vadd.f32 %v4936, %v5100
  %v5144 = vadd.f32 %v4937, %v5103
  %v5145 = vadd.f32 %v4938, %v5105
  %v5146 = vadd.f32 %v4939, %v5108
  %v5147 = vadd.f32 %v4940, %v5110
  %v5148 = vadd.f32 %v4941, %v5113
  %5149 = vst [vmem:[%s5] sm:$0xff] %v5116
  %5150 = vst [vmem:[%s5 + $0x8] sm:$0xff] %v5117
  %5151 = vst [vmem:[%s5 + $0x10] sm:$0xff] %v5118
  %5152 = vst [vmem:[%s5 + $0x18] sm:$0xff] %v5119
  %5153 = vst [vmem:[%s5 + $0x20] sm:$0xff] %v5120
  %5154 = vst [vmem:[%s5 + $0x28] sm:$0xff] %v5121
  %5155 = vst [vmem:[%s5 + $0x30] sm:$0xff] %v5122
  %5156 = vst [vmem:[%s5 + $0x38] sm:$0xff] %v5123
  %5157 = vst [vmem:[%s5 + $0x40] sm:$0xff] %v5124
  %5158 = vst [vmem:[%s5 + $0x48] sm:$0xff] %v5125
  %5159 = vst [vmem:[%s5 + $0x50] sm:$0xff] %v5126
  %5160 = vst [vmem:[%s5 + $0x58] sm:$0xff] %v5127
  %5161 = vst [vmem:[%s5 + $0x60] sm:$0xff] %v5128
  %5162 = vst [vmem:[%s5 + $0x68] sm:$0xff] %v5129
  %5163 = vst [vmem:[%s5 + $0x70] sm:$0xff] %v5130
  %5164 = vst [vmem:[%s5 + $0x78] sm:$0xff] %v5131
  %5165 = vst [vmem:[%s5 + $0x80] sm:$0xff] %v5132
  %5166 = vst [vmem:[%s5 + $0x88] sm:$0xff] %v5133
  %5167 = vst [vmem:[%s5 + $0x90] sm:$0xff] %v5134
  %5168 = vst [vmem:[%s5 + $0x98] sm:$0xff] %v5135
  %5169 = vst [vmem:[%s5 + $0xa0] sm:$0xff] %v5136
  %5170 = vst [vmem:[%s5 + $0xa8] sm:$0xff] %v5137
  %5171 = vst [vmem:[%s5 + $0xb0] sm:$0xff] %v5138
  %5172 = vst [vmem:[%s5 + $0xb8] sm:$0xff] %v5139
  %5173 = vst [vmem:[%s5 + $0xc0] sm:$0xff] %v5140
  %5174 = vst [vmem:[%s5 + $0xc8] sm:$0xff] %v5141
  %5175 = vst [vmem:[%s5 + $0xd0] sm:$0xff] %v5142
  %5176 = vst [vmem:[%s5 + $0xd8] sm:$0xff] %v5143
  %5177 = vst [vmem:[%s5 + $0xe0] sm:$0xff] %v5144
  %5178 = vst [vmem:[%s5 + $0xe8] sm:$0xff] %v5145
  %5179 = vst [vmem:[%s5 + $0xf0] sm:$0xff] %v5146
  %5180 = vst [vmem:[%s5 + $0xf8] sm:$0xff] %v5147
  %5181 = vst [vmem:[%s5 + $0x100] sm:$0xff] %v5148
  %v5182 = vld [vmem:[%s1 + $0xc] sm:$0xf]
  %v5183 = vld [vmem:[%s1 + $0x1c] sm:$0xf]
  %v5184 = vld [vmem:[%s1 + $0x2c] sm:$0xf]
  %v5185 = vld [vmem:[%s1 + $0x3c] sm:$0xf]
  %v5186 = vld [vmem:[%s1 + $0x4c] sm:$0xf]
  %v5187 = vld [vmem:[%s1 + $0x5c] sm:$0xf]
  %v5188 = vld [vmem:[%s1 + $0x6c] sm:$0xf]
  %v5189 = vld [vmem:[%s1 + $0x7c] sm:$0xf]
  %v5190 = vld [vmem:[%s1 + $0x8c] sm:$0xf]
  %v5191 = vld [vmem:[%s1 + $0x9c] sm:$0xf]
  %v5192 = vld [vmem:[%s1 + $0xac] sm:$0xf]
  %v5193 = vld [vmem:[%s1 + $0xbc] sm:$0xf]
  %v5194 = vld [vmem:[%s1 + $0xcc] sm:$0xf]
  %v5195 = vld [vmem:[%s1 + $0xdc] sm:$0xf]
  %v5196 = vld [vmem:[%s1 + $0xec] sm:$0xf]
  %v5197 = vld [vmem:[%s1 + $0xfc] sm:$0xf]
  %v5198 = vld [vmem:[%s1 + $0x10c] sm:$0xf]
  %v5199 = vld [vmem:[%s1 + $0x11c] sm:$0xf]
  %v5200 = vld [vmem:[%s1 + $0x12c] sm:$0xf]
  %v5201 = vld [vmem:[%s1 + $0x13c] sm:$0xf]
  %v5202 = vld [vmem:[%s1 + $0x14c] sm:$0xf]
  %v5203 = vld [vmem:[%s1 + $0x15c] sm:$0xf]
  %v5204 = vld [vmem:[%s1 + $0x16c] sm:$0xf]
  %v5205 = vld [vmem:[%s1 + $0x17c] sm:$0xf]
  %v5206 = vld [vmem:[%s1 + $0x18c] sm:$0xf]
  %v5207 = vld [vmem:[%s1 + $0x19c] sm:$0xf]
  %v5208 = vld [vmem:[%s1 + $0x1ac] sm:$0xf]
  %v5209 = vld [vmem:[%s1 + $0x1bc] sm:$0xf]
  %v5210 = vld [vmem:[%s1 + $0x1cc] sm:$0xf]
  %v5211 = vld [vmem:[%s1 + $0x1dc] sm:$0xf]
  %v5212 = vld [vmem:[%s1 + $0x1ec] sm:$0xf]
  %v5213 = vld [vmem:[%s1 + $0x1fc] sm:$0xf]
  %v5214 = vld [vmem:[%s1 + $0x20c] sm:$0xf]
  %v5215 = vld [vmem:[%s1 + $0x21c] sm:$0xf]
  %v5216 = vld [vmem:[%s1 + $0x22c] sm:$0xf]
  %v5217 = vld [vmem:[%s1 + $0x23c] sm:$0xf]
  %v5218 = vld [vmem:[%s1 + $0x24c] sm:$0xf]
  %v5219 = vld [vmem:[%s1 + $0x25c] sm:$0xf]
  %v5220 = vld [vmem:[%s1 + $0x26c] sm:$0xf]
  %v5221 = vld [vmem:[%s1 + $0x27c] sm:$0xf]
  %v5222 = vld [vmem:[%s1 + $0x28c] sm:$0xf]
  %v5223 = vld [vmem:[%s1 + $0x29c] sm:$0xf]
  %v5224 = vld [vmem:[%s1 + $0x2ac] sm:$0xf]
  %v5225 = vld [vmem:[%s1 + $0x2bc] sm:$0xf]
  %v5226 = vld [vmem:[%s1 + $0x2cc] sm:$0xf]
  %v5227 = vld [vmem:[%s1 + $0x2dc] sm:$0xf]
  %v5228 = vld [vmem:[%s1 + $0x2ec] sm:$0xf]
  %v5229 = vld [vmem:[%s1 + $0x2fc] sm:$0xf]
  %v5230 = vld [vmem:[%s1 + $0x30c] sm:$0xf]
  %v5231 = vld [vmem:[%s1 + $0x31c] sm:$0xf]
  %v5232 = vld [vmem:[%s1 + $0x32c] sm:$0xf]
  %v5233 = vld [vmem:[%s1 + $0x33c] sm:$0xf]
  %v5234 = vld [vmem:[%s1 + $0x34c] sm:$0xf]
  %v5235 = vld [vmem:[%s1 + $0x35c] sm:$0xf]
  %v5236 = vld [vmem:[%s1 + $0x36c] sm:$0xf]
  %v5237 = vld [vmem:[%s1 + $0x37c] sm:$0xf]
  %v5238 = vld [vmem:[%s1 + $0x38c] sm:$0xf]
  %v5239 = vld [vmem:[%s1 + $0x39c] sm:$0xf]
  %v5240 = vld [vmem:[%s1 + $0x3ac] sm:$0xf]
  %v5241 = vld [vmem:[%s1 + $0x3bc] sm:$0xf]
  %v5242 = vld [vmem:[%s1 + $0x3cc] sm:$0xf]
  %v5243 = vld [vmem:[%s1 + $0x3dc] sm:$0xf]
  %v5244 = vld [vmem:[%s1 + $0x3ec] sm:$0xf]
  %v5245 = vld [vmem:[%s1 + $0x3fc] sm:$0xf]
  %v5246 = vld [vmem:[%s1 + $0x40c] sm:$0xf]
  %v5247 = vld [vmem:[%s1 + $0x41c] sm:$0xf]
  %v5248 = vld [vmem:[%s1 + $0x42c] sm:$0xf]
  %v5249 = vld [vmem:[%s1 + $0x43c] sm:$0xf]
  %v5250 = vld [vmem:[%s1 + $0x44c] sm:$0xf]
  %v5251 = vld [vmem:[%s1 + $0x45c] sm:$0xf]
  %v5252 = vld [vmem:[%s1 + $0x46c] sm:$0xf]
  %v5253 = vld [vmem:[%s1 + $0x47c] sm:$0xf]
  %v5254 = vld [vmem:[%s1 + $0x48c] sm:$0xf]
  %v5255 = vld [vmem:[%s1 + $0x49c] sm:$0xf]
  %v5256 = vld [vmem:[%s1 + $0x4ac] sm:$0xf]
  %v5257 = vld [vmem:[%s1 + $0x4bc] sm:$0xf]
  %v5258 = vld [vmem:[%s1 + $0x4cc] sm:$0xf]
  %v5259 = vld [vmem:[%s1 + $0x4dc] sm:$0xf]
  %v5260 = vld [vmem:[%s1 + $0x4ec] sm:$0xf]
  %v5261 = vld [vmem:[%s1 + $0x4fc] sm:$0xf]
  %v5262 = vld [vmem:[%s1 + $0x50c] sm:$0xf]
  %v5263 = vld [vmem:[%s1 + $0x51c] sm:$0xf]
  %v5264 = vld [vmem:[%s1 + $0x52c] sm:$0xf]
  %v5265 = vld [vmem:[%s1 + $0x53c] sm:$0xf]
  %v5266 = vld [vmem:[%s1 + $0x54c] sm:$0xf]
  %v5267 = vld [vmem:[%s1 + $0x55c] sm:$0xf]
  %v5268 = vld [vmem:[%s1 + $0x56c] sm:$0xf]
  %v5269 = vld [vmem:[%s1 + $0x57c] sm:$0xf]
  %v5270 = vld [vmem:[%s1 + $0x58c] sm:$0xf]
  %v5271 = vld [vmem:[%s1 + $0x59c] sm:$0xf]
  %v5272 = vld [vmem:[%s1 + $0x5ac] sm:$0xf]
  %v5273 = vld [vmem:[%s1 + $0x5bc] sm:$0xf]
  %v5274 = vld [vmem:[%s1 + $0x5cc] sm:$0xf]
  %v5275 = vld [vmem:[%s1 + $0x5dc] sm:$0xf]
  %v5276 = vld [vmem:[%s1 + $0x5ec] sm:$0xf]
  %v5277 = vld [vmem:[%s1 + $0x5fc] sm:$0xf]
  %v5278 = vld [vmem:[%s1 + $0x60c] sm:$0xf]
  %v5279 = vld [vmem:[%s1 + $0x61c] sm:$0xf]
  %v5280 = vld [vmem:[%s1 + $0x62c] sm:$0xf]
  %v5281 = vld [vmem:[%s1 + $0x63c] sm:$0xf]
  %v5282 = vld [vmem:[%s1 + $0x64c] sm:$0xf]
  %v5283 = vld [vmem:[%s1 + $0x65c] sm:$0xf]
  %v5284 = vld [vmem:[%s1 + $0x66c] sm:$0xf]
  %v5285 = vld [vmem:[%s1 + $0x67c] sm:$0xf]
  %v5286 = vld [vmem:[%s1 + $0x68c] sm:$0xf]
  %v5287 = vld [vmem:[%s1 + $0x69c] sm:$0xf]
  %v5288 = vld [vmem:[%s1 + $0x6ac] sm:$0xf]
  %v5289 = vld [vmem:[%s1 + $0x6bc] sm:$0xf]
  %v5290 = vld [vmem:[%s1 + $0x6cc] sm:$0xf]
  %v5291 = vld [vmem:[%s1 + $0x6dc] sm:$0xf]
  %v5292 = vld [vmem:[%s1 + $0x6ec] sm:$0xf]
  %v5293 = vld [vmem:[%s1 + $0x6fc] sm:$0xf]
  %v5294 = vld [vmem:[%s1 + $0x70c] sm:$0xf]
  %v5295 = vld [vmem:[%s1 + $0x71c] sm:$0xf]
  %v5296 = vld [vmem:[%s1 + $0x72c] sm:$0xf]
  %v5297 = vld [vmem:[%s1 + $0x73c] sm:$0xf]
  %v5298 = vld [vmem:[%s1 + $0x74c] sm:$0xf]
  %v5299 = vld [vmem:[%s1 + $0x75c] sm:$0xf]
  %v5300 = vld [vmem:[%s1 + $0x76c] sm:$0xf]
  %v5301 = vld [vmem:[%s1 + $0x77c] sm:$0xf]
  %v5302 = vld [vmem:[%s1 + $0x78c] sm:$0xf]
  %v5303 = vld [vmem:[%s1 + $0x79c] sm:$0xf]
  %v5304 = vld [vmem:[%s1 + $0x7ac] sm:$0xf]
  %v5305 = vld [vmem:[%s1 + $0x7bc] sm:$0xf]
  %v5306 = vld [vmem:[%s1 + $0x7cc] sm:$0xf]
  %v5307 = vld [vmem:[%s2 + $0x3] sm:$0x1]
  %v5309 = vperm.slane %v5307, 0
  %v5436 = vunpack.c.l.b16 %v5182
  %v5437 = vunpack.c.l.b16 %v5183
  %v5438 = vunpack.c.l.b16 %v5184
  %v5439 = vunpack.c.l.b16 %v5185
  %v5440 = vunpack.c.l.b16 %v5186
  %v5441 = vunpack.c.l.b16 %v5187
  %v5442 = vunpack.c.l.b16 %v5188
  %v5443 = vunpack.c.l.b16 %v5189
  %v5444 = vunpack.c.l.b16 %v5190
  %v5445 = vunpack.c.l.b16 %v5191
  %v5446 = vunpack.c.l.b16 %v5192
  %v5447 = vunpack.c.l.b16 %v5193
  %v5448 = vunpack.c.l.b16 %v5194
  %v5449 = vunpack.c.l.b16 %v5195
  %v5450 = vunpack.c.l.b16 %v5196
  %v5451 = vunpack.c.l.b16 %v5197
  %v5452 = vunpack.c.l.b16 %v5198
  %v5453 = vunpack.c.l.b16 %v5199
  %v5454 = vunpack.c.l.b16 %v5200
  %v5455 = vunpack.c.l.b16 %v5201
  %v5456 = vunpack.c.l.b16 %v5202
  %v5457 = vunpack.c.l.b16 %v5203
  %v5458 = vunpack.c.l.b16 %v5204
  %v5459 = vunpack.c.l.b16 %v5205
  %v5460 = vunpack.c.l.b16 %v5206
  %v5461 = vunpack.c.l.b16 %v5207
  %v5462 = vunpack.c.l.b16 %v5208
  %v5463 = vunpack.c.l.b16 %v5209
  %v5464 = vunpack.c.l.b16 %v5210
  %v5465 = vunpack.c.l.b16 %v5211
  %v5466 = vunpack.c.l.b16 %v5212
  %v5467 = vunpack.c.l.b16 %v5213
  %v5468 = vunpack.c.l.b16 %v5214
  %v5469 = vunpack.c.l.b16 %v5215
  %v5470 = vunpack.c.l.b16 %v5216
  %v5471 = vunpack.c.l.b16 %v5217
  %v5472 = vunpack.c.l.b16 %v5218
  %v5473 = vunpack.c.l.b16 %v5219
  %v5474 = vunpack.c.l.b16 %v5220
  %v5475 = vunpack.c.l.b16 %v5221
  %v5476 = vunpack.c.l.b16 %v5222
  %v5477 = vunpack.c.l.b16 %v5223
  %v5478 = vunpack.c.l.b16 %v5224
  %v5479 = vunpack.c.l.b16 %v5225
  %v5480 = vunpack.c.l.b16 %v5226
  %v5481 = vunpack.c.l.b16 %v5227
  %v5482 = vunpack.c.l.b16 %v5228
  %v5483 = vunpack.c.l.b16 %v5229
  %v5484 = vunpack.c.l.b16 %v5230
  %v5485 = vunpack.c.l.b16 %v5231
  %v5486 = vunpack.c.l.b16 %v5232
  %v5487 = vunpack.c.l.b16 %v5233
  %v5488 = vunpack.c.l.b16 %v5234
  %v5489 = vunpack.c.l.b16 %v5235
  %v5490 = vunpack.c.l.b16 %v5236
  %v5491 = vunpack.c.l.b16 %v5237
  %v5492 = vunpack.c.l.b16 %v5238
  %v5493 = vunpack.c.l.b16 %v5239
  %v5494 = vunpack.c.l.b16 %v5240
  %v5495 = vunpack.c.l.b16 %v5241
  %v5496 = vunpack.c.l.b16 %v5242
  %v5497 = vunpack.c.l.b16 %v5243
  %v5498 = vunpack.c.l.b16 %v5244
  %v5499 = vunpack.c.l.b16 %v5245
  %v5500 = vunpack.c.l.b16 %v5246
  %v5501 = vunpack.c.l.b16 %v5247
  %v5502 = vunpack.c.l.b16 %v5248
  %v5503 = vunpack.c.l.b16 %v5249
  %v5504 = vunpack.c.l.b16 %v5250
  %v5505 = vunpack.c.l.b16 %v5251
  %v5506 = vunpack.c.l.b16 %v5252
  %v5507 = vunpack.c.l.b16 %v5253
  %v5508 = vunpack.c.l.b16 %v5254
  %v5509 = vunpack.c.l.b16 %v5255
  %v5510 = vunpack.c.l.b16 %v5256
  %v5511 = vunpack.c.l.b16 %v5257
  %v5512 = vunpack.c.l.b16 %v5258
  %v5513 = vunpack.c.l.b16 %v5259
  %v5514 = vunpack.c.l.b16 %v5260
  %v5515 = vunpack.c.l.b16 %v5261
  %v5516 = vunpack.c.l.b16 %v5262
  %v5517 = vunpack.c.l.b16 %v5263
  %v5518 = vunpack.c.l.b16 %v5264
  %v5519 = vunpack.c.l.b16 %v5265
  %v5520 = vunpack.c.l.b16 %v5266
  %v5521 = vunpack.c.l.b16 %v5267
  %v5522 = vunpack.c.l.b16 %v5268
  %v5523 = vunpack.c.l.b16 %v5269
  %v5524 = vunpack.c.l.b16 %v5270
  %v5525 = vunpack.c.l.b16 %v5271
  %v5526 = vunpack.c.l.b16 %v5272
  %v5527 = vunpack.c.l.b16 %v5273
  %v5528 = vunpack.c.l.b16 %v5274
  %v5529 = vunpack.c.l.b16 %v5275
  %v5530 = vunpack.c.l.b16 %v5276
  %v5531 = vunpack.c.l.b16 %v5277
  %v5532 = vunpack.c.l.b16 %v5278
  %v5533 = vunpack.c.l.b16 %v5279
  %v5534 = vunpack.c.l.b16 %v5280
  %v5535 = vunpack.c.l.b16 %v5281
  %v5536 = vunpack.c.l.b16 %v5282
  %v5537 = vunpack.c.l.b16 %v5283
  %v5538 = vunpack.c.l.b16 %v5284
  %v5539 = vunpack.c.l.b16 %v5285
  %v5540 = vunpack.c.l.b16 %v5286
  %v5541 = vunpack.c.l.b16 %v5287
  %v5542 = vunpack.c.l.b16 %v5288
  %v5543 = vunpack.c.l.b16 %v5289
  %v5544 = vunpack.c.l.b16 %v5290
  %v5545 = vunpack.c.l.b16 %v5291
  %v5546 = vunpack.c.l.b16 %v5292
  %v5547 = vunpack.c.l.b16 %v5293
  %v5548 = vunpack.c.l.b16 %v5294
  %v5549 = vunpack.c.l.b16 %v5295
  %v5550 = vunpack.c.l.b16 %v5296
  %v5551 = vunpack.c.l.b16 %v5297
  %v5552 = vunpack.c.l.b16 %v5298
  %v5553 = vunpack.c.l.b16 %v5299
  %v5554 = vunpack.c.l.b16 %v5300
  %v5555 = vunpack.c.l.b16 %v5301
  %v5556 = vunpack.c.l.b16 %v5302
  %v5557 = vunpack.c.l.b16 %v5303
  %v5558 = vunpack.c.l.b16 %v5304
  %v5559 = vunpack.c.l.b16 %v5305
  %v5560 = vunpack.c.l.b16 %v5306
  %v5561 = vpack.c.b16 %v5437, %v5436
  %v5562 = vpack.c.b16 %v5439, %v5438
  %v5563 = vpack.c.b16 %v5441, %v5440
  %v5564 = vpack.c.b16 %v5443, %v5442
  %v5565 = vpack.c.b16 %v5445, %v5444
  %v5566 = vpack.c.b16 %v5447, %v5446
  %v5567 = vpack.c.b16 %v5449, %v5448
  %v5568 = vpack.c.b16 %v5451, %v5450
  %v5569 = vpack.c.b16 %v5453, %v5452
  %v5570 = vpack.c.b16 %v5455, %v5454
  %v5571 = vpack.c.b16 %v5457, %v5456
  %v5572 = vpack.c.b16 %v5459, %v5458
  %v5573 = vpack.c.b16 %v5461, %v5460
  %v5574 = vpack.c.b16 %v5463, %v5462
  %v5575 = vpack.c.b16 %v5465, %v5464
  %v5576 = vpack.c.b16 %v5467, %v5466
  %v5577 = vpack.c.b16 %v5469, %v5468
  %v5578 = vpack.c.b16 %v5471, %v5470
  %v5579 = vpack.c.b16 %v5473, %v5472
  %v5580 = vpack.c.b16 %v5475, %v5474
  %v5581 = vpack.c.b16 %v5477, %v5476
  %v5582 = vpack.c.b16 %v5479, %v5478
  %v5583 = vpack.c.b16 %v5481, %v5480
  %v5584 = vpack.c.b16 %v5483, %v5482
  %v5585 = vpack.c.b16 %v5485, %v5484
  %v5586 = vpack.c.b16 %v5487, %v5486
  %v5587 = vpack.c.b16 %v5489, %v5488
  %v5588 = vpack.c.b16 %v5491, %v5490
  %v5589 = vpack.c.b16 %v5493, %v5492
  %v5590 = vpack.c.b16 %v5495, %v5494
  %v5591 = vpack.c.b16 %v5497, %v5496
  %v5592 = vpack.c.b16 %v5499, %v5498
  %v5593 = vpack.c.b16 %v5501, %v5500
  %v5594 = vpack.c.b16 %v5503, %v5502
  %v5595 = vpack.c.b16 %v5505, %v5504
  %v5596 = vpack.c.b16 %v5507, %v5506
  %v5597 = vpack.c.b16 %v5509, %v5508
  %v5598 = vpack.c.b16 %v5511, %v5510
  %v5599 = vpack.c.b16 %v5513, %v5512
  %v5600 = vpack.c.b16 %v5515, %v5514
  %v5601 = vpack.c.b16 %v5517, %v5516
  %v5602 = vpack.c.b16 %v5519, %v5518
  %v5603 = vpack.c.b16 %v5521, %v5520
  %v5604 = vpack.c.b16 %v5523, %v5522
  %v5605 = vpack.c.b16 %v5525, %v5524
  %v5606 = vpack.c.b16 %v5527, %v5526
  %v5607 = vpack.c.b16 %v5529, %v5528
  %v5608 = vpack.c.b16 %v5531, %v5530
  %v5609 = vpack.c.b16 %v5533, %v5532
  %v5610 = vpack.c.b16 %v5535, %v5534
  %v5611 = vpack.c.b16 %v5537, %v5536
  %v5612 = vpack.c.b16 %v5539, %v5538
  %v5613 = vpack.c.b16 %v5541, %v5540
  %v5614 = vpack.c.b16 %v5543, %v5542
  %v5615 = vpack.c.b16 %v5545, %v5544
  %v5616 = vpack.c.b16 %v5547, %v5546
  %v5617 = vpack.c.b16 %v5549, %v5548
  %v5618 = vpack.c.b16 %v5551, %v5550
  %v5619 = vpack.c.b16 %v5553, %v5552
  %v5620 = vpack.c.b16 %v5555, %v5554
  %v5621 = vpack.c.b16 %v5557, %v5556
  %v5622 = vpack.c.b16 %v5559, %v5558
  %v5623 = vpack.c.b16 %v5560, %v5560
  %v5687 = vsel %vm1014, %v5623, 0
  %5689 = vmatpush.bf16.msra.mxu0 %v5568
  %5690 = vmatpush.bf16.msra.mxu0 %v5567
  %5691 = vmatpush.bf16.msra.mxu0 %v5566
  %5692 = vmatpush.bf16.msra.mxu0 %v5565
  %5693 = vmatpush.bf16.msra.mxu0 %v5564
  %5694 = vmatpush.bf16.msra.mxu0 %v5563
  %5695 = vmatpush.bf16.msra.mxu0 %v5562
  %5696 = vmatpush.bf16.msra.mxu0 %v5561
  %5697 = vmatmul.bf16.gmra.mxu0 %v285
  %v5698 = vpop.f32.mrf.mxu0
  %v5699 = vadd.f32 %v5309, %v5698
  %v5700 = vpop.f32.mrf.mxu0
  %v5701 = vadd.f32 %v5309, %v5700
  %5702 = vmatmul.bf16.gmra.mxu0 %v293
  %v5703 = vpop.f32.mrf.mxu0
  %v5704 = vadd.f32 %v5309, %v5703
  %v5705 = vpop.f32.mrf.mxu0
  %v5706 = vadd.f32 %v5309, %v5705
  %5707 = vmatmul.bf16.gmra.mxu0 %v301
  %v5708 = vpop.f32.mrf.mxu0
  %v5709 = vadd.f32 %v5309, %v5708
  %v5710 = vpop.f32.mrf.mxu0
  %v5711 = vadd.f32 %v5309, %v5710
  %5712 = vmatmul.bf16.gmra.mxu0 %v309
  %v5713 = vpop.f32.mrf.mxu0
  %v5714 = vadd.f32 %v5309, %v5713
  %v5715 = vpop.f32.mrf.mxu0
  %v5716 = vadd.f32 %v5309, %v5715
  %5717 = vmatmul.bf16.gmra.mxu0 %v317
  %v5718 = vpop.f32.mrf.mxu0
  %v5719 = vadd.f32 %v5309, %v5718
  %v5720 = vpop.f32.mrf.mxu0
  %v5721 = vadd.f32 %v5309, %v5720
  %5722 = vmatmul.bf16.gmra.mxu0 %v325
  %v5723 = vpop.f32.mrf.mxu0
  %v5724 = vadd.f32 %v5309, %v5723
  %v5725 = vpop.f32.mrf.mxu0
  %v5726 = vadd.f32 %v5309, %v5725
  %5727 = vmatmul.bf16.gmra.mxu0 %v333
  %v5728 = vpop.f32.mrf.mxu0
  %v5729 = vadd.f32 %v5309, %v5728
  %v5730 = vpop.f32.mrf.mxu0
  %v5731 = vadd.f32 %v5309, %v5730
  %5732 = vmatmul.bf16.gmra.mxu0 %v341
  %v5733 = vpop.f32.mrf.mxu0
  %v5734 = vadd.f32 %v5309, %v5733
  %v5735 = vpop.f32.mrf.mxu0
  %v5736 = vadd.f32 %v5309, %v5735
  %5737 = vmatmul.bf16.gmra.mxu0 %v349
  %v5738 = vpop.f32.mrf.mxu0
  %v5739 = vadd.f32 %v5309, %v5738
  %v5740 = vpop.f32.mrf.mxu0
  %v5741 = vadd.f32 %v5309, %v5740
  %5742 = vmatmul.bf16.gmra.mxu0 %v357
  %v5743 = vpop.f32.mrf.mxu0
  %v5744 = vadd.f32 %v5309, %v5743
  %v5745 = vpop.f32.mrf.mxu0
  %v5746 = vadd.f32 %v5309, %v5745
  %5747 = vmatmul.bf16.gmra.mxu0 %v365
  %v5748 = vpop.f32.mrf.mxu0
  %v5749 = vadd.f32 %v5309, %v5748
  %v5750 = vpop.f32.mrf.mxu0
  %v5751 = vadd.f32 %v5309, %v5750
  %5752 = vmatmul.bf16.gmra.mxu0 %v373
  %v5753 = vpop.f32.mrf.mxu0
  %v5754 = vadd.f32 %v5309, %v5753
  %v5755 = vpop.f32.mrf.mxu0
  %v5756 = vadd.f32 %v5309, %v5755
  %5757 = vmatmul.bf16.gmra.mxu0 %v381
  %v5758 = vpop.f32.mrf.mxu0
  %v5759 = vadd.f32 %v5309, %v5758
  %v5760 = vpop.f32.mrf.mxu0
  %v5761 = vadd.f32 %v5309, %v5760
  %5762 = vmatmul.bf16.gmra.mxu0 %v389
  %v5763 = vpop.f32.mrf.mxu0
  %v5764 = vadd.f32 %v5309, %v5763
  %v5765 = vpop.f32.mrf.mxu0
  %v5766 = vadd.f32 %v5309, %v5765
  %5767 = vmatmul.bf16.gmra.mxu0 %v397
  %v5768 = vpop.f32.mrf.mxu0
  %v5769 = vadd.f32 %v5309, %v5768
  %v5770 = vpop.f32.mrf.mxu0
  %v5771 = vadd.f32 %v5309, %v5770
  %5772 = vmatmul.bf16.gmra.mxu0 %v405
  %v5773 = vpop.f32.mrf.mxu0
  %v5774 = vadd.f32 %v5309, %v5773
  %v5775 = vpop.f32.mrf.mxu0
  %v5776 = vadd.f32 %v5309, %v5775
  %5777 = vmatmul.bf16.gmra.mxu0 %v413
  %v5778 = vpop.f32.mrf.mxu0
  %v5779 = vadd.f32 %v5309, %v5778
  %v5780 = vpop.f32.mrf.mxu0
  %5781 = vdwg.mxu0
  %5782 = vmatpush.bf16.msra.mxu0 %v5576
  %5783 = vmatpush.bf16.msra.mxu0 %v5575
  %5784 = vmatpush.bf16.msra.mxu0 %v5574
  %5785 = vmatpush.bf16.msra.mxu0 %v5573
  %5786 = vmatpush.bf16.msra.mxu0 %v5572
  %5787 = vmatpush.bf16.msra.mxu0 %v5571
  %5788 = vmatpush.bf16.msra.mxu0 %v5570
  %5789 = vmatpush.bf16.msra.mxu0 %v5569
  %5790 = vmatmul.bf16.gmra.mxu0 %v286
  %v5791 = vpop.f32.mrf.mxu0
  %v5792 = vadd.f32 %v5699, %v5791
  %v5793 = vpop.f32.mrf.mxu0
  %v5794 = vadd.f32 %v5701, %v5793
  %5795 = vmatmul.bf16.gmra.mxu0 %v294
  %v5796 = vpop.f32.mrf.mxu0
  %v5797 = vadd.f32 %v5704, %v5796
  %v5798 = vpop.f32.mrf.mxu0
  %v5799 = vadd.f32 %v5706, %v5798
  %5800 = vmatmul.bf16.gmra.mxu0 %v302
  %v5801 = vpop.f32.mrf.mxu0
  %v5802 = vadd.f32 %v5709, %v5801
  %v5803 = vpop.f32.mrf.mxu0
  %v5804 = vadd.f32 %v5711, %v5803
  %5805 = vmatmul.bf16.gmra.mxu0 %v310
  %v5806 = vpop.f32.mrf.mxu0
  %v5807 = vadd.f32 %v5714, %v5806
  %v5808 = vpop.f32.mrf.mxu0
  %v5809 = vadd.f32 %v5716, %v5808
  %5810 = vmatmul.bf16.gmra.mxu0 %v318
  %v5811 = vpop.f32.mrf.mxu0
  %v5812 = vadd.f32 %v5719, %v5811
  %v5813 = vpop.f32.mrf.mxu0
  %v5814 = vadd.f32 %v5721, %v5813
  %5815 = vmatmul.bf16.gmra.mxu0 %v326
  %v5816 = vpop.f32.mrf.mxu0
  %v5817 = vadd.f32 %v5724, %v5816
  %v5818 = vpop.f32.mrf.mxu0
  %v5819 = vadd.f32 %v5726, %v5818
  %5820 = vmatmul.bf16.gmra.mxu0 %v334
  %v5821 = vpop.f32.mrf.mxu0
  %v5822 = vadd.f32 %v5729, %v5821
  %v5823 = vpop.f32.mrf.mxu0
  %v5824 = vadd.f32 %v5731, %v5823
  %5825 = vmatmul.bf16.gmra.mxu0 %v342
  %v5826 = vpop.f32.mrf.mxu0
  %v5827 = vadd.f32 %v5734, %v5826
  %v5828 = vpop.f32.mrf.mxu0
  %v5829 = vadd.f32 %v5736, %v5828
  %5830 = vmatmul.bf16.gmra.mxu0 %v350
  %v5831 = vpop.f32.mrf.mxu0
  %v5832 = vadd.f32 %v5739, %v5831
  %v5833 = vpop.f32.mrf.mxu0
  %v5834 = vadd.f32 %v5741, %v5833
  %5835 = vmatmul.bf16.gmra.mxu0 %v358
  %v5836 = vpop.f32.mrf.mxu0
  %v5837 = vadd.f32 %v5744, %v5836
  %v5838 = vpop.f32.mrf.mxu0
  %v5839 = vadd.f32 %v5746, %v5838
  %5840 = vmatmul.bf16.gmra.mxu0 %v366
  %v5841 = vpop.f32.mrf.mxu0
  %v5842 = vadd.f32 %v5749, %v5841
  %v5843 = vpop.f32.mrf.mxu0
  %v5844 = vadd.f32 %v5751, %v5843
  %5845 = vmatmul.bf16.gmra.mxu0 %v374
  %v5846 = vpop.f32.mrf.mxu0
  %v5847 = vadd.f32 %v5754, %v5846
  %v5848 = vpop.f32.mrf.mxu0
  %v5849 = vadd.f32 %v5756, %v5848
  %5850 = vmatmul.bf16.gmra.mxu0 %v382
  %v5851 = vpop.f32.mrf.mxu0
  %v5852 = vadd.f32 %v5759, %v5851
  %v5853 = vpop.f32.mrf.mxu0
  %v5854 = vadd.f32 %v5761, %v5853
  %5855 = vmatmul.bf16.gmra.mxu0 %v390
  %v5856 = vpop.f32.mrf.mxu0
  %v5857 = vadd.f32 %v5764, %v5856
  %v5858 = vpop.f32.mrf.mxu0
  %v5859 = vadd.f32 %v5766, %v5858
  %5860 = vmatmul.bf16.gmra.mxu0 %v398
  %v5861 = vpop.f32.mrf.mxu0
  %v5862 = vadd.f32 %v5769, %v5861
  %v5863 = vpop.f32.mrf.mxu0
  %v5864 = vadd.f32 %v5771, %v5863
  %5865 = vmatmul.bf16.gmra.mxu0 %v406
  %v5866 = vpop.f32.mrf.mxu0
  %v5867 = vadd.f32 %v5774, %v5866
  %v5868 = vpop.f32.mrf.mxu0
  %v5869 = vadd.f32 %v5776, %v5868
  %5870 = vmatmul.bf16.gmra.mxu0 %v414
  %v5871 = vpop.f32.mrf.mxu0
  %v5872 = vadd.f32 %v5779, %v5871
  %v5873 = vpop.f32.mrf.mxu0
  %5874 = vdwg.mxu0
  %5875 = vmatpush.bf16.msra.mxu0 %v5584
  %5876 = vmatpush.bf16.msra.mxu0 %v5583
  %5877 = vmatpush.bf16.msra.mxu0 %v5582
  %5878 = vmatpush.bf16.msra.mxu0 %v5581
  %5879 = vmatpush.bf16.msra.mxu0 %v5580
  %5880 = vmatpush.bf16.msra.mxu0 %v5579
  %5881 = vmatpush.bf16.msra.mxu0 %v5578
  %5882 = vmatpush.bf16.msra.mxu0 %v5577
  %5883 = vmatmul.bf16.gmra.mxu0 %v287
  %v5884 = vpop.f32.mrf.mxu0
  %v5885 = vadd.f32 %v5792, %v5884
  %v5886 = vpop.f32.mrf.mxu0
  %v5887 = vadd.f32 %v5794, %v5886
  %5888 = vmatmul.bf16.gmra.mxu0 %v295
  %v5889 = vpop.f32.mrf.mxu0
  %v5890 = vadd.f32 %v5797, %v5889
  %v5891 = vpop.f32.mrf.mxu0
  %v5892 = vadd.f32 %v5799, %v5891
  %5893 = vmatmul.bf16.gmra.mxu0 %v303
  %v5894 = vpop.f32.mrf.mxu0
  %v5895 = vadd.f32 %v5802, %v5894
  %v5896 = vpop.f32.mrf.mxu0
  %v5897 = vadd.f32 %v5804, %v5896
  %5898 = vmatmul.bf16.gmra.mxu0 %v311
  %v5899 = vpop.f32.mrf.mxu0
  %v5900 = vadd.f32 %v5807, %v5899
  %v5901 = vpop.f32.mrf.mxu0
  %v5902 = vadd.f32 %v5809, %v5901
  %5903 = vmatmul.bf16.gmra.mxu0 %v319
  %v5904 = vpop.f32.mrf.mxu0
  %v5905 = vadd.f32 %v5812, %v5904
  %v5906 = vpop.f32.mrf.mxu0
  %v5907 = vadd.f32 %v5814, %v5906
  %5908 = vmatmul.bf16.gmra.mxu0 %v327
  %v5909 = vpop.f32.mrf.mxu0
  %v5910 = vadd.f32 %v5817, %v5909
  %v5911 = vpop.f32.mrf.mxu0
  %v5912 = vadd.f32 %v5819, %v5911
  %5913 = vmatmul.bf16.gmra.mxu0 %v335
  %v5914 = vpop.f32.mrf.mxu0
  %v5915 = vadd.f32 %v5822, %v5914
  %v5916 = vpop.f32.mrf.mxu0
  %v5917 = vadd.f32 %v5824, %v5916
  %5918 = vmatmul.bf16.gmra.mxu0 %v343
  %v5919 = vpop.f32.mrf.mxu0
  %v5920 = vadd.f32 %v5827, %v5919
  %v5921 = vpop.f32.mrf.mxu0
  %v5922 = vadd.f32 %v5829, %v5921
  %5923 = vmatmul.bf16.gmra.mxu0 %v351
  %v5924 = vpop.f32.mrf.mxu0
  %v5925 = vadd.f32 %v5832, %v5924
  %v5926 = vpop.f32.mrf.mxu0
  %v5927 = vadd.f32 %v5834, %v5926
  %5928 = vmatmul.bf16.gmra.mxu0 %v359
  %v5929 = vpop.f32.mrf.mxu0
  %v5930 = vadd.f32 %v5837, %v5929
  %v5931 = vpop.f32.mrf.mxu0
  %v5932 = vadd.f32 %v5839, %v5931
  %5933 = vmatmul.bf16.gmra.mxu0 %v367
  %v5934 = vpop.f32.mrf.mxu0
  %v5935 = vadd.f32 %v5842, %v5934
  %v5936 = vpop.f32.mrf.mxu0
  %v5937 = vadd.f32 %v5844, %v5936
  %5938 = vmatmul.bf16.gmra.mxu0 %v375
  %v5939 = vpop.f32.mrf.mxu0
  %v5940 = vadd.f32 %v5847, %v5939
  %v5941 = vpop.f32.mrf.mxu0
  %v5942 = vadd.f32 %v5849, %v5941
  %5943 = vmatmul.bf16.gmra.mxu0 %v383
  %v5944 = vpop.f32.mrf.mxu0
  %v5945 = vadd.f32 %v5852, %v5944
  %v5946 = vpop.f32.mrf.mxu0
  %v5947 = vadd.f32 %v5854, %v5946
  %5948 = vmatmul.bf16.gmra.mxu0 %v391
  %v5949 = vpop.f32.mrf.mxu0
  %v5950 = vadd.f32 %v5857, %v5949
  %v5951 = vpop.f32.mrf.mxu0
  %v5952 = vadd.f32 %v5859, %v5951
  %5953 = vmatmul.bf16.gmra.mxu0 %v399
  %v5954 = vpop.f32.mrf.mxu0
  %v5955 = vadd.f32 %v5862, %v5954
  %v5956 = vpop.f32.mrf.mxu0
  %v5957 = vadd.f32 %v5864, %v5956
  %5958 = vmatmul.bf16.gmra.mxu0 %v407
  %v5959 = vpop.f32.mrf.mxu0
  %v5960 = vadd.f32 %v5867, %v5959
  %v5961 = vpop.f32.mrf.mxu0
  %v5962 = vadd.f32 %v5869, %v5961
  %5963 = vmatmul.bf16.gmra.mxu0 %v415
  %v5964 = vpop.f32.mrf.mxu0
  %v5965 = vadd.f32 %v5872, %v5964
  %v5966 = vpop.f32.mrf.mxu0
  %5967 = vdwg.mxu0
  %5968 = vmatpush.bf16.msra.mxu0 %v5592
  %5969 = vmatpush.bf16.msra.mxu0 %v5591
  %5970 = vmatpush.bf16.msra.mxu0 %v5590
  %5971 = vmatpush.bf16.msra.mxu0 %v5589
  %5972 = vmatpush.bf16.msra.mxu0 %v5588
  %5973 = vmatpush.bf16.msra.mxu0 %v5587
  %5974 = vmatpush.bf16.msra.mxu0 %v5586
  %5975 = vmatpush.bf16.msra.mxu0 %v5585
  %5976 = vmatmul.bf16.gmra.mxu0 %v288
  %v5977 = vpop.f32.mrf.mxu0
  %v5978 = vadd.f32 %v5885, %v5977
  %v5979 = vpop.f32.mrf.mxu0
  %v5980 = vadd.f32 %v5887, %v5979
  %5981 = vmatmul.bf16.gmra.mxu0 %v296
  %v5982 = vpop.f32.mrf.mxu0
  %v5983 = vadd.f32 %v5890, %v5982
  %v5984 = vpop.f32.mrf.mxu0
  %v5985 = vadd.f32 %v5892, %v5984
  %5986 = vmatmul.bf16.gmra.mxu0 %v304
  %v5987 = vpop.f32.mrf.mxu0
  %v5988 = vadd.f32 %v5895, %v5987
  %v5989 = vpop.f32.mrf.mxu0
  %v5990 = vadd.f32 %v5897, %v5989
  %5991 = vmatmul.bf16.gmra.mxu0 %v312
  %v5992 = vpop.f32.mrf.mxu0
  %v5993 = vadd.f32 %v5900, %v5992
  %v5994 = vpop.f32.mrf.mxu0
  %v5995 = vadd.f32 %v5902, %v5994
  %5996 = vmatmul.bf16.gmra.mxu0 %v320
  %v5997 = vpop.f32.mrf.mxu0
  %v5998 = vadd.f32 %v5905, %v5997
  %v5999 = vpop.f32.mrf.mxu0
  %v6000 = vadd.f32 %v5907, %v5999
  %6001 = vmatmul.bf16.gmra.mxu0 %v328
  %v6002 = vpop.f32.mrf.mxu0
  %v6003 = vadd.f32 %v5910, %v6002
  %v6004 = vpop.f32.mrf.mxu0
  %v6005 = vadd.f32 %v5912, %v6004
  %6006 = vmatmul.bf16.gmra.mxu0 %v336
  %v6007 = vpop.f32.mrf.mxu0
  %v6008 = vadd.f32 %v5915, %v6007
  %v6009 = vpop.f32.mrf.mxu0
  %v6010 = vadd.f32 %v5917, %v6009
  %6011 = vmatmul.bf16.gmra.mxu0 %v344
  %v6012 = vpop.f32.mrf.mxu0
  %v6013 = vadd.f32 %v5920, %v6012
  %v6014 = vpop.f32.mrf.mxu0
  %v6015 = vadd.f32 %v5922, %v6014
  %6016 = vmatmul.bf16.gmra.mxu0 %v352
  %v6017 = vpop.f32.mrf.mxu0
  %v6018 = vadd.f32 %v5925, %v6017
  %v6019 = vpop.f32.mrf.mxu0
  %v6020 = vadd.f32 %v5927, %v6019
  %6021 = vmatmul.bf16.gmra.mxu0 %v360
  %v6022 = vpop.f32.mrf.mxu0
  %v6023 = vadd.f32 %v5930, %v6022
  %v6024 = vpop.f32.mrf.mxu0
  %v6025 = vadd.f32 %v5932, %v6024
  %6026 = vmatmul.bf16.gmra.mxu0 %v368
  %v6027 = vpop.f32.mrf.mxu0
  %v6028 = vadd.f32 %v5935, %v6027
  %v6029 = vpop.f32.mrf.mxu0
  %v6030 = vadd.f32 %v5937, %v6029
  %6031 = vmatmul.bf16.gmra.mxu0 %v376
  %v6032 = vpop.f32.mrf.mxu0
  %v6033 = vadd.f32 %v5940, %v6032
  %v6034 = vpop.f32.mrf.mxu0
  %v6035 = vadd.f32 %v5942, %v6034
  %6036 = vmatmul.bf16.gmra.mxu0 %v384
  %v6037 = vpop.f32.mrf.mxu0
  %v6038 = vadd.f32 %v5945, %v6037
  %v6039 = vpop.f32.mrf.mxu0
  %v6040 = vadd.f32 %v5947, %v6039
  %6041 = vmatmul.bf16.gmra.mxu0 %v392
  %v6042 = vpop.f32.mrf.mxu0
  %v6043 = vadd.f32 %v5950, %v6042
  %v6044 = vpop.f32.mrf.mxu0
  %v6045 = vadd.f32 %v5952, %v6044
  %6046 = vmatmul.bf16.gmra.mxu0 %v400
  %v6047 = vpop.f32.mrf.mxu0
  %v6048 = vadd.f32 %v5955, %v6047
  %v6049 = vpop.f32.mrf.mxu0
  %v6050 = vadd.f32 %v5957, %v6049
  %6051 = vmatmul.bf16.gmra.mxu0 %v408
  %v6052 = vpop.f32.mrf.mxu0
  %v6053 = vadd.f32 %v5960, %v6052
  %v6054 = vpop.f32.mrf.mxu0
  %v6055 = vadd.f32 %v5962, %v6054
  %6056 = vmatmul.bf16.gmra.mxu0 %v416
  %v6057 = vpop.f32.mrf.mxu0
  %v6058 = vadd.f32 %v5965, %v6057
  %v6059 = vpop.f32.mrf.mxu0
  %6060 = vdwg.mxu0
  %6061 = vmatpush.bf16.msra.mxu0 %v5600
  %6062 = vmatpush.bf16.msra.mxu0 %v5599
  %6063 = vmatpush.bf16.msra.mxu0 %v5598
  %6064 = vmatpush.bf16.msra.mxu0 %v5597
  %6065 = vmatpush.bf16.msra.mxu0 %v5596
  %6066 = vmatpush.bf16.msra.mxu0 %v5595
  %6067 = vmatpush.bf16.msra.mxu0 %v5594
  %6068 = vmatpush.bf16.msra.mxu0 %v5593
  %6069 = vmatmul.bf16.gmra.mxu0 %v289
  %v6070 = vpop.f32.mrf.mxu0
  %v6071 = vadd.f32 %v5978, %v6070
  %v6072 = vpop.f32.mrf.mxu0
  %v6073 = vadd.f32 %v5980, %v6072
  %6074 = vmatmul.bf16.gmra.mxu0 %v297
  %v6075 = vpop.f32.mrf.mxu0
  %v6076 = vadd.f32 %v5983, %v6075
  %v6077 = vpop.f32.mrf.mxu0
  %v6078 = vadd.f32 %v5985, %v6077
  %6079 = vmatmul.bf16.gmra.mxu0 %v305
  %v6080 = vpop.f32.mrf.mxu0
  %v6081 = vadd.f32 %v5988, %v6080
  %v6082 = vpop.f32.mrf.mxu0
  %v6083 = vadd.f32 %v5990, %v6082
  %6084 = vmatmul.bf16.gmra.mxu0 %v313
  %v6085 = vpop.f32.mrf.mxu0
  %v6086 = vadd.f32 %v5993, %v6085
  %v6087 = vpop.f32.mrf.mxu0
  %v6088 = vadd.f32 %v5995, %v6087
  %6089 = vmatmul.bf16.gmra.mxu0 %v321
  %v6090 = vpop.f32.mrf.mxu0
  %v6091 = vadd.f32 %v5998, %v6090
  %v6092 = vpop.f32.mrf.mxu0
  %v6093 = vadd.f32 %v6000, %v6092
  %6094 = vmatmul.bf16.gmra.mxu0 %v329
  %v6095 = vpop.f32.mrf.mxu0
  %v6096 = vadd.f32 %v6003, %v6095
  %v6097 = vpop.f32.mrf.mxu0
  %v6098 = vadd.f32 %v6005, %v6097
  %6099 = vmatmul.bf16.gmra.mxu0 %v337
  %v6100 = vpop.f32.mrf.mxu0
  %v6101 = vadd.f32 %v6008, %v6100
  %v6102 = vpop.f32.mrf.mxu0
  %v6103 = vadd.f32 %v6010, %v6102
  %6104 = vmatmul.bf16.gmra.mxu0 %v345
  %v6105 = vpop.f32.mrf.mxu0
  %v6106 = vadd.f32 %v6013, %v6105
  %v6107 = vpop.f32.mrf.mxu0
  %v6108 = vadd.f32 %v6015, %v6107
  %6109 = vmatmul.bf16.gmra.mxu0 %v353
  %v6110 = vpop.f32.mrf.mxu0
  %v6111 = vadd.f32 %v6018, %v6110
  %v6112 = vpop.f32.mrf.mxu0
  %v6113 = vadd.f32 %v6020, %v6112
  %6114 = vmatmul.bf16.gmra.mxu0 %v361
  %v6115 = vpop.f32.mrf.mxu0
  %v6116 = vadd.f32 %v6023, %v6115
  %v6117 = vpop.f32.mrf.mxu0
  %v6118 = vadd.f32 %v6025, %v6117
  %6119 = vmatmul.bf16.gmra.mxu0 %v369
  %v6120 = vpop.f32.mrf.mxu0
  %v6121 = vadd.f32 %v6028, %v6120
  %v6122 = vpop.f32.mrf.mxu0
  %v6123 = vadd.f32 %v6030, %v6122
  %6124 = vmatmul.bf16.gmra.mxu0 %v377
  %v6125 = vpop.f32.mrf.mxu0
  %v6126 = vadd.f32 %v6033, %v6125
  %v6127 = vpop.f32.mrf.mxu0
  %v6128 = vadd.f32 %v6035, %v6127
  %6129 = vmatmul.bf16.gmra.mxu0 %v385
  %v6130 = vpop.f32.mrf.mxu0
  %v6131 = vadd.f32 %v6038, %v6130
  %v6132 = vpop.f32.mrf.mxu0
  %v6133 = vadd.f32 %v6040, %v6132
  %6134 = vmatmul.bf16.gmra.mxu0 %v393
  %v6135 = vpop.f32.mrf.mxu0
  %v6136 = vadd.f32 %v6043, %v6135
  %v6137 = vpop.f32.mrf.mxu0
  %v6138 = vadd.f32 %v6045, %v6137
  %6139 = vmatmul.bf16.gmra.mxu0 %v401
  %v6140 = vpop.f32.mrf.mxu0
  %v6141 = vadd.f32 %v6048, %v6140
  %v6142 = vpop.f32.mrf.mxu0
  %v6143 = vadd.f32 %v6050, %v6142
  %6144 = vmatmul.bf16.gmra.mxu0 %v409
  %v6145 = vpop.f32.mrf.mxu0
  %v6146 = vadd.f32 %v6053, %v6145
  %v6147 = vpop.f32.mrf.mxu0
  %v6148 = vadd.f32 %v6055, %v6147
  %6149 = vmatmul.bf16.gmra.mxu0 %v417
  %v6150 = vpop.f32.mrf.mxu0
  %v6151 = vadd.f32 %v6058, %v6150
  %v6152 = vpop.f32.mrf.mxu0
  %6153 = vdwg.mxu0
  %6154 = vmatpush.bf16.msra.mxu0 %v5608
  %6155 = vmatpush.bf16.msra.mxu0 %v5607
  %6156 = vmatpush.bf16.msra.mxu0 %v5606
  %6157 = vmatpush.bf16.msra.mxu0 %v5605
  %6158 = vmatpush.bf16.msra.mxu0 %v5604
  %6159 = vmatpush.bf16.msra.mxu0 %v5603
  %6160 = vmatpush.bf16.msra.mxu0 %v5602
  %6161 = vmatpush.bf16.msra.mxu0 %v5601
  %6162 = vmatmul.bf16.gmra.mxu0 %v290
  %v6163 = vpop.f32.mrf.mxu0
  %v6164 = vadd.f32 %v6071, %v6163
  %v6165 = vpop.f32.mrf.mxu0
  %v6166 = vadd.f32 %v6073, %v6165
  %6167 = vmatmul.bf16.gmra.mxu0 %v298
  %v6168 = vpop.f32.mrf.mxu0
  %v6169 = vadd.f32 %v6076, %v6168
  %v6170 = vpop.f32.mrf.mxu0
  %v6171 = vadd.f32 %v6078, %v6170
  %6172 = vmatmul.bf16.gmra.mxu0 %v306
  %v6173 = vpop.f32.mrf.mxu0
  %v6174 = vadd.f32 %v6081, %v6173
  %v6175 = vpop.f32.mrf.mxu0
  %v6176 = vadd.f32 %v6083, %v6175
  %6177 = vmatmul.bf16.gmra.mxu0 %v314
  %v6178 = vpop.f32.mrf.mxu0
  %v6179 = vadd.f32 %v6086, %v6178
  %v6180 = vpop.f32.mrf.mxu0
  %v6181 = vadd.f32 %v6088, %v6180
  %6182 = vmatmul.bf16.gmra.mxu0 %v322
  %v6183 = vpop.f32.mrf.mxu0
  %v6184 = vadd.f32 %v6091, %v6183
  %v6185 = vpop.f32.mrf.mxu0
  %v6186 = vadd.f32 %v6093, %v6185
  %6187 = vmatmul.bf16.gmra.mxu0 %v330
  %v6188 = vpop.f32.mrf.mxu0
  %v6189 = vadd.f32 %v6096, %v6188
  %v6190 = vpop.f32.mrf.mxu0
  %v6191 = vadd.f32 %v6098, %v6190
  %6192 = vmatmul.bf16.gmra.mxu0 %v338
  %v6193 = vpop.f32.mrf.mxu0
  %v6194 = vadd.f32 %v6101, %v6193
  %v6195 = vpop.f32.mrf.mxu0
  %v6196 = vadd.f32 %v6103, %v6195
  %6197 = vmatmul.bf16.gmra.mxu0 %v346
  %v6198 = vpop.f32.mrf.mxu0
  %v6199 = vadd.f32 %v6106, %v6198
  %v6200 = vpop.f32.mrf.mxu0
  %v6201 = vadd.f32 %v6108, %v6200
  %6202 = vmatmul.bf16.gmra.mxu0 %v354
  %v6203 = vpop.f32.mrf.mxu0
  %v6204 = vadd.f32 %v6111, %v6203
  %v6205 = vpop.f32.mrf.mxu0
  %v6206 = vadd.f32 %v6113, %v6205
  %6207 = vmatmul.bf16.gmra.mxu0 %v362
  %v6208 = vpop.f32.mrf.mxu0
  %v6209 = vadd.f32 %v6116, %v6208
  %v6210 = vpop.f32.mrf.mxu0
  %v6211 = vadd.f32 %v6118, %v6210
  %6212 = vmatmul.bf16.gmra.mxu0 %v370
  %v6213 = vpop.f32.mrf.mxu0
  %v6214 = vadd.f32 %v6121, %v6213
  %v6215 = vpop.f32.mrf.mxu0
  %v6216 = vadd.f32 %v6123, %v6215
  %6217 = vmatmul.bf16.gmra.mxu0 %v378
  %v6218 = vpop.f32.mrf.mxu0
  %v6219 = vadd.f32 %v6126, %v6218
  %v6220 = vpop.f32.mrf.mxu0
  %v6221 = vadd.f32 %v6128, %v6220
  %6222 = vmatmul.bf16.gmra.mxu0 %v386
  %v6223 = vpop.f32.mrf.mxu0
  %v6224 = vadd.f32 %v6131, %v6223
  %v6225 = vpop.f32.mrf.mxu0
  %v6226 = vadd.f32 %v6133, %v6225
  %6227 = vmatmul.bf16.gmra.mxu0 %v394
  %v6228 = vpop.f32.mrf.mxu0
  %v6229 = vadd.f32 %v6136, %v6228
  %v6230 = vpop.f32.mrf.mxu0
  %v6231 = vadd.f32 %v6138, %v6230
  %6232 = vmatmul.bf16.gmra.mxu0 %v402
  %v6233 = vpop.f32.mrf.mxu0
  %v6234 = vadd.f32 %v6141, %v6233
  %v6235 = vpop.f32.mrf.mxu0
  %v6236 = vadd.f32 %v6143, %v6235
  %6237 = vmatmul.bf16.gmra.mxu0 %v410
  %v6238 = vpop.f32.mrf.mxu0
  %v6239 = vadd.f32 %v6146, %v6238
  %v6240 = vpop.f32.mrf.mxu0
  %v6241 = vadd.f32 %v6148, %v6240
  %6242 = vmatmul.bf16.gmra.mxu0 %v418
  %v6243 = vpop.f32.mrf.mxu0
  %v6244 = vadd.f32 %v6151, %v6243
  %v6245 = vpop.f32.mrf.mxu0
  %6246 = vdwg.mxu0
  %6247 = vmatpush.bf16.msra.mxu0 %v5616
  %6248 = vmatpush.bf16.msra.mxu0 %v5615
  %6249 = vmatpush.bf16.msra.mxu0 %v5614
  %6250 = vmatpush.bf16.msra.mxu0 %v5613
  %6251 = vmatpush.bf16.msra.mxu0 %v5612
  %6252 = vmatpush.bf16.msra.mxu0 %v5611
  %6253 = vmatpush.bf16.msra.mxu0 %v5610
  %6254 = vmatpush.bf16.msra.mxu0 %v5609
  %6255 = vmatmul.bf16.gmra.mxu0 %v291
  %v6256 = vpop.f32.mrf.mxu0
  %v6257 = vadd.f32 %v6164, %v6256
  %v6258 = vpop.f32.mrf.mxu0
  %v6259 = vadd.f32 %v6166, %v6258
  %6260 = vmatmul.bf16.gmra.mxu0 %v299
  %v6261 = vpop.f32.mrf.mxu0
  %v6262 = vadd.f32 %v6169, %v6261
  %v6263 = vpop.f32.mrf.mxu0
  %v6264 = vadd.f32 %v6171, %v6263
  %6265 = vmatmul.bf16.gmra.mxu0 %v307
  %v6266 = vpop.f32.mrf.mxu0
  %v6267 = vadd.f32 %v6174, %v6266
  %v6268 = vpop.f32.mrf.mxu0
  %v6269 = vadd.f32 %v6176, %v6268
  %6270 = vmatmul.bf16.gmra.mxu0 %v315
  %v6271 = vpop.f32.mrf.mxu0
  %v6272 = vadd.f32 %v6179, %v6271
  %v6273 = vpop.f32.mrf.mxu0
  %v6274 = vadd.f32 %v6181, %v6273
  %6275 = vmatmul.bf16.gmra.mxu0 %v323
  %v6276 = vpop.f32.mrf.mxu0
  %v6277 = vadd.f32 %v6184, %v6276
  %v6278 = vpop.f32.mrf.mxu0
  %v6279 = vadd.f32 %v6186, %v6278
  %6280 = vmatmul.bf16.gmra.mxu0 %v331
  %v6281 = vpop.f32.mrf.mxu0
  %v6282 = vadd.f32 %v6189, %v6281
  %v6283 = vpop.f32.mrf.mxu0
  %v6284 = vadd.f32 %v6191, %v6283
  %6285 = vmatmul.bf16.gmra.mxu0 %v339
  %v6286 = vpop.f32.mrf.mxu0
  %v6287 = vadd.f32 %v6194, %v6286
  %v6288 = vpop.f32.mrf.mxu0
  %v6289 = vadd.f32 %v6196, %v6288
  %6290 = vmatmul.bf16.gmra.mxu0 %v347
  %v6291 = vpop.f32.mrf.mxu0
  %v6292 = vadd.f32 %v6199, %v6291
  %v6293 = vpop.f32.mrf.mxu0
  %v6294 = vadd.f32 %v6201, %v6293
  %6295 = vmatmul.bf16.gmra.mxu0 %v355
  %v6296 = vpop.f32.mrf.mxu0
  %v6297 = vadd.f32 %v6204, %v6296
  %v6298 = vpop.f32.mrf.mxu0
  %v6299 = vadd.f32 %v6206, %v6298
  %6300 = vmatmul.bf16.gmra.mxu0 %v363
  %v6301 = vpop.f32.mrf.mxu0
  %v6302 = vadd.f32 %v6209, %v6301
  %v6303 = vpop.f32.mrf.mxu0
  %v6304 = vadd.f32 %v6211, %v6303
  %6305 = vmatmul.bf16.gmra.mxu0 %v371
  %v6306 = vpop.f32.mrf.mxu0
  %v6307 = vadd.f32 %v6214, %v6306
  %v6308 = vpop.f32.mrf.mxu0
  %v6309 = vadd.f32 %v6216, %v6308
  %6310 = vmatmul.bf16.gmra.mxu0 %v379
  %v6311 = vpop.f32.mrf.mxu0
  %v6312 = vadd.f32 %v6219, %v6311
  %v6313 = vpop.f32.mrf.mxu0
  %v6314 = vadd.f32 %v6221, %v6313
  %6315 = vmatmul.bf16.gmra.mxu0 %v387
  %v6316 = vpop.f32.mrf.mxu0
  %v6317 = vadd.f32 %v6224, %v6316
  %v6318 = vpop.f32.mrf.mxu0
  %v6319 = vadd.f32 %v6226, %v6318
  %6320 = vmatmul.bf16.gmra.mxu0 %v395
  %v6321 = vpop.f32.mrf.mxu0
  %v6322 = vadd.f32 %v6229, %v6321
  %v6323 = vpop.f32.mrf.mxu0
  %v6324 = vadd.f32 %v6231, %v6323
  %6325 = vmatmul.bf16.gmra.mxu0 %v403
  %v6326 = vpop.f32.mrf.mxu0
  %v6327 = vadd.f32 %v6234, %v6326
  %v6328 = vpop.f32.mrf.mxu0
  %v6329 = vadd.f32 %v6236, %v6328
  %6330 = vmatmul.bf16.gmra.mxu0 %v411
  %v6331 = vpop.f32.mrf.mxu0
  %v6332 = vadd.f32 %v6239, %v6331
  %v6333 = vpop.f32.mrf.mxu0
  %v6334 = vadd.f32 %v6241, %v6333
  %6335 = vmatmul.bf16.gmra.mxu0 %v419
  %v6336 = vpop.f32.mrf.mxu0
  %v6337 = vadd.f32 %v6244, %v6336
  %v6338 = vpop.f32.mrf.mxu0
  %6339 = vdwg.mxu0
  %6340 = vmatpush.bf16.msra.mxu0 0
  %6341 = vmatpush.bf16.msra.mxu0 %v5687
  %6342 = vmatpush.bf16.msra.mxu0 %v5622
  %6343 = vmatpush.bf16.msra.mxu0 %v5621
  %6344 = vmatpush.bf16.msra.mxu0 %v5620
  %6345 = vmatpush.bf16.msra.mxu0 %v5619
  %6346 = vmatpush.bf16.msra.mxu0 %v5618
  %6347 = vmatpush.bf16.msra.mxu0 %v5617
  %6348 = vmatmul.bf16.gmra.mxu0 %v964
  %v6349 = vpop.f32.mrf.mxu0
  %v6350 = vadd.f32 %v6257, %v6349
  %v6351 = vpop.f32.mrf.mxu0
  %v6352 = vadd.f32 %v6259, %v6351
  %6353 = vmatmul.bf16.gmra.mxu0 %v967
  %v6354 = vpop.f32.mrf.mxu0
  %v6355 = vadd.f32 %v6262, %v6354
  %v6356 = vpop.f32.mrf.mxu0
  %v6357 = vadd.f32 %v6264, %v6356
  %6358 = vmatmul.bf16.gmra.mxu0 %v970
  %v6359 = vpop.f32.mrf.mxu0
  %v6360 = vadd.f32 %v6267, %v6359
  %v6361 = vpop.f32.mrf.mxu0
  %v6362 = vadd.f32 %v6269, %v6361
  %6363 = vmatmul.bf16.gmra.mxu0 %v973
  %v6364 = vpop.f32.mrf.mxu0
  %v6365 = vadd.f32 %v6272, %v6364
  %v6366 = vpop.f32.mrf.mxu0
  %v6367 = vadd.f32 %v6274, %v6366
  %6368 = vmatmul.bf16.gmra.mxu0 %v976
  %v6369 = vpop.f32.mrf.mxu0
  %v6370 = vadd.f32 %v6277, %v6369
  %v6371 = vpop.f32.mrf.mxu0
  %v6372 = vadd.f32 %v6279, %v6371
  %6373 = vmatmul.bf16.gmra.mxu0 %v979
  %v6374 = vpop.f32.mrf.mxu0
  %v6375 = vadd.f32 %v6282, %v6374
  %v6376 = vpop.f32.mrf.mxu0
  %v6377 = vadd.f32 %v6284, %v6376
  %6378 = vmatmul.bf16.gmra.mxu0 %v982
  %v6379 = vpop.f32.mrf.mxu0
  %v6380 = vadd.f32 %v6287, %v6379
  %v6381 = vpop.f32.mrf.mxu0
  %v6382 = vadd.f32 %v6289, %v6381
  %6383 = vmatmul.bf16.gmra.mxu0 %v985
  %v6384 = vpop.f32.mrf.mxu0
  %v6385 = vadd.f32 %v6292, %v6384
  %v6386 = vpop.f32.mrf.mxu0
  %v6387 = vadd.f32 %v6294, %v6386
  %6388 = vmatmul.bf16.gmra.mxu0 %v988
  %v6389 = vpop.f32.mrf.mxu0
  %v6390 = vadd.f32 %v6297, %v6389
  %v6391 = vpop.f32.mrf.mxu0
  %v6392 = vadd.f32 %v6299, %v6391
  %6393 = vmatmul.bf16.gmra.mxu0 %v991
  %v6394 = vpop.f32.mrf.mxu0
  %v6395 = vadd.f32 %v6302, %v6394
  %v6396 = vpop.f32.mrf.mxu0
  %v6397 = vadd.f32 %v6304, %v6396
  %6398 = vmatmul.bf16.gmra.mxu0 %v994
  %v6399 = vpop.f32.mrf.mxu0
  %v6400 = vadd.f32 %v6307, %v6399
  %v6401 = vpop.f32.mrf.mxu0
  %v6402 = vadd.f32 %v6309, %v6401
  %6403 = vmatmul.bf16.gmra.mxu0 %v997
  %v6404 = vpop.f32.mrf.mxu0
  %v6405 = vadd.f32 %v6312, %v6404
  %v6406 = vpop.f32.mrf.mxu0
  %v6407 = vadd.f32 %v6314, %v6406
  %6408 = vmatmul.bf16.gmra.mxu0 %v1000
  %v6409 = vpop.f32.mrf.mxu0
  %v6410 = vadd.f32 %v6317, %v6409
  %v6411 = vpop.f32.mrf.mxu0
  %v6412 = vadd.f32 %v6319, %v6411
  %6413 = vmatmul.bf16.gmra.mxu0 %v1003
  %v6414 = vpop.f32.mrf.mxu0
  %v6415 = vadd.f32 %v6322, %v6414
  %v6416 = vpop.f32.mrf.mxu0
  %v6417 = vadd.f32 %v6324, %v6416
  %6418 = vmatmul.bf16.gmra.mxu0 %v1006
  %v6419 = vpop.f32.mrf.mxu0
  %v6420 = vadd.f32 %v6327, %v6419
  %v6421 = vpop.f32.mrf.mxu0
  %v6422 = vadd.f32 %v6329, %v6421
  %6423 = vmatmul.bf16.gmra.mxu0 %v1009
  %v6424 = vpop.f32.mrf.mxu0
  %v6425 = vadd.f32 %v6332, %v6424
  %v6426 = vpop.f32.mrf.mxu0
  %v6427 = vadd.f32 %v6334, %v6426
  %6428 = vmatmul.bf16.gmra.mxu0 %v1012
  %v6429 = vpop.f32.mrf.mxu0
  %v6430 = vadd.f32 %v6337, %v6429
  %v6431 = vpop.f32.mrf.mxu0
  %6432 = vdwg.mxu0
  %v6433 = vmax.f32 %v6350, 0.0
  %v6434 = vmax.f32 %v6352, 0.0
  %v6435 = vmax.f32 %v6355, 0.0
  %v6436 = vmax.f32 %v6357, 0.0
  %v6437 = vmax.f32 %v6360, 0.0
  %v6438 = vmax.f32 %v6362, 0.0
  %v6439 = vmax.f32 %v6365, 0.0
  %v6440 = vmax.f32 %v6367, 0.0
  %v6441 = vmax.f32 %v6370, 0.0
  %v6442 = vmax.f32 %v6372, 0.0
  %v6443 = vmax.f32 %v6375, 0.0
  %v6444 = vmax.f32 %v6377, 0.0
  %v6445 = vmax.f32 %v6380, 0.0
  %v6446 = vmax.f32 %v6382, 0.0
  %v6447 = vmax.f32 %v6385, 0.0
  %v6448 = vmax.f32 %v6387, 0.0
  %v6449 = vmax.f32 %v6390, 0.0
  %v6450 = vmax.f32 %v6392, 0.0
  %v6451 = vmax.f32 %v6395, 0.0
  %v6452 = vmax.f32 %v6397, 0.0
  %v6453 = vmax.f32 %v6400, 0.0
  %v6454 = vmax.f32 %v6402, 0.0
  %v6455 = vmax.f32 %v6405, 0.0
  %v6456 = vmax.f32 %v6407, 0.0
  %v6457 = vmax.f32 %v6410, 0.0
  %v6458 = vmax.f32 %v6412, 0.0
  %v6459 = vmax.f32 %v6415, 0.0
  %v6460 = vmax.f32 %v6417, 0.0
  %v6461 = vmax.f32 %v6420, 0.0
  %v6462 = vmax.f32 %v6422, 0.0
  %v6463 = vmax.f32 %v6425, 0.0
  %v6464 = vmax.f32 %v6427, 0.0
  %v6465 = vmax.f32 %v6430, 0.0
  %v6466 = vld [vmem:[%s5] sm:$0xff]
  %v6467 = vld [vmem:[%s5 + $0x8] sm:$0xff]
  %v6468 = vld [vmem:[%s5 + $0x10] sm:$0xff]
  %v6469 = vld [vmem:[%s5 + $0x18] sm:$0xff]
  %v6470 = vld [vmem:[%s5 + $0x20] sm:$0xff]
  %v6471 = vld [vmem:[%s5 + $0x28] sm:$0xff]
  %v6472 = vld [vmem:[%s5 + $0x30] sm:$0xff]
  %v6473 = vld [vmem:[%s5 + $0x38] sm:$0xff]
  %v6474 = vld [vmem:[%s5 + $0x40] sm:$0xff]
  %v6475 = vld [vmem:[%s5 + $0x48] sm:$0xff]
  %v6476 = vld [vmem:[%s5 + $0x50] sm:$0xff]
  %v6477 = vld [vmem:[%s5 + $0x58] sm:$0xff]
  %v6478 = vld [vmem:[%s5 + $0x60] sm:$0xff]
  %v6479 = vld [vmem:[%s5 + $0x68] sm:$0xff]
  %v6480 = vld [vmem:[%s5 + $0x70] sm:$0xff]
  %v6481 = vld [vmem:[%s5 + $0x78] sm:$0xff]
  %v6482 = vld [vmem:[%s5 + $0x80] sm:$0xff]
  %v6483 = vld [vmem:[%s5 + $0x88] sm:$0xff]
  %v6484 = vld [vmem:[%s5 + $0x90] sm:$0xff]
  %v6485 = vld [vmem:[%s5 + $0x98] sm:$0xff]
  %v6486 = vld [vmem:[%s5 + $0xa0] sm:$0xff]
  %v6487 = vld [vmem:[%s5 + $0xa8] sm:$0xff]
  %v6488 = vld [vmem:[%s5 + $0xb0] sm:$0xff]
  %v6489 = vld [vmem:[%s5 + $0xb8] sm:$0xff]
  %v6490 = vld [vmem:[%s5 + $0xc0] sm:$0xff]
  %v6491 = vld [vmem:[%s5 + $0xc8] sm:$0xff]
  %v6492 = vld [vmem:[%s5 + $0xd0] sm:$0xff]
  %v6493 = vld [vmem:[%s5 + $0xd8] sm:$0xff]
  %v6494 = vld [vmem:[%s5 + $0xe0] sm:$0xff]
  %v6495 = vld [vmem:[%s5 + $0xe8] sm:$0xff]
  %v6496 = vld [vmem:[%s5 + $0xf0] sm:$0xff]
  %v6497 = vld [vmem:[%s5 + $0xf8] sm:$0xff]
  %v6498 = vld [vmem:[%s5 + $0x100] sm:$0xff]
  %v6499 = vpack.c.bf16 %v6434, %v6433
  %v6500 = vpack.c.bf16 %v6436, %v6435
  %v6501 = vpack.c.bf16 %v6438, %v6437
  %v6502 = vpack.c.bf16 %v6440, %v6439
  %v6503 = vpack.c.bf16 %v6442, %v6441
  %v6504 = vpack.c.bf16 %v6444, %v6443
  %v6505 = vpack.c.bf16 %v6446, %v6445
  %v6506 = vpack.c.bf16 %v6448, %v6447
  %v6507 = vpack.c.bf16 %v6450, %v6449
  %v6508 = vpack.c.bf16 %v6452, %v6451
  %v6509 = vpack.c.bf16 %v6454, %v6453
  %v6510 = vpack.c.bf16 %v6456, %v6455
  %v6511 = vpack.c.bf16 %v6458, %v6457
  %v6512 = vpack.c.bf16 %v6460, %v6459
  %v6513 = vpack.c.bf16 %v6462, %v6461
  %v6514 = vpack.c.bf16 %v6464, %v6463
  %v6515 = vpack.c.bf16 %v6465, %v6465
  %v6516 = vld [vmem:[%s3 + $0xc0] sm:$0xf]
  %v6517 = vld [vmem:[%s3 + $0xc4] sm:$0xf]
  %v6518 = vld [vmem:[%s3 + $0xc8] sm:$0xf]
  %v6519 = vld [vmem:[%s3 + $0xcc] sm:$0xf]
  %v6520 = vld [vmem:[%s3 + $0xd0] sm:$0xf]
  %v6521 = vld [vmem:[%s3 + $0xd4] sm:$0xf]
  %v6522 = vld [vmem:[%s3 + $0xd8] sm:$0xf]
  %v6523 = vld [vmem:[%s3 + $0xdc] sm:$0xf]
  %v6524 = vld [vmem:[%s3 + $0xe0] sm:$0xf]
  %v6525 = vld [vmem:[%s3 + $0xe4] sm:$0xf]
  %v6526 = vld [vmem:[%s3 + $0xe8] sm:$0xf]
  %v6527 = vld [vmem:[%s3 + $0xec] sm:$0xf]
  %v6528 = vld [vmem:[%s3 + $0xf0] sm:$0xf]
  %v6529 = vld [vmem:[%s3 + $0xf4] sm:$0xf]
  %v6530 = vld [vmem:[%s3 + $0xf8] sm:$0xf]
  %v6531 = vld [vmem:[%s3 + $0xfc] sm:$0xf]
  %v6548 = vunpack.c.l.b16 %v6516
  %v6549 = vunpack.c.l.b16 %v6517
  %v6550 = vunpack.c.l.b16 %v6518
  %v6551 = vunpack.c.l.b16 %v6519
  %v6552 = vunpack.c.l.b16 %v6520
  %v6553 = vunpack.c.l.b16 %v6521
  %v6554 = vunpack.c.l.b16 %v6522
  %v6555 = vunpack.c.l.b16 %v6523
  %v6556 = vunpack.c.l.b16 %v6524
  %v6557 = vunpack.c.l.b16 %v6525
  %v6558 = vunpack.c.l.b16 %v6526
  %v6559 = vunpack.c.l.b16 %v6527
  %v6560 = vunpack.c.l.b16 %v6528
  %v6561 = vunpack.c.l.b16 %v6529
  %v6562 = vunpack.c.l.b16 %v6530
  %v6563 = vunpack.c.l.b16 %v6531
  %v6564 = vpack.c.b16 %v6549, %v6548
  %v6565 = vpack.c.b16 %v6551, %v6550
  %v6566 = vpack.c.b16 %v6553, %v6552
  %v6567 = vpack.c.b16 %v6555, %v6554
  %v6568 = vpack.c.b16 %v6557, %v6556
  %v6569 = vpack.c.b16 %v6559, %v6558
  %v6570 = vpack.c.b16 %v6561, %v6560
  %v6571 = vpack.c.b16 %v6563, %v6562
  %6580 = vmatpush.bf16.msra.mxu0 %v6571
  %6581 = vmatpush.bf16.msra.mxu0 %v6570
  %6582 = vmatpush.bf16.msra.mxu0 %v6569
  %6583 = vmatpush.bf16.msra.mxu0 %v6568
  %6584 = vmatpush.bf16.msra.mxu0 %v6567
  %6585 = vmatpush.bf16.msra.mxu0 %v6566
  %6586 = vmatpush.bf16.msra.mxu0 %v6565
  %6587 = vmatpush.bf16.msra.mxu0 %v6564
  %6588 = vmatmul.bf16.gmra.mxu0 %v6499
  %v6589 = vpop.f32.mrf.mxu0
  %v6590 = vadd.f32 0.0, %v6589
  %v6591 = vpop.f32.mrf.mxu0
  %v6592 = vadd.f32 0.0, %v6591
  %6593 = vmatmul.bf16.gmra.mxu0 %v6500
  %v6594 = vpop.f32.mrf.mxu0
  %v6595 = vadd.f32 0.0, %v6594
  %v6596 = vpop.f32.mrf.mxu0
  %v6597 = vadd.f32 0.0, %v6596
  %6598 = vmatmul.bf16.gmra.mxu0 %v6501
  %v6599 = vpop.f32.mrf.mxu0
  %v6600 = vadd.f32 0.0, %v6599
  %v6601 = vpop.f32.mrf.mxu0
  %v6602 = vadd.f32 0.0, %v6601
  %6603 = vmatmul.bf16.gmra.mxu0 %v6502
  %v6604 = vpop.f32.mrf.mxu0
  %v6605 = vadd.f32 0.0, %v6604
  %v6606 = vpop.f32.mrf.mxu0
  %v6607 = vadd.f32 0.0, %v6606
  %6608 = vmatmul.bf16.gmra.mxu0 %v6503
  %v6609 = vpop.f32.mrf.mxu0
  %v6610 = vadd.f32 0.0, %v6609
  %v6611 = vpop.f32.mrf.mxu0
  %v6612 = vadd.f32 0.0, %v6611
  %6613 = vmatmul.bf16.gmra.mxu0 %v6504
  %v6614 = vpop.f32.mrf.mxu0
  %v6615 = vadd.f32 0.0, %v6614
  %v6616 = vpop.f32.mrf.mxu0
  %v6617 = vadd.f32 0.0, %v6616
  %6618 = vmatmul.bf16.gmra.mxu0 %v6505
  %v6619 = vpop.f32.mrf.mxu0
  %v6620 = vadd.f32 0.0, %v6619
  %v6621 = vpop.f32.mrf.mxu0
  %v6622 = vadd.f32 0.0, %v6621
  %6623 = vmatmul.bf16.gmra.mxu0 %v6506
  %v6624 = vpop.f32.mrf.mxu0
  %v6625 = vadd.f32 0.0, %v6624
  %v6626 = vpop.f32.mrf.mxu0
  %v6627 = vadd.f32 0.0, %v6626
  %6628 = vmatmul.bf16.gmra.mxu0 %v6507
  %v6629 = vpop.f32.mrf.mxu0
  %v6630 = vadd.f32 0.0, %v6629
  %v6631 = vpop.f32.mrf.mxu0
  %v6632 = vadd.f32 0.0, %v6631
  %6633 = vmatmul.bf16.gmra.mxu0 %v6508
  %v6634 = vpop.f32.mrf.mxu0
  %v6635 = vadd.f32 0.0, %v6634
  %v6636 = vpop.f32.mrf.mxu0
  %v6637 = vadd.f32 0.0, %v6636
  %6638 = vmatmul.bf16.gmra.mxu0 %v6509
  %v6639 = vpop.f32.mrf.mxu0
  %v6640 = vadd.f32 0.0, %v6639
  %v6641 = vpop.f32.mrf.mxu0
  %v6642 = vadd.f32 0.0, %v6641
  %6643 = vmatmul.bf16.gmra.mxu0 %v6510
  %v6644 = vpop.f32.mrf.mxu0
  %v6645 = vadd.f32 0.0, %v6644
  %v6646 = vpop.f32.mrf.mxu0
  %v6647 = vadd.f32 0.0, %v6646
  %6648 = vmatmul.bf16.gmra.mxu0 %v6511
  %v6649 = vpop.f32.mrf.mxu0
  %v6650 = vadd.f32 0.0, %v6649
  %v6651 = vpop.f32.mrf.mxu0
  %v6652 = vadd.f32 0.0, %v6651
  %6653 = vmatmul.bf16.gmra.mxu0 %v6512
  %v6654 = vpop.f32.mrf.mxu0
  %v6655 = vadd.f32 0.0, %v6654
  %v6656 = vpop.f32.mrf.mxu0
  %v6657 = vadd.f32 0.0, %v6656
  %6658 = vmatmul.bf16.gmra.mxu0 %v6513
  %v6659 = vpop.f32.mrf.mxu0
  %v6660 = vadd.f32 0.0, %v6659
  %v6661 = vpop.f32.mrf.mxu0
  %v6662 = vadd.f32 0.0, %v6661
  %6663 = vmatmul.bf16.gmra.mxu0 %v6514
  %v6664 = vpop.f32.mrf.mxu0
  %v6665 = vadd.f32 0.0, %v6664
  %v6666 = vpop.f32.mrf.mxu0
  %v6667 = vadd.f32 0.0, %v6666
  %6668 = vmatmul.bf16.gmra.mxu0 %v6515
  %v6669 = vpop.f32.mrf.mxu0
  %v6670 = vadd.f32 0.0, %v6669
  %v6671 = vpop.f32.mrf.mxu0
  %6672 = vdwg.mxu0
  %v6673 = vadd.f32 %v6466, %v6590
  %v6674 = vadd.f32 %v6467, %v6592
  %v6675 = vadd.f32 %v6468, %v6595
  %v6676 = vadd.f32 %v6469, %v6597
  %v6677 = vadd.f32 %v6470, %v6600
  %v6678 = vadd.f32 %v6471, %v6602
  %v6679 = vadd.f32 %v6472, %v6605
  %v6680 = vadd.f32 %v6473, %v6607
  %v6681 = vadd.f32 %v6474, %v6610
  %v6682 = vadd.f32 %v6475, %v6612
  %v6683 = vadd.f32 %v6476, %v6615
  %v6684 = vadd.f32 %v6477, %v6617
  %v6685 = vadd.f32 %v6478, %v6620
  %v6686 = vadd.f32 %v6479, %v6622
  %v6687 = vadd.f32 %v6480, %v6625
  %v6688 = vadd.f32 %v6481, %v6627
  %v6689 = vadd.f32 %v6482, %v6630
  %v6690 = vadd.f32 %v6483, %v6632
  %v6691 = vadd.f32 %v6484, %v6635
  %v6692 = vadd.f32 %v6485, %v6637
  %v6693 = vadd.f32 %v6486, %v6640
  %v6694 = vadd.f32 %v6487, %v6642
  %v6695 = vadd.f32 %v6488, %v6645
  %v6696 = vadd.f32 %v6489, %v6647
  %v6697 = vadd.f32 %v6490, %v6650
  %v6698 = vadd.f32 %v6491, %v6652
  %v6699 = vadd.f32 %v6492, %v6655
  %v6700 = vadd.f32 %v6493, %v6657
  %v6701 = vadd.f32 %v6494, %v6660
  %v6702 = vadd.f32 %v6495, %v6662
  %v6703 = vadd.f32 %v6496, %v6665
  %v6704 = vadd.f32 %v6497, %v6667
  %v6705 = vadd.f32 %v6498, %v6670
  %6706 = vst [vmem:[%s5] sm:$0xff] %v6673
  %6707 = vst [vmem:[%s5 + $0x8] sm:$0xff] %v6674
  %6708 = vst [vmem:[%s5 + $0x10] sm:$0xff] %v6675
  %6709 = vst [vmem:[%s5 + $0x18] sm:$0xff] %v6676
  %6710 = vst [vmem:[%s5 + $0x20] sm:$0xff] %v6677
  %6711 = vst [vmem:[%s5 + $0x28] sm:$0xff] %v6678
  %6712 = vst [vmem:[%s5 + $0x30] sm:$0xff] %v6679
  %6713 = vst [vmem:[%s5 + $0x38] sm:$0xff] %v6680
  %6714 = vst [vmem:[%s5 + $0x40] sm:$0xff] %v6681
  %6715 = vst [vmem:[%s5 + $0x48] sm:$0xff] %v6682
  %6716 = vst [vmem:[%s5 + $0x50] sm:$0xff] %v6683
  %6717 = vst [vmem:[%s5 + $0x58] sm:$0xff] %v6684
  %6718 = vst [vmem:[%s5 + $0x60] sm:$0xff] %v6685
  %6719 = vst [vmem:[%s5 + $0x68] sm:$0xff] %v6686
  %6720 = vst [vmem:[%s5 + $0x70] sm:$0xff] %v6687
  %6721 = vst [vmem:[%s5 + $0x78] sm:$0xff] %v6688
  %6722 = vst [vmem:[%s5 + $0x80] sm:$0xff] %v6689
  %6723 = vst [vmem:[%s5 + $0x88] sm:$0xff] %v6690
  %6724 = vst [vmem:[%s5 + $0x90] sm:$0xff] %v6691
  %6725 = vst [vmem:[%s5 + $0x98] sm:$0xff] %v6692
  %6726 = vst [vmem:[%s5 + $0xa0] sm:$0xff] %v6693
  %6727 = vst [vmem:[%s5 + $0xa8] sm:$0xff] %v6694
  %6728 = vst [vmem:[%s5 + $0xb0] sm:$0xff] %v6695
  %6729 = vst [vmem:[%s5 + $0xb8] sm:$0xff] %v6696
  %6730 = vst [vmem:[%s5 + $0xc0] sm:$0xff] %v6697
  %6731 = vst [vmem:[%s5 + $0xc8] sm:$0xff] %v6698
  %6732 = vst [vmem:[%s5 + $0xd0] sm:$0xff] %v6699
  %6733 = vst [vmem:[%s5 + $0xd8] sm:$0xff] %v6700
  %6734 = vst [vmem:[%s5 + $0xe0] sm:$0xff] %v6701
  %6735 = vst [vmem:[%s5 + $0xe8] sm:$0xff] %v6702
  %6736 = vst [vmem:[%s5 + $0xf0] sm:$0xff] %v6703
  %6737 = vst [vmem:[%s5 + $0xf8] sm:$0xff] %v6704
  %6738 = vst [vmem:[%s5 + $0x100] sm:$0xff] %v6705
  // Predicated region
  $region22: #{egopack_gnn_forward.1} parent=0 // pred_check
    _
  $region23: #{egopack_gnn_forward.1} parent=0 // pred_check_branch
    %6740 = sbr.rel (0) target = $region25
  $region24: #{egopack_gnn_forward.1} parent=0 // pred_region
    _
  $region25: #{egopack_gnn_forward.1} parent=0 // pred_fallthru
    _
  // Predicated region
  $region26: #{egopack_gnn_forward.1} parent=0 // pred_check
    _
  $region27: #{egopack_gnn_forward.1} parent=0 // pred_check_branch
    %6742 = sbr.rel (0) target = $region29
  $region28: #{egopack_gnn_forward.1} parent=0 // pred_region
    _
  $region29: #{egopack_gnn_forward.1} parent=0 // pred_fallthru
    _

</llo_original>
